<compile_context>
chip_gen: v5e
topology: v5e:2x2
jax: 0.10.0
libtpu: 0.0.40
codegen_flags: <defaults>
</compile_context>

<pallas_src>
import math
import functools

import jax
import jax.numpy as jnp
import numpy as np
from jax import lax
from jax.experimental import pallas as pl
from jax.experimental.pallas import tpu as pltpu


# ---------------------------------------------------------------------------
# In-kernel helpers (operate on loaded jnp values / weight refs)
# ---------------------------------------------------------------------------

def _linear(x, w_ref, b_ref, cdt):
    # Weights arrive pre-transposed as (in, out) and pre-cast to `cdt`, so the MXU
    # sees lane-dense operands with no in-kernel transpose; accumulate in f32.
    return (jnp.dot(x.astype(cdt), w_ref[...], preferred_element_type=jnp.float32)
            + b_ref[...])


def _layer_norm(x, w_ref, b_ref, eps=1e-5):
    mu = jnp.mean(x, axis=-1, keepdims=True)
    xc = x - mu
    var = jnp.mean(xc * xc, axis=-1, keepdims=True)
    return xc * lax.rsqrt(var + eps) * w_ref[...] + b_ref[...]


_QKT_DNUMS = (((1,), (1,)), ((), ()))  # contract last dims of q and k (no k.T)


def _mha(xq, xk, xv, wq, bq, wk, bk, wv, bv, wo, bo,
         num_heads, cdt, approx_recip):
    """Multi-head attention for one batch element (2-D (tokens, C) operands)."""
    q = _linear(xq, wq, bq, cdt)      # (Nq, di) f32
    k = _linear(xk, wk, bk, cdt)      # (Nk, di) f32
    v = _linear(xv, wv, bv, cdt)      # (Nk, di) f32

    di = q.shape[-1]
    dh = di // num_heads
    # Fold 1/sqrt(dh) into q once (cheaper than scaling the (Nq, Nk) scores).
    qc = (q * (1.0 / math.sqrt(dh))).astype(cdt)
    kc = k.astype(cdt)
    vc = v.astype(cdt)
    wo_v = wo[...]                    # (di, C) pre-transposed output projection

    out = jnp.zeros((xq.shape[0], wo_v.shape[-1]), jnp.float32)
    for h in range(num_heads):        # static unrolled head loop
        sl = slice(h * dh, (h + 1) * dh)
        # scores (Nq, Nk) in f32; contract the lane dims of q and k directly.
        s = lax.dot_general(qc[:, sl], kc[:, sl], _QKT_DNUMS,
                            preferred_element_type=jnp.float32)
        s = s - jnp.max(s, axis=-1, keepdims=True)
        p = jnp.exp(s)
        denom = jnp.sum(p, axis=-1, keepdims=True)
        p = p * pl.reciprocal(denom, approx=approx_recip)
        oh = jnp.dot(p.astype(cdt), vc[:, sl],
                     preferred_element_type=jnp.float32)           # (Nq, dh)
        # Accumulate through this head's slice of the output projection instead of
        # concatenating heads along the lane axis.
        out = out + jnp.dot(oh.astype(cdt), wo_v[sl, :],
                            preferred_element_type=jnp.float32)
    return out + bo[...]


# ---------------------------------------------------------------------------
# The fused kernel: one grid step == one batch element
# ---------------------------------------------------------------------------

def _two_way_block_kernel(num_heads, cdt, approx_recip, *refs):
    (q_in, k_in, qpe_in, kpe_in,
     sa_wq, sa_bq, sa_wk, sa_bk, sa_wv, sa_bv, sa_wo, sa_bo,
     n1_w, n1_b,
     t2i_wq, t2i_bq, t2i_wk, t2i_bk, t2i_wv, t2i_bv, t2i_wo, t2i_bo,
     n2_w, n2_b,
     mlp_w1, mlp_b1, mlp_w2, mlp_b2,
     n3_w, n3_b,
     i2t_wq, i2t_bq, i2t_wk, i2t_bk, i2t_wv, i2t_bv, i2t_wo, i2t_bo,
     n4_w, n4_b,
     q_out, k_out) = refs

    queries = q_in[...]
    keys = k_in[...]
    query_pe = qpe_in[...]
    key_pe = kpe_in[...]

    # (1) self-attention on sparse inputs (skip_first_layer_pe = False path)
    q = queries + query_pe
    attn_out = _mha(q, q, queries,
                    sa_wq, sa_bq, sa_wk, sa_bk, sa_wv, sa_bv, sa_wo, sa_bo,
                    num_heads, cdt, approx_recip)
    queries = _layer_norm(queries + attn_out, n1_w, n1_b)

    # keys + key_pe is reused by both cross attentions -> hoist it.
    keys_pe = keys + key_pe

    # (2) cross attention: tokens -> image
    q = queries + query_pe
    attn_out = _mha(q, keys_pe, keys,
                    t2i_wq, t2i_bq, t2i_wk, t2i_bk, t2i_wv, t2i_bv, t2i_wo, t2i_bo,
                    num_heads, cdt, approx_recip)
    queries = _layer_norm(queries + attn_out, n2_w, n2_b)

    # (3) MLP block (ReLU — TwoWayAttentionBlock default activation)
    hidden = jnp.maximum(_linear(queries, mlp_w1, mlp_b1, cdt), 0.0)
    mlp_out = _linear(hidden, mlp_w2, mlp_b2, cdt)
    queries = _layer_norm(queries + mlp_out, n3_w, n3_b)

    # (4) cross attention: image -> tokens
    # TODO(synk): at SAM scale (Nk~4096) this softmax runs over the narrow Nq lane
    # axis of the (Nk, Nq) score matrix; pad Nq toward 128 lanes and/or tile Nk on a
    # second parallel grid axis for production shapes.
    q = queries + query_pe
    attn_out = _mha(keys_pe, q, queries,
                    i2t_wq, i2t_bq, i2t_wk, i2t_bk, i2t_wv, i2t_bv, i2t_wo, i2t_bo,
                    num_heads, cdt, approx_recip)
    keys = _layer_norm(keys + attn_out, n4_w, n4_b)

    q_out[...] = queries.astype(q_out.dtype)
    k_out[...] = keys.astype(k_out.dtype)


# ---------------------------------------------------------------------------
# Host-side wrapper
# ---------------------------------------------------------------------------

def prep_params(params, compute_dtype):
    """Transpose linear weights to (in, out) and cast them to the MXU compute
    dtype; biases / LayerNorm params stay f32 (applied after f32 accumulation)."""
    prepped = []
    for p in params:
        p = jnp.asarray(p)
        if p.ndim == 2 and p.shape[0] > 1:       # linear weight, PyTorch (out, in)
            prepped.append(p.T.astype(compute_dtype))
        else:                                    # bias (1, out) / LN param (1, C)
            prepped.append(p.astype(jnp.float32))
    return prepped


def two_way_attention_block(queries, keys, query_pe, key_pe, params, num_heads,
                            compute_dtype=jnp.bfloat16, approx_recip=True,
                            vmem_limit_bytes=64 * 1024 * 1024):
    B, Nq, C = queries.shape
    _, Nk, _ = keys.shape
    prepped = prep_params(params, compute_dtype)

    # Token tensors: one batch element per grid step; batch dim squeezed away.
    def tok_spec(n):
        return pl.BlockSpec((pl.Squeezed(), n, C), lambda b: (b, 0, 0))

    in_specs = [tok_spec(Nq), tok_spec(Nk), tok_spec(Nq), tok_spec(Nk)]
    # Weights/biases: full (untiled) blocks with constant index_map, so the pipeline
    # keeps them resident across the batch grid (no re-DMA per step).
    # NOTE: at SAM production shapes, additionally mark these pipeline_mode=
    # pl.Buffered(1) and tile the key-side blocks over Nk to fit v7x's 64 MiB VMEM.
    for p in prepped:
        in_specs.append(pl.BlockSpec(p.shape, lambda b, nd=p.ndim: (0,) * nd))

    out_shape = (jax.ShapeDtypeStruct((B, Nq, C), queries.dtype),
                 jax.ShapeDtypeStruct((B, Nk, C), keys.dtype))
    out_specs = (tok_spec(Nq), tok_spec(Nk))

    kernel = functools.partial(_two_way_block_kernel, num_heads, compute_dtype,
                               approx_recip)

    return pl.pallas_call(
        kernel,
        out_shape=out_shape,
        grid=(B,),
        in_specs=in_specs,
        out_specs=out_specs,
        compiler_params=pltpu.CompilerParams(
            dimension_semantics=("parallel",),
            vmem_limit_bytes=vmem_limit_bytes),
    )(queries, keys, query_pe, key_pe, *prepped)


# ---------------------------------------------------------------------------
# Deterministic parameter initialization (PyTorch layout, shapes from __init__)
# ---------------------------------------------------------------------------

def init_params(key, C, mlp_dim, downsample_rate):
    di = C // downsample_rate
    ki = iter(jax.random.split(key, 28))

    def lin(out_d, in_d):
        w = jax.random.normal(next(ki), (out_d, in_d), jnp.float32) / math.sqrt(in_d)
        b = jax.random.normal(next(ki), (1, out_d), jnp.float32) * 0.02
        return [w, b]

    def ln():
        return [jnp.ones((1, C), jnp.float32), jnp.zeros((1, C), jnp.float32)]

    params = []
    # self_attn (downsample_rate = 1): q/k/v/out proj
    params += lin(C, C) + lin(C, C) + lin(C, C) + lin(C, C)
    params += ln()                                    # norm1
    # cross_attn_token_to_image (internal dim = di)
    params += lin(di, C) + lin(di, C) + lin(di, C) + lin(C, di)
    params += ln()                                    # norm2
    # mlp
    params += lin(mlp_dim, C) + lin(C, mlp_dim)
    params += ln()                                    # norm3
    # cross_attn_image_to_token (internal dim = di)
    params += lin(di, C) + lin(di, C) + lin(di, C) + lin(C, di)
    params += ln()                                    # norm4
    return params


# ---------------------------------------------------------------------------
# Pure-JAX reference (mirrors the PyTorch forward) for the correctness check
# ---------------------------------------------------------------------------

def _ref_linear(x, w, b):
    return x @ w.T + b


def _ref_layer_norm(x, w, b, eps=1e-5):
    mu = x.mean(-1, keepdims=True)
    var = ((x - mu) ** 2).mean(-1, keepdims=True)
    return (x - mu) / jnp.sqrt(var + eps) * w + b


def _ref_mha(xq, xk, xv, wq, bq, wk, bk, wv, bv, wo, bo, H):
    q = _ref_linear(xq, wq, bq)
    k = _ref_linear(xk, wk, bk)
    v = _ref_linear(xv, wv, bv)
    B, Nq, Di = q.shape
    dh = Di // H

    def sep(x):
        return x.reshape(x.shape[0], x.shape[1], H, dh).transpose(0, 2, 1, 3)

    qh, kh, vh = sep(q), sep(k), sep(v)
    attn = jnp.einsum('bhqd,bhkd->bhqk', qh, kh) / math.sqrt(dh)
    p = jax.nn.softmax(attn, axis=-1)
    o = jnp.einsum('bhqk,bhkd->bhqd', p, vh)
    o = o.transpose(0, 2, 1, 3).reshape(B, Nq, Di)
    return _ref_linear(o, wo, bo)


def ref_two_way_block(queries, keys, query_pe, key_pe, params, num_heads):
    (sa_wq, sa_bq, sa_wk, sa_bk, sa_wv, sa_bv, sa_wo, sa_bo,
     n1_w, n1_b,
     t2i_wq, t2i_bq, t2i_wk, t2i_bk, t2i_wv, t2i_bv, t2i_wo, t2i_bo,
     n2_w, n2_b,
     mlp_w1, mlp_b1, mlp_w2, mlp_b2,
     n3_w, n3_b,
     i2t_wq, i2t_bq, i2t_wk, i2t_bk, i2t_wv, i2t_bv, i2t_wo, i2t_bo,
     n4_w, n4_b) = params

    q = queries + query_pe
    attn_out = _ref_mha(q, q, queries,
                        sa_wq, sa_bq, sa_wk, sa_bk, sa_wv, sa_bv, sa_wo, sa_bo,
                        num_heads)
    queries = _ref_layer_norm(queries + attn_out, n1_w, n1_b)

    q = queries + query_pe
    k = keys + key_pe
    attn_out = _ref_mha(q, k, keys,
                        t2i_wq, t2i_bq, t2i_wk, t2i_bk, t2i_wv, t2i_bv, t2i_wo, t2i_bo,
                        num_heads)
    queries = _ref_layer_norm(queries + attn_out, n2_w, n2_b)

    hidden = jnp.maximum(_ref_linear(queries, mlp_w1, mlp_b1), 0.0)
    queries = _ref_layer_norm(queries + _ref_linear(hidden, mlp_w2, mlp_b2),
                              n3_w, n3_b)

    q = queries + query_pe
    k = keys + key_pe
    attn_out = _ref_mha(k, q, queries,
                        i2t_wq, i2t_bq, i2t_wk, i2t_bk, i2t_wv, i2t_bv, i2t_wo, i2t_bo,
                        num_heads)
    keys = _ref_layer_norm(keys + attn_out, n4_w, n4_b)
    return queries, keys


# ---------------------------------------------------------------------------

if __name__ == "__main__":
    # Small shapes consistent with the module, with a lane-dense C=128 channel axis
    # (per the perf review).  num_heads=4, attention_downsample_rate=2 -> di=64.
    B, Nq, Nk, C = 2, 8, 64, 128
    num_heads = 4
    mlp_dim = 256
    downsample_rate = 2

    root = jax.random.PRNGKey(0)
    k_q, k_k, k_qpe, k_kpe, k_p = jax.random.split(root, 5)
    queries = jax.random.normal(k_q, (B, Nq, C), jnp.float32)
    keys = jax.random.normal(k_k, (B, Nk, C), jnp.float32)
    query_pe = jax.random.normal(k_qpe, (B, Nq, C), jnp.float32)
    key_pe = jax.random.normal(k_kpe, (B, Nk, C), jnp.float32)
    params = init_params(k_p, C, mlp_dim, downsample_rate)

    q_ref, k_ref = ref_two_way_block(queries, keys, query_pe, key_pe,
                                     params, num_heads)

    # (a) Exactness check: f32 MXU inputs + exact softmax reciprocal.
    q32, k32 = two_way_attention_block(queries, keys, query_pe, key_pe, params,
                                       num_heads, compute_dtype=jnp.float32,
                                       approx_recip=False)
    jax.block_until_ready((q32, k32))
    assert np.allclose(np.asarray(q32), np.asarray(q_ref), atol=1e-3, rtol=1e-3)
    assert np.allclose(np.asarray(k32), np.asarray(k_ref), atol=1e-3, rtol=1e-3)

    # (b) Fast path: bf16 MXU inputs (f32 accumulation) + approx EUP reciprocal.
    qbf, kbf = two_way_attention_block(queries, keys, query_pe, key_pe, params,
                                       num_heads, compute_dtype=jnp.bfloat16,
                                       approx_recip=True)
    jax.block_until_ready((qbf, kbf))
    assert np.allclose(np.asarray(qbf), np.asarray(q_ref), atol=1e-1, rtol=1e-1)
    assert np.allclose(np.asarray(kbf), np.asarray(k_ref), atol=1e-1, rtol=1e-1)

    print("KERNEL_OK")
</pallas_src>

<mosaic_0001>
module attributes {stable_mosaic.version = 11 : i64} {
  func.func @_two_way_block_kernel(%arg0: i32, %arg1: memref<1x8x128xf32, #tpu.memory_space<vmem>>, %arg2: memref<1x64x128xf32, #tpu.memory_space<vmem>>, %arg3: memref<1x8x128xf32, #tpu.memory_space<vmem>>, %arg4: memref<1x64x128xf32, #tpu.memory_space<vmem>>, %arg5: memref<128x128xf32, #tpu.memory_space<vmem>>, %arg6: memref<1x128xf32, #tpu.memory_space<vmem>>, %arg7: memref<128x128xf32, #tpu.memory_space<vmem>>, %arg8: memref<1x128xf32, #tpu.memory_space<vmem>>, %arg9: memref<128x128xf32, #tpu.memory_space<vmem>>, %arg10: memref<1x128xf32, #tpu.memory_space<vmem>>, %arg11: memref<128x128xf32, #tpu.memory_space<vmem>>, %arg12: memref<1x128xf32, #tpu.memory_space<vmem>>, %arg13: memref<1x128xf32, #tpu.memory_space<vmem>>, %arg14: memref<1x128xf32, #tpu.memory_space<vmem>>, %arg15: memref<128x64xf32, #tpu.memory_space<vmem>>, %arg16: memref<1x64xf32, #tpu.memory_space<vmem>>, %arg17: memref<128x64xf32, #tpu.memory_space<vmem>>, %arg18: memref<1x64xf32, #tpu.memory_space<vmem>>, %arg19: memref<128x64xf32, #tpu.memory_space<vmem>>, %arg20: memref<1x64xf32, #tpu.memory_space<vmem>>, %arg21: memref<64x128xf32, #tpu.memory_space<vmem>>, %arg22: memref<1x128xf32, #tpu.memory_space<vmem>>, %arg23: memref<1x128xf32, #tpu.memory_space<vmem>>, %arg24: memref<1x128xf32, #tpu.memory_space<vmem>>, %arg25: memref<128x256xf32, #tpu.memory_space<vmem>>, %arg26: memref<1x256xf32, #tpu.memory_space<vmem>>, %arg27: memref<256x128xf32, #tpu.memory_space<vmem>>, %arg28: memref<1x128xf32, #tpu.memory_space<vmem>>, %arg29: memref<1x128xf32, #tpu.memory_space<vmem>>, %arg30: memref<1x128xf32, #tpu.memory_space<vmem>>, %arg31: memref<128x64xf32, #tpu.memory_space<vmem>>, %arg32: memref<1x64xf32, #tpu.memory_space<vmem>>, %arg33: memref<128x64xf32, #tpu.memory_space<vmem>>, %arg34: memref<1x64xf32, #tpu.memory_space<vmem>>, %arg35: memref<128x64xf32, #tpu.memory_space<vmem>>, %arg36: memref<1x64xf32, #tpu.memory_space<vmem>>, %arg37: memref<64x128xf32, #tpu.memory_space<vmem>>, %arg38: memref<1x128xf32, #tpu.memory_space<vmem>>, %arg39: memref<1x128xf32, #tpu.memory_space<vmem>>, %arg40: memref<1x128xf32, #tpu.memory_space<vmem>>, %arg41: memref<1x8x128xf32, #tpu.memory_space<vmem>>, %arg42: memref<1x64x128xf32, #tpu.memory_space<vmem>>) attributes {dimension_semantics = [#tpu.dimension_semantics<parallel>], iteration_bounds = array<i64: 2>, scalar_prefetch = 0 : i64, scratch_operands = 0 : i64, tpu.core_type = #tpu.core_type<tc>, window_params = [{transform_indices = @transform_0, window_bounds = array<i64: 1, 8, 128>}, {transform_indices = @transform_1, window_bounds = array<i64: 1, 64, 128>}, {transform_indices = @transform_2, window_bounds = array<i64: 1, 8, 128>}, {transform_indices = @transform_3, window_bounds = array<i64: 1, 64, 128>}, {pipeline_mode = #tpu.pipeline_mode<synchronous>, transform_indices = @transform_4, window_bounds = array<i64: 128, 128>}, {pipeline_mode = #tpu.pipeline_mode<synchronous>, transform_indices = @transform_5, window_bounds = array<i64: 1, 128>}, {pipeline_mode = #tpu.pipeline_mode<synchronous>, transform_indices = @transform_6, window_bounds = array<i64: 128, 128>}, {pipeline_mode = #tpu.pipeline_mode<synchronous>, transform_indices = @transform_7, window_bounds = array<i64: 1, 128>}, {pipeline_mode = #tpu.pipeline_mode<synchronous>, transform_indices = @transform_8, window_bounds = array<i64: 128, 128>}, {pipeline_mode = #tpu.pipeline_mode<synchronous>, transform_indices = @transform_9, window_bounds = array<i64: 1, 128>}, {pipeline_mode = #tpu.pipeline_mode<synchronous>, transform_indices = @transform_10, window_bounds = array<i64: 128, 128>}, {pipeline_mode = #tpu.pipeline_mode<synchronous>, transform_indices = @transform_11, window_bounds = array<i64: 1, 128>}, {pipeline_mode = #tpu.pipeline_mode<synchronous>, transform_indices = @transform_12, window_bounds = array<i64: 1, 128>}, {pipeline_mode = #tpu.pipeline_mode<synchronous>, transform_indices = @transform_13, window_bounds = array<i64: 1, 128>}, {pipeline_mode = #tpu.pipeline_mode<synchronous>, transform_indices = @transform_14, window_bounds = array<i64: 128, 64>}, {pipeline_mode = #tpu.pipeline_mode<synchronous>, transform_indices = @transform_15, window_bounds = array<i64: 1, 64>}, {pipeline_mode = #tpu.pipeline_mode<synchronous>, transform_indices = @transform_16, window_bounds = array<i64: 128, 64>}, {pipeline_mode = #tpu.pipeline_mode<synchronous>, transform_indices = @transform_17, window_bounds = array<i64: 1, 64>}, {pipeline_mode = #tpu.pipeline_mode<synchronous>, transform_indices = @transform_18, window_bounds = array<i64: 128, 64>}, {pipeline_mode = #tpu.pipeline_mode<synchronous>, transform_indices = @transform_19, window_bounds = array<i64: 1, 64>}, {pipeline_mode = #tpu.pipeline_mode<synchronous>, transform_indices = @transform_20, window_bounds = array<i64: 64, 128>}, {pipeline_mode = #tpu.pipeline_mode<synchronous>, transform_indices = @transform_21, window_bounds = array<i64: 1, 128>}, {pipeline_mode = #tpu.pipeline_mode<synchronous>, transform_indices = @transform_22, window_bounds = array<i64: 1, 128>}, {pipeline_mode = #tpu.pipeline_mode<synchronous>, transform_indices = @transform_23, window_bounds = array<i64: 1, 128>}, {pipeline_mode = #tpu.pipeline_mode<synchronous>, transform_indices = @transform_24, window_bounds = array<i64: 128, 256>}, {pipeline_mode = #tpu.pipeline_mode<synchronous>, transform_indices = @transform_25, window_bounds = array<i64: 1, 256>}, {pipeline_mode = #tpu.pipeline_mode<synchronous>, transform_indices = @transform_26, window_bounds = array<i64: 256, 128>}, {pipeline_mode = #tpu.pipeline_mode<synchronous>, transform_indices = @transform_27, window_bounds = array<i64: 1, 128>}, {pipeline_mode = #tpu.pipeline_mode<synchronous>, transform_indices = @transform_28, window_bounds = array<i64: 1, 128>}, {pipeline_mode = #tpu.pipeline_mode<synchronous>, transform_indices = @transform_29, window_bounds = array<i64: 1, 128>}, {pipeline_mode = #tpu.pipeline_mode<synchronous>, transform_indices = @transform_30, window_bounds = array<i64: 128, 64>}, {pipeline_mode = #tpu.pipeline_mode<synchronous>, transform_indices = @transform_31, window_bounds = array<i64: 1, 64>}, {pipeline_mode = #tpu.pipeline_mode<synchronous>, transform_indices = @transform_32, window_bounds = array<i64: 128, 64>}, {pipeline_mode = #tpu.pipeline_mode<synchronous>, transform_indices = @transform_33, window_bounds = array<i64: 1, 64>}, {pipeline_mode = #tpu.pipeline_mode<synchronous>, transform_indices = @transform_34, window_bounds = array<i64: 128, 64>}, {pipeline_mode = #tpu.pipeline_mode<synchronous>, transform_indices = @transform_35, window_bounds = array<i64: 1, 64>}, {pipeline_mode = #tpu.pipeline_mode<synchronous>, transform_indices = @transform_36, window_bounds = array<i64: 64, 128>}, {pipeline_mode = #tpu.pipeline_mode<synchronous>, transform_indices = @transform_37, window_bounds = array<i64: 1, 128>}, {pipeline_mode = #tpu.pipeline_mode<synchronous>, transform_indices = @transform_38, window_bounds = array<i64: 1, 128>}, {pipeline_mode = #tpu.pipeline_mode<synchronous>, transform_indices = @transform_39, window_bounds = array<i64: 1, 128>}, {transform_indices = @transform_40, window_bounds = array<i64: 1, 8, 128>}, {transform_indices = @transform_41, window_bounds = array<i64: 1, 64, 128>}]} {
    %c0 = arith.constant 0 : index
    %c0_0 = arith.constant 0 : index
    %c0_1 = arith.constant 0 : index
    %0 = vector.load %arg1[%c0, %c0_0, %c0_1] : memref<1x8x128xf32, #tpu.memory_space<vmem>>, vector<1x8x128xf32>
    %1 = vector.shape_cast %0 : vector<1x8x128xf32> to vector<8x128xf32>
    %c0_2 = arith.constant 0 : index
    %c0_3 = arith.constant 0 : index
    %c0_4 = arith.constant 0 : index
    %2 = vector.load %arg2[%c0_2, %c0_3, %c0_4] : memref<1x64x128xf32, #tpu.memory_space<vmem>>, vector<1x64x128xf32>
    %3 = vector.shape_cast %2 : vector<1x64x128xf32> to vector<64x128xf32>
    %c0_5 = arith.constant 0 : index
    %c0_6 = arith.constant 0 : index
    %c0_7 = arith.constant 0 : index
    %4 = vector.load %arg3[%c0_5, %c0_6, %c0_7] : memref<1x8x128xf32, #tpu.memory_space<vmem>>, vector<1x8x128xf32>
    %5 = vector.shape_cast %4 : vector<1x8x128xf32> to vector<8x128xf32>
    %c0_8 = arith.constant 0 : index
    %c0_9 = arith.constant 0 : index
    %c0_10 = arith.constant 0 : index
    %6 = vector.load %arg4[%c0_8, %c0_9, %c0_10] : memref<1x64x128xf32, #tpu.memory_space<vmem>>, vector<1x64x128xf32>
    %7 = vector.shape_cast %6 : vector<1x64x128xf32> to vector<64x128xf32>
    %8 = arith.addf %1, %5 : vector<8x128xf32>
    %c0_11 = arith.constant 0 : index
    %c0_12 = arith.constant 0 : index
    %9 = vector.load %arg5[%c0_11, %c0_12] : memref<128x128xf32, #tpu.memory_space<vmem>>, vector<128x128xf32>
    %cst = arith.constant dense<0.000000e+00> : vector<8x128xf32>
    %10 = tpu.matmul %8, %9, %cst {dimension_numbers = #tpu.dot_dimension_numbers<[1], [0], [0], [1], [0, 0, 1, 1], [], []>} : vector<8x128xf32>, vector<128x128xf32>, vector<8x128xf32> -> vector<8x128xf32>
    %c0_13 = arith.constant 0 : index
    %c0_14 = arith.constant 0 : index
    %11 = vector.load %arg6[%c0_13, %c0_14] : memref<1x128xf32, #tpu.memory_space<vmem>>, vector<1x128xf32>
    %12 = vector.broadcast %11 : vector<1x128xf32> to vector<8x128xf32>
    %13 = arith.addf %10, %12 : vector<8x128xf32>
    %c0_15 = arith.constant 0 : index
    %c0_16 = arith.constant 0 : index
    %14 = vector.load %arg7[%c0_15, %c0_16] : memref<128x128xf32, #tpu.memory_space<vmem>>, vector<128x128xf32>
    %cst_17 = arith.constant dense<0.000000e+00> : vector<8x128xf32>
    %15 = tpu.matmul %8, %14, %cst_17 {dimension_numbers = #tpu.dot_dimension_numbers<[1], [0], [0], [1], [0, 0, 1, 1], [], []>} : vector<8x128xf32>, vector<128x128xf32>, vector<8x128xf32> -> vector<8x128xf32>
    %c0_18 = arith.constant 0 : index
    %c0_19 = arith.constant 0 : index
    %16 = vector.load %arg8[%c0_18, %c0_19] : memref<1x128xf32, #tpu.memory_space<vmem>>, vector<1x128xf32>
    %17 = vector.broadcast %16 : vector<1x128xf32> to vector<8x128xf32>
    %18 = arith.addf %15, %17 : vector<8x128xf32>
    %c0_20 = arith.constant 0 : index
    %c0_21 = arith.constant 0 : index
    %19 = vector.load %arg9[%c0_20, %c0_21] : memref<128x128xf32, #tpu.memory_space<vmem>>, vector<128x128xf32>
    %cst_22 = arith.constant dense<0.000000e+00> : vector<8x128xf32>
    %20 = tpu.matmul %1, %19, %cst_22 {dimension_numbers = #tpu.dot_dimension_numbers<[1], [0], [0], [1], [0, 0, 1, 1], [], []>} : vector<8x128xf32>, vector<128x128xf32>, vector<8x128xf32> -> vector<8x128xf32>
    %c0_23 = arith.constant 0 : index
    %c0_24 = arith.constant 0 : index
    %21 = vector.load %arg10[%c0_23, %c0_24] : memref<1x128xf32, #tpu.memory_space<vmem>>, vector<1x128xf32>
    %22 = vector.broadcast %21 : vector<1x128xf32> to vector<8x128xf32>
    %23 = arith.addf %20, %22 : vector<8x128xf32>
    %cst_25 = arith.constant 0.176776692 : f32
    %24 = vector.broadcast %cst_25 : f32 to vector<8x128xf32>
    %25 = arith.mulf %13, %24 : vector<8x128xf32>
    %c0_26 = arith.constant 0 : index
    %c0_27 = arith.constant 0 : index
    %26 = vector.load %arg11[%c0_26, %c0_27] : memref<128x128xf32, #tpu.memory_space<vmem>>, vector<128x128xf32>
    %cst_28 = arith.constant 0.000000e+00 : f32
    %27 = vector.broadcast %cst_28 : f32 to vector<8x128xf32>
    %28 = vector.extract_strided_slice %25 {offsets = [0, 0], sizes = [8, 32], strides = [1, 1]} : vector<8x128xf32> to vector<8x32xf32>
    %29 = vector.extract_strided_slice %18 {offsets = [0, 0], sizes = [8, 32], strides = [1, 1]} : vector<8x128xf32> to vector<8x32xf32>
    %cst_29 = arith.constant dense<0.000000e+00> : vector<8x8xf32>
    %30 = tpu.matmul %28, %29, %cst_29 {dimension_numbers = #tpu.dot_dimension_numbers<[1], [1], [0], [0], [0, 0, 1, 0], [], []>} : vector<8x32xf32>, vector<8x32xf32>, vector<8x8xf32> -> vector<8x8xf32>
    %cst_30 = arith.constant dense<0xFF800000> : vector<8xf32>
    %31 = vector.multi_reduction <maximumf>, %30, %cst_30 [1] : vector<8x8xf32> to vector<8xf32>
    %32 = vector.shape_cast %31 : vector<8xf32> to vector<8x1xf32>
    %33 = vector.broadcast %32 : vector<8x1xf32> to vector<8x8xf32>
    %34 = arith.subf %30, %33 : vector<8x8xf32>
    %35 = math.exp %34 : vector<8x8xf32>
    %cst_31 = arith.constant dense<0.000000e+00> : vector<8xf32>
    %36 = vector.multi_reduction <add>, %35, %cst_31 [1] : vector<8x8xf32> to vector<8xf32>
    %37 = vector.shape_cast %36 : vector<8xf32> to vector<8x1xf32>
    %38 = tpu.reciprocal %37 : vector<8x1xf32> -> vector<8x1xf32>
    %39 = vector.broadcast %38 : vector<8x1xf32> to vector<8x8xf32>
    %40 = arith.mulf %35, %39 : vector<8x8xf32>
    %41 = vector.extract_strided_slice %23 {offsets = [0, 0], sizes = [8, 32], strides = [1, 1]} : vector<8x128xf32> to vector<8x32xf32>
    %cst_32 = arith.constant dense<0.000000e+00> : vector<8x32xf32>
    %42 = tpu.matmul %40, %41, %cst_32 {dimension_numbers = #tpu.dot_dimension_numbers<[1], [0], [0], [1], [0, 0, 1, 1], [], []>} : vector<8x8xf32>, vector<8x32xf32>, vector<8x32xf32> -> vector<8x32xf32>
    %43 = vector.extract_strided_slice %26 {offsets = [0, 0], sizes = [32, 128], strides = [1, 1]} : vector<128x128xf32> to vector<32x128xf32>
    %cst_33 = arith.constant dense<0.000000e+00> : vector<8x128xf32>
    %44 = tpu.matmul %42, %43, %cst_33 {dimension_numbers = #tpu.dot_dimension_numbers<[1], [0], [0], [1], [0, 0, 1, 1], [], []>} : vector<8x32xf32>, vector<32x128xf32>, vector<8x128xf32> -> vector<8x128xf32>
    %45 = arith.addf %27, %44 : vector<8x128xf32>
    %46 = vector.extract_strided_slice %25 {offsets = [0, 32], sizes = [8, 32], strides = [1, 1]} : vector<8x128xf32> to vector<8x32xf32>
    %47 = vector.extract_strided_slice %18 {offsets = [0, 32], sizes = [8, 32], strides = [1, 1]} : vector<8x128xf32> to vector<8x32xf32>
    %cst_34 = arith.constant dense<0.000000e+00> : vector<8x8xf32>
    %48 = tpu.matmul %46, %47, %cst_34 {dimension_numbers = #tpu.dot_dimension_numbers<[1], [1], [0], [0], [0, 0, 1, 0], [], []>} : vector<8x32xf32>, vector<8x32xf32>, vector<8x8xf32> -> vector<8x8xf32>
    %cst_35 = arith.constant dense<0xFF800000> : vector<8xf32>
    %49 = vector.multi_reduction <maximumf>, %48, %cst_35 [1] : vector<8x8xf32> to vector<8xf32>
    %50 = vector.shape_cast %49 : vector<8xf32> to vector<8x1xf32>
    %51 = vector.broadcast %50 : vector<8x1xf32> to vector<8x8xf32>
    %52 = arith.subf %48, %51 : vector<8x8xf32>
    %53 = math.exp %52 : vector<8x8xf32>
    %cst_36 = arith.constant dense<0.000000e+00> : vector<8xf32>
    %54 = vector.multi_reduction <add>, %53, %cst_36 [1] : vector<8x8xf32> to vector<8xf32>
    %55 = vector.shape_cast %54 : vector<8xf32> to vector<8x1xf32>
    %56 = tpu.reciprocal %55 : vector<8x1xf32> -> vector<8x1xf32>
    %57 = vector.broadcast %56 : vector<8x1xf32> to vector<8x8xf32>
    %58 = arith.mulf %53, %57 : vector<8x8xf32>
    %59 = vector.extract_strided_slice %23 {offsets = [0, 32], sizes = [8, 32], strides = [1, 1]} : vector<8x128xf32> to vector<8x32xf32>
    %cst_37 = arith.constant dense<0.000000e+00> : vector<8x32xf32>
    %60 = tpu.matmul %58, %59, %cst_37 {dimension_numbers = #tpu.dot_dimension_numbers<[1], [0], [0], [1], [0, 0, 1, 1], [], []>} : vector<8x8xf32>, vector<8x32xf32>, vector<8x32xf32> -> vector<8x32xf32>
    %61 = vector.extract_strided_slice %26 {offsets = [32, 0], sizes = [32, 128], strides = [1, 1]} : vector<128x128xf32> to vector<32x128xf32>
    %cst_38 = arith.constant dense<0.000000e+00> : vector<8x128xf32>
    %62 = tpu.matmul %60, %61, %cst_38 {dimension_numbers = #tpu.dot_dimension_numbers<[1], [0], [0], [1], [0, 0, 1, 1], [], []>} : vector<8x32xf32>, vector<32x128xf32>, vector<8x128xf32> -> vector<8x128xf32>
    %63 = arith.addf %45, %62 : vector<8x128xf32>
    %64 = vector.extract_strided_slice %25 {offsets = [0, 64], sizes = [8, 32], strides = [1, 1]} : vector<8x128xf32> to vector<8x32xf32>
    %65 = vector.extract_strided_slice %18 {offsets = [0, 64], sizes = [8, 32], strides = [1, 1]} : vector<8x128xf32> to vector<8x32xf32>
    %cst_39 = arith.constant dense<0.000000e+00> : vector<8x8xf32>
    %66 = tpu.matmul %64, %65, %cst_39 {dimension_numbers = #tpu.dot_dimension_numbers<[1], [1], [0], [0], [0, 0, 1, 0], [], []>} : vector<8x32xf32>, vector<8x32xf32>, vector<8x8xf32> -> vector<8x8xf32>
    %cst_40 = arith.constant dense<0xFF800000> : vector<8xf32>
    %67 = vector.multi_reduction <maximumf>, %66, %cst_40 [1] : vector<8x8xf32> to vector<8xf32>
    %68 = vector.shape_cast %67 : vector<8xf32> to vector<8x1xf32>
    %69 = vector.broadcast %68 : vector<8x1xf32> to vector<8x8xf32>
    %70 = arith.subf %66, %69 : vector<8x8xf32>
    %71 = math.exp %70 : vector<8x8xf32>
    %cst_41 = arith.constant dense<0.000000e+00> : vector<8xf32>
    %72 = vector.multi_reduction <add>, %71, %cst_41 [1] : vector<8x8xf32> to vector<8xf32>
    %73 = vector.shape_cast %72 : vector<8xf32> to vector<8x1xf32>
    %74 = tpu.reciprocal %73 : vector<8x1xf32> -> vector<8x1xf32>
    %75 = vector.broadcast %74 : vector<8x1xf32> to vector<8x8xf32>
    %76 = arith.mulf %71, %75 : vector<8x8xf32>
    %77 = vector.extract_strided_slice %23 {offsets = [0, 64], sizes = [8, 32], strides = [1, 1]} : vector<8x128xf32> to vector<8x32xf32>
    %cst_42 = arith.constant dense<0.000000e+00> : vector<8x32xf32>
    %78 = tpu.matmul %76, %77, %cst_42 {dimension_numbers = #tpu.dot_dimension_numbers<[1], [0], [0], [1], [0, 0, 1, 1], [], []>} : vector<8x8xf32>, vector<8x32xf32>, vector<8x32xf32> -> vector<8x32xf32>
    %79 = vector.extract_strided_slice %26 {offsets = [64, 0], sizes = [32, 128], strides = [1, 1]} : vector<128x128xf32> to vector<32x128xf32>
    %cst_43 = arith.constant dense<0.000000e+00> : vector<8x128xf32>
    %80 = tpu.matmul %78, %79, %cst_43 {dimension_numbers = #tpu.dot_dimension_numbers<[1], [0], [0], [1], [0, 0, 1, 1], [], []>} : vector<8x32xf32>, vector<32x128xf32>, vector<8x128xf32> -> vector<8x128xf32>
    %81 = arith.addf %63, %80 : vector<8x128xf32>
    %82 = vector.extract_strided_slice %25 {offsets = [0, 96], sizes = [8, 32], strides = [1, 1]} : vector<8x128xf32> to vector<8x32xf32>
    %83 = vector.extract_strided_slice %18 {offsets = [0, 96], sizes = [8, 32], strides = [1, 1]} : vector<8x128xf32> to vector<8x32xf32>
    %cst_44 = arith.constant dense<0.000000e+00> : vector<8x8xf32>
    %84 = tpu.matmul %82, %83, %cst_44 {dimension_numbers = #tpu.dot_dimension_numbers<[1], [1], [0], [0], [0, 0, 1, 0], [], []>} : vector<8x32xf32>, vector<8x32xf32>, vector<8x8xf32> -> vector<8x8xf32>
    %cst_45 = arith.constant dense<0xFF800000> : vector<8xf32>
    %85 = vector.multi_reduction <maximumf>, %84, %cst_45 [1] : vector<8x8xf32> to vector<8xf32>
    %86 = vector.shape_cast %85 : vector<8xf32> to vector<8x1xf32>
    %87 = vector.broadcast %86 : vector<8x1xf32> to vector<8x8xf32>
    %88 = arith.subf %84, %87 : vector<8x8xf32>
    %89 = math.exp %88 : vector<8x8xf32>
    %cst_46 = arith.constant dense<0.000000e+00> : vector<8xf32>
    %90 = vector.multi_reduction <add>, %89, %cst_46 [1] : vector<8x8xf32> to vector<8xf32>
    %91 = vector.shape_cast %90 : vector<8xf32> to vector<8x1xf32>
    %92 = tpu.reciprocal %91 : vector<8x1xf32> -> vector<8x1xf32>
    %93 = vector.broadcast %92 : vector<8x1xf32> to vector<8x8xf32>
    %94 = arith.mulf %89, %93 : vector<8x8xf32>
    %95 = vector.extract_strided_slice %23 {offsets = [0, 96], sizes = [8, 32], strides = [1, 1]} : vector<8x128xf32> to vector<8x32xf32>
    %cst_47 = arith.constant dense<0.000000e+00> : vector<8x32xf32>
    %96 = tpu.matmul %94, %95, %cst_47 {dimension_numbers = #tpu.dot_dimension_numbers<[1], [0], [0], [1], [0, 0, 1, 1], [], []>} : vector<8x8xf32>, vector<8x32xf32>, vector<8x32xf32> -> vector<8x32xf32>
    %97 = vector.extract_strided_slice %26 {offsets = [96, 0], sizes = [32, 128], strides = [1, 1]} : vector<128x128xf32> to vector<32x128xf32>
    %cst_48 = arith.constant dense<0.000000e+00> : vector<8x128xf32>
    %98 = tpu.matmul %96, %97, %cst_48 {dimension_numbers = #tpu.dot_dimension_numbers<[1], [0], [0], [1], [0, 0, 1, 1], [], []>} : vector<8x32xf32>, vector<32x128xf32>, vector<8x128xf32> -> vector<8x128xf32>
    %99 = arith.addf %81, %98 : vector<8x128xf32>
    %c0_49 = arith.constant 0 : index
    %c0_50 = arith.constant 0 : index
    %100 = vector.load %arg12[%c0_49, %c0_50] : memref<1x128xf32, #tpu.memory_space<vmem>>, vector<1x128xf32>
    %101 = vector.broadcast %100 : vector<1x128xf32> to vector<8x128xf32>
    %102 = arith.addf %99, %101 : vector<8x128xf32>
    %103 = arith.addf %1, %102 : vector<8x128xf32>
    %cst_51 = arith.constant dense<0.000000e+00> : vector<8xf32>
    %104 = vector.multi_reduction <add>, %103, %cst_51 [1] : vector<8x128xf32> to vector<8xf32>
    %105 = vector.shape_cast %104 : vector<8xf32> to vector<8x1xf32>
    %cst_52 = arith.constant 1.280000e+02 : f32
    %106 = vector.broadcast %cst_52 : f32 to vector<8x1xf32>
    %107 = arith.divf %105, %106 : vector<8x1xf32>
    %108 = vector.broadcast %107 : vector<8x1xf32> to vector<8x128xf32>
    %109 = arith.subf %103, %108 : vector<8x128xf32>
    %110 = arith.mulf %109, %109 : vector<8x128xf32>
    %cst_53 = arith.constant dense<0.000000e+00> : vector<8xf32>
    %111 = vector.multi_reduction <add>, %110, %cst_53 [1] : vector<8x128xf32> to vector<8xf32>
    %112 = vector.shape_cast %111 : vector<8xf32> to vector<8x1xf32>
    %cst_54 = arith.constant 1.280000e+02 : f32
    %113 = vector.broadcast %cst_54 : f32 to vector<8x1xf32>
    %114 = arith.divf %112, %113 : vector<8x1xf32>
    %cst_55 = arith.constant 9.99999974E-6 : f32
    %115 = vector.broadcast %cst_55 : f32 to vector<8x1xf32>
    %116 = arith.addf %114, %115 : vector<8x1xf32>
    %117 = math.rsqrt %116 : vector<8x1xf32>
    %118 = vector.broadcast %117 : vector<8x1xf32> to vector<8x128xf32>
    %119 = arith.mulf %109, %118 : vector<8x128xf32>
    %c0_56 = arith.constant 0 : index
    %c0_57 = arith.constant 0 : index
    %120 = vector.load %arg13[%c0_56, %c0_57] : memref<1x128xf32, #tpu.memory_space<vmem>>, vector<1x128xf32>
    %121 = vector.broadcast %120 : vector<1x128xf32> to vector<8x128xf32>
    %122 = arith.mulf %119, %121 : vector<8x128xf32>
    %c0_58 = arith.constant 0 : index
    %c0_59 = arith.constant 0 : index
    %123 = vector.load %arg14[%c0_58, %c0_59] : memref<1x128xf32, #tpu.memory_space<vmem>>, vector<1x128xf32>
    %124 = vector.broadcast %123 : vector<1x128xf32> to vector<8x128xf32>
    %125 = arith.addf %122, %124 : vector<8x128xf32>
    %126 = arith.addf %3, %7 : vector<64x128xf32>
    %127 = arith.addf %125, %5 : vector<8x128xf32>
    %c0_60 = arith.constant 0 : index
    %c0_61 = arith.constant 0 : index
    %128 = vector.load %arg15[%c0_60, %c0_61] : memref<128x64xf32, #tpu.memory_space<vmem>>, vector<128x64xf32>
    %cst_62 = arith.constant dense<0.000000e+00> : vector<8x64xf32>
    %129 = tpu.matmul %127, %128, %cst_62 {dimension_numbers = #tpu.dot_dimension_numbers<[1], [0], [0], [1], [0, 0, 1, 1], [], []>} : vector<8x128xf32>, vector<128x64xf32>, vector<8x64xf32> -> vector<8x64xf32>
    %c0_63 = arith.constant 0 : index
    %c0_64 = arith.constant 0 : index
    %130 = vector.load %arg16[%c0_63, %c0_64] : memref<1x64xf32, #tpu.memory_space<vmem>>, vector<1x64xf32>
    %131 = vector.broadcast %130 : vector<1x64xf32> to vector<8x64xf32>
    %132 = arith.addf %129, %131 : vector<8x64xf32>
    %c0_65 = arith.constant 0 : index
    %c0_66 = arith.constant 0 : index
    %133 = vector.load %arg17[%c0_65, %c0_66] : memref<128x64xf32, #tpu.memory_space<vmem>>, vector<128x64xf32>
    %cst_67 = arith.constant dense<0.000000e+00> : vector<64x64xf32>
    %134 = tpu.matmul %126, %133, %cst_67 {dimension_numbers = #tpu.dot_dimension_numbers<[1], [0], [0], [1], [0, 0, 1, 1], [], []>} : vector<64x128xf32>, vector<128x64xf32>, vector<64x64xf32> -> vector<64x64xf32>
    %c0_68 = arith.constant 0 : index
    %c0_69 = arith.constant 0 : index
    %135 = vector.load %arg18[%c0_68, %c0_69] : memref<1x64xf32, #tpu.memory_space<vmem>>, vector<1x64xf32>
    %136 = vector.broadcast %135 : vector<1x64xf32> to vector<64x64xf32>
    %137 = arith.addf %134, %136 : vector<64x64xf32>
    %c0_70 = arith.constant 0 : index
    %c0_71 = arith.constant 0 : index
    %138 = vector.load %arg19[%c0_70, %c0_71] : memref<128x64xf32, #tpu.memory_space<vmem>>, vector<128x64xf32>
    %cst_72 = arith.constant dense<0.000000e+00> : vector<64x64xf32>
    %139 = tpu.matmul %3, %138, %cst_72 {dimension_numbers = #tpu.dot_dimension_numbers<[1], [0], [0], [1], [0, 0, 1, 1], [], []>} : vector<64x128xf32>, vector<128x64xf32>, vector<64x64xf32> -> vector<64x64xf32>
    %c0_73 = arith.constant 0 : index
    %c0_74 = arith.constant 0 : index
    %140 = vector.load %arg20[%c0_73, %c0_74] : memref<1x64xf32, #tpu.memory_space<vmem>>, vector<1x64xf32>
    %141 = vector.broadcast %140 : vector<1x64xf32> to vector<64x64xf32>
    %142 = arith.addf %139, %141 : vector<64x64xf32>
    %cst_75 = arith.constant 2.500000e-01 : f32
    %143 = vector.broadcast %cst_75 : f32 to vector<8x64xf32>
    %144 = arith.mulf %132, %143 : vector<8x64xf32>
    %c0_76 = arith.constant 0 : index
    %c0_77 = arith.constant 0 : index
    %145 = vector.load %arg21[%c0_76, %c0_77] : memref<64x128xf32, #tpu.memory_space<vmem>>, vector<64x128xf32>
    %cst_78 = arith.constant 0.000000e+00 : f32
    %146 = vector.broadcast %cst_78 : f32 to vector<8x128xf32>
    %147 = vector.extract_strided_slice %144 {offsets = [0, 0], sizes = [8, 16], strides = [1, 1]} : vector<8x64xf32> to vector<8x16xf32>
    %148 = vector.extract_strided_slice %137 {offsets = [0, 0], sizes = [64, 16], strides = [1, 1]} : vector<64x64xf32> to vector<64x16xf32>
    %cst_79 = arith.constant dense<0.000000e+00> : vector<8x64xf32>
    %149 = tpu.matmul %147, %148, %cst_79 {dimension_numbers = #tpu.dot_dimension_numbers<[1], [1], [0], [0], [0, 0, 1, 0], [], []>} : vector<8x16xf32>, vector<64x16xf32>, vector<8x64xf32> -> vector<8x64xf32>
    %cst_80 = arith.constant dense<0xFF800000> : vector<8xf32>
    %150 = vector.multi_reduction <maximumf>, %149, %cst_80 [1] : vector<8x64xf32> to vector<8xf32>
    %151 = vector.shape_cast %150 : vector<8xf32> to vector<8x1xf32>
    %152 = vector.broadcast %151 : vector<8x1xf32> to vector<8x64xf32>
    %153 = arith.subf %149, %152 : vector<8x64xf32>
    %154 = math.exp %153 : vector<8x64xf32>
    %cst_81 = arith.constant dense<0.000000e+00> : vector<8xf32>
    %155 = vector.multi_reduction <add>, %154, %cst_81 [1] : vector<8x64xf32> to vector<8xf32>
    %156 = vector.shape_cast %155 : vector<8xf32> to vector<8x1xf32>
    %157 = tpu.reciprocal %156 : vector<8x1xf32> -> vector<8x1xf32>
    %158 = vector.broadcast %157 : vector<8x1xf32> to vector<8x64xf32>
    %159 = arith.mulf %154, %158 : vector<8x64xf32>
    %160 = vector.extract_strided_slice %142 {offsets = [0, 0], sizes = [64, 16], strides = [1, 1]} : vector<64x64xf32> to vector<64x16xf32>
    %cst_82 = arith.constant dense<0.000000e+00> : vector<8x16xf32>
    %161 = tpu.matmul %159, %160, %cst_82 {dimension_numbers = #tpu.dot_dimension_numbers<[1], [0], [0], [1], [0, 0, 1, 1], [], []>} : vector<8x64xf32>, vector<64x16xf32>, vector<8x16xf32> -> vector<8x16xf32>
    %162 = vector.extract_strided_slice %145 {offsets = [0, 0], sizes = [16, 128], strides = [1, 1]} : vector<64x128xf32> to vector<16x128xf32>
    %cst_83 = arith.constant dense<0.000000e+00> : vector<8x128xf32>
    %163 = tpu.matmul %161, %162, %cst_83 {dimension_numbers = #tpu.dot_dimension_numbers<[1], [0], [0], [1], [0, 0, 1, 1], [], []>} : vector<8x16xf32>, vector<16x128xf32>, vector<8x128xf32> -> vector<8x128xf32>
    %164 = arith.addf %146, %163 : vector<8x128xf32>
    %165 = vector.extract_strided_slice %144 {offsets = [0, 16], sizes = [8, 16], strides = [1, 1]} : vector<8x64xf32> to vector<8x16xf32>
    %166 = vector.extract_strided_slice %137 {offsets = [0, 16], sizes = [64, 16], strides = [1, 1]} : vector<64x64xf32> to vector<64x16xf32>
    %cst_84 = arith.constant dense<0.000000e+00> : vector<8x64xf32>
    %167 = tpu.matmul %165, %166, %cst_84 {dimension_numbers = #tpu.dot_dimension_numbers<[1], [1], [0], [0], [0, 0, 1, 0], [], []>} : vector<8x16xf32>, vector<64x16xf32>, vector<8x64xf32> -> vector<8x64xf32>
    %cst_85 = arith.constant dense<0xFF800000> : vector<8xf32>
    %168 = vector.multi_reduction <maximumf>, %167, %cst_85 [1] : vector<8x64xf32> to vector<8xf32>
    %169 = vector.shape_cast %168 : vector<8xf32> to vector<8x1xf32>
    %170 = vector.broadcast %169 : vector<8x1xf32> to vector<8x64xf32>
    %171 = arith.subf %167, %170 : vector<8x64xf32>
    %172 = math.exp %171 : vector<8x64xf32>
    %cst_86 = arith.constant dense<0.000000e+00> : vector<8xf32>
    %173 = vector.multi_reduction <add>, %172, %cst_86 [1] : vector<8x64xf32> to vector<8xf32>
    %174 = vector.shape_cast %173 : vector<8xf32> to vector<8x1xf32>
    %175 = tpu.reciprocal %174 : vector<8x1xf32> -> vector<8x1xf32>
    %176 = vector.broadcast %175 : vector<8x1xf32> to vector<8x64xf32>
    %177 = arith.mulf %172, %176 : vector<8x64xf32>
    %178 = vector.extract_strided_slice %142 {offsets = [0, 16], sizes = [64, 16], strides = [1, 1]} : vector<64x64xf32> to vector<64x16xf32>
    %cst_87 = arith.constant dense<0.000000e+00> : vector<8x16xf32>
    %179 = tpu.matmul %177, %178, %cst_87 {dimension_numbers = #tpu.dot_dimension_numbers<[1], [0], [0], [1], [0, 0, 1, 1], [], []>} : vector<8x64xf32>, vector<64x16xf32>, vector<8x16xf32> -> vector<8x16xf32>
    %180 = vector.extract_strided_slice %145 {offsets = [16, 0], sizes = [16, 128], strides = [1, 1]} : vector<64x128xf32> to vector<16x128xf32>
    %cst_88 = arith.constant dense<0.000000e+00> : vector<8x128xf32>
    %181 = tpu.matmul %179, %180, %cst_88 {dimension_numbers = #tpu.dot_dimension_numbers<[1], [0], [0], [1], [0, 0, 1, 1], [], []>} : vector<8x16xf32>, vector<16x128xf32>, vector<8x128xf32> -> vector<8x128xf32>
    %182 = arith.addf %164, %181 : vector<8x128xf32>
    %183 = vector.extract_strided_slice %144 {offsets = [0, 32], sizes = [8, 16], strides = [1, 1]} : vector<8x64xf32> to vector<8x16xf32>
    %184 = vector.extract_strided_slice %137 {offsets = [0, 32], sizes = [64, 16], strides = [1, 1]} : vector<64x64xf32> to vector<64x16xf32>
    %cst_89 = arith.constant dense<0.000000e+00> : vector<8x64xf32>
    %185 = tpu.matmul %183, %184, %cst_89 {dimension_numbers = #tpu.dot_dimension_numbers<[1], [1], [0], [0], [0, 0, 1, 0], [], []>} : vector<8x16xf32>, vector<64x16xf32>, vector<8x64xf32> -> vector<8x64xf32>
    %cst_90 = arith.constant dense<0xFF800000> : vector<8xf32>
    %186 = vector.multi_reduction <maximumf>, %185, %cst_90 [1] : vector<8x64xf32> to vector<8xf32>
    %187 = vector.shape_cast %186 : vector<8xf32> to vector<8x1xf32>
    %188 = vector.broadcast %187 : vector<8x1xf32> to vector<8x64xf32>
    %189 = arith.subf %185, %188 : vector<8x64xf32>
    %190 = math.exp %189 : vector<8x64xf32>
    %cst_91 = arith.constant dense<0.000000e+00> : vector<8xf32>
    %191 = vector.multi_reduction <add>, %190, %cst_91 [1] : vector<8x64xf32> to vector<8xf32>
    %192 = vector.shape_cast %191 : vector<8xf32> to vector<8x1xf32>
    %193 = tpu.reciprocal %192 : vector<8x1xf32> -> vector<8x1xf32>
    %194 = vector.broadcast %193 : vector<8x1xf32> to vector<8x64xf32>
    %195 = arith.mulf %190, %194 : vector<8x64xf32>
    %196 = vector.extract_strided_slice %142 {offsets = [0, 32], sizes = [64, 16], strides = [1, 1]} : vector<64x64xf32> to vector<64x16xf32>
    %cst_92 = arith.constant dense<0.000000e+00> : vector<8x16xf32>
    %197 = tpu.matmul %195, %196, %cst_92 {dimension_numbers = #tpu.dot_dimension_numbers<[1], [0], [0], [1], [0, 0, 1, 1], [], []>} : vector<8x64xf32>, vector<64x16xf32>, vector<8x16xf32> -> vector<8x16xf32>
    %198 = vector.extract_strided_slice %145 {offsets = [32, 0], sizes = [16, 128], strides = [1, 1]} : vector<64x128xf32> to vector<16x128xf32>
    %cst_93 = arith.constant dense<0.000000e+00> : vector<8x128xf32>
    %199 = tpu.matmul %197, %198, %cst_93 {dimension_numbers = #tpu.dot_dimension_numbers<[1], [0], [0], [1], [0, 0, 1, 1], [], []>} : vector<8x16xf32>, vector<16x128xf32>, vector<8x128xf32> -> vector<8x128xf32>
    %200 = arith.addf %182, %199 : vector<8x128xf32>
    %201 = vector.extract_strided_slice %144 {offsets = [0, 48], sizes = [8, 16], strides = [1, 1]} : vector<8x64xf32> to vector<8x16xf32>
    %202 = vector.extract_strided_slice %137 {offsets = [0, 48], sizes = [64, 16], strides = [1, 1]} : vector<64x64xf32> to vector<64x16xf32>
    %cst_94 = arith.constant dense<0.000000e+00> : vector<8x64xf32>
    %203 = tpu.matmul %201, %202, %cst_94 {dimension_numbers = #tpu.dot_dimension_numbers<[1], [1], [0], [0], [0, 0, 1, 0], [], []>} : vector<8x16xf32>, vector<64x16xf32>, vector<8x64xf32> -> vector<8x64xf32>
    %cst_95 = arith.constant dense<0xFF800000> : vector<8xf32>
    %204 = vector.multi_reduction <maximumf>, %203, %cst_95 [1] : vector<8x64xf32> to vector<8xf32>
    %205 = vector.shape_cast %204 : vector<8xf32> to vector<8x1xf32>
    %206 = vector.broadcast %205 : vector<8x1xf32> to vector<8x64xf32>
    %207 = arith.subf %203, %206 : vector<8x64xf32>
    %208 = math.exp %207 : vector<8x64xf32>
    %cst_96 = arith.constant dense<0.000000e+00> : vector<8xf32>
    %209 = vector.multi_reduction <add>, %208, %cst_96 [1] : vector<8x64xf32> to vector<8xf32>
    %210 = vector.shape_cast %209 : vector<8xf32> to vector<8x1xf32>
    %211 = tpu.reciprocal %210 : vector<8x1xf32> -> vector<8x1xf32>
    %212 = vector.broadcast %211 : vector<8x1xf32> to vector<8x64xf32>
    %213 = arith.mulf %208, %212 : vector<8x64xf32>
    %214 = vector.extract_strided_slice %142 {offsets = [0, 48], sizes = [64, 16], strides = [1, 1]} : vector<64x64xf32> to vector<64x16xf32>
    %cst_97 = arith.constant dense<0.000000e+00> : vector<8x16xf32>
    %215 = tpu.matmul %213, %214, %cst_97 {dimension_numbers = #tpu.dot_dimension_numbers<[1], [0], [0], [1], [0, 0, 1, 1], [], []>} : vector<8x64xf32>, vector<64x16xf32>, vector<8x16xf32> -> vector<8x16xf32>
    %216 = vector.extract_strided_slice %145 {offsets = [48, 0], sizes = [16, 128], strides = [1, 1]} : vector<64x128xf32> to vector<16x128xf32>
    %cst_98 = arith.constant dense<0.000000e+00> : vector<8x128xf32>
    %217 = tpu.matmul %215, %216, %cst_98 {dimension_numbers = #tpu.dot_dimension_numbers<[1], [0], [0], [1], [0, 0, 1, 1], [], []>} : vector<8x16xf32>, vector<16x128xf32>, vector<8x128xf32> -> vector<8x128xf32>
    %218 = arith.addf %200, %217 : vector<8x128xf32>
    %c0_99 = arith.constant 0 : index
    %c0_100 = arith.constant 0 : index
    %219 = vector.load %arg22[%c0_99, %c0_100] : memref<1x128xf32, #tpu.memory_space<vmem>>, vector<1x128xf32>
    %220 = vector.broadcast %219 : vector<1x128xf32> to vector<8x128xf32>
    %221 = arith.addf %218, %220 : vector<8x128xf32>
    %222 = arith.addf %125, %221 : vector<8x128xf32>
    %cst_101 = arith.constant dense<0.000000e+00> : vector<8xf32>
    %223 = vector.multi_reduction <add>, %222, %cst_101 [1] : vector<8x128xf32> to vector<8xf32>
    %224 = vector.shape_cast %223 : vector<8xf32> to vector<8x1xf32>
    %cst_102 = arith.constant 1.280000e+02 : f32
    %225 = vector.broadcast %cst_102 : f32 to vector<8x1xf32>
    %226 = arith.divf %224, %225 : vector<8x1xf32>
    %227 = vector.broadcast %226 : vector<8x1xf32> to vector<8x128xf32>
    %228 = arith.subf %222, %227 : vector<8x128xf32>
    %229 = arith.mulf %228, %228 : vector<8x128xf32>
    %cst_103 = arith.constant dense<0.000000e+00> : vector<8xf32>
    %230 = vector.multi_reduction <add>, %229, %cst_103 [1] : vector<8x128xf32> to vector<8xf32>
    %231 = vector.shape_cast %230 : vector<8xf32> to vector<8x1xf32>
    %cst_104 = arith.constant 1.280000e+02 : f32
    %232 = vector.broadcast %cst_104 : f32 to vector<8x1xf32>
    %233 = arith.divf %231, %232 : vector<8x1xf32>
    %cst_105 = arith.constant 9.99999974E-6 : f32
    %234 = vector.broadcast %cst_105 : f32 to vector<8x1xf32>
    %235 = arith.addf %233, %234 : vector<8x1xf32>
    %236 = math.rsqrt %235 : vector<8x1xf32>
    %237 = vector.broadcast %236 : vector<8x1xf32> to vector<8x128xf32>
    %238 = arith.mulf %228, %237 : vector<8x128xf32>
    %c0_106 = arith.constant 0 : index
    %c0_107 = arith.constant 0 : index
    %239 = vector.load %arg23[%c0_106, %c0_107] : memref<1x128xf32, #tpu.memory_space<vmem>>, vector<1x128xf32>
    %240 = vector.broadcast %239 : vector<1x128xf32> to vector<8x128xf32>
    %241 = arith.mulf %238, %240 : vector<8x128xf32>
    %c0_108 = arith.constant 0 : index
    %c0_109 = arith.constant 0 : index
    %242 = vector.load %arg24[%c0_108, %c0_109] : memref<1x128xf32, #tpu.memory_space<vmem>>, vector<1x128xf32>
    %243 = vector.broadcast %242 : vector<1x128xf32> to vector<8x128xf32>
    %244 = arith.addf %241, %243 : vector<8x128xf32>
    %c0_110 = arith.constant 0 : index
    %c0_111 = arith.constant 0 : index
    %245 = vector.load %arg25[%c0_110, %c0_111] : memref<128x256xf32, #tpu.memory_space<vmem>>, vector<128x256xf32>
    %cst_112 = arith.constant dense<0.000000e+00> : vector<8x256xf32>
    %246 = tpu.matmul %244, %245, %cst_112 {dimension_numbers = #tpu.dot_dimension_numbers<[1], [0], [0], [1], [0, 0, 1, 1], [], []>} : vector<8x128xf32>, vector<128x256xf32>, vector<8x256xf32> -> vector<8x256xf32>
    %c0_113 = arith.constant 0 : index
    %c0_114 = arith.constant 0 : index
    %247 = vector.load %arg26[%c0_113, %c0_114] : memref<1x256xf32, #tpu.memory_space<vmem>>, vector<1x256xf32>
    %248 = vector.broadcast %247 : vector<1x256xf32> to vector<8x256xf32>
    %249 = arith.addf %246, %248 : vector<8x256xf32>
    %cst_115 = arith.constant 0.000000e+00 : f32
    %250 = vector.broadcast %cst_115 : f32 to vector<8x256xf32>
    %251 = arith.maximumf %249, %250 : vector<8x256xf32>
    %c0_116 = arith.constant 0 : index
    %c0_117 = arith.constant 0 : index
    %252 = vector.load %arg27[%c0_116, %c0_117] : memref<256x128xf32, #tpu.memory_space<vmem>>, vector<256x128xf32>
    %cst_118 = arith.constant dense<0.000000e+00> : vector<8x128xf32>
    %253 = tpu.matmul %251, %252, %cst_118 {dimension_numbers = #tpu.dot_dimension_numbers<[1], [0], [0], [1], [0, 0, 1, 1], [], []>} : vector<8x256xf32>, vector<256x128xf32>, vector<8x128xf32> -> vector<8x128xf32>
    %c0_119 = arith.constant 0 : index
    %c0_120 = arith.constant 0 : index
    %254 = vector.load %arg28[%c0_119, %c0_120] : memref<1x128xf32, #tpu.memory_space<vmem>>, vector<1x128xf32>
    %255 = vector.broadcast %254 : vector<1x128xf32> to vector<8x128xf32>
    %256 = arith.addf %253, %255 : vector<8x128xf32>
    %257 = arith.addf %244, %256 : vector<8x128xf32>
    %cst_121 = arith.constant dense<0.000000e+00> : vector<8xf32>
    %258 = vector.multi_reduction <add>, %257, %cst_121 [1] : vector<8x128xf32> to vector<8xf32>
    %259 = vector.shape_cast %258 : vector<8xf32> to vector<8x1xf32>
    %cst_122 = arith.constant 1.280000e+02 : f32
    %260 = vector.broadcast %cst_122 : f32 to vector<8x1xf32>
    %261 = arith.divf %259, %260 : vector<8x1xf32>
    %262 = vector.broadcast %261 : vector<8x1xf32> to vector<8x128xf32>
    %263 = arith.subf %257, %262 : vector<8x128xf32>
    %264 = arith.mulf %263, %263 : vector<8x128xf32>
    %cst_123 = arith.constant dense<0.000000e+00> : vector<8xf32>
    %265 = vector.multi_reduction <add>, %264, %cst_123 [1] : vector<8x128xf32> to vector<8xf32>
    %266 = vector.shape_cast %265 : vector<8xf32> to vector<8x1xf32>
    %cst_124 = arith.constant 1.280000e+02 : f32
    %267 = vector.broadcast %cst_124 : f32 to vector<8x1xf32>
    %268 = arith.divf %266, %267 : vector<8x1xf32>
    %cst_125 = arith.constant 9.99999974E-6 : f32
    %269 = vector.broadcast %cst_125 : f32 to vector<8x1xf32>
    %270 = arith.addf %268, %269 : vector<8x1xf32>
    %271 = math.rsqrt %270 : vector<8x1xf32>
    %272 = vector.broadcast %271 : vector<8x1xf32> to vector<8x128xf32>
    %273 = arith.mulf %263, %272 : vector<8x128xf32>
    %c0_126 = arith.constant 0 : index
    %c0_127 = arith.constant 0 : index
    %274 = vector.load %arg29[%c0_126, %c0_127] : memref<1x128xf32, #tpu.memory_space<vmem>>, vector<1x128xf32>
    %275 = vector.broadcast %274 : vector<1x128xf32> to vector<8x128xf32>
    %276 = arith.mulf %273, %275 : vector<8x128xf32>
    %c0_128 = arith.constant 0 : index
    %c0_129 = arith.constant 0 : index
    %277 = vector.load %arg30[%c0_128, %c0_129] : memref<1x128xf32, #tpu.memory_space<vmem>>, vector<1x128xf32>
    %278 = vector.broadcast %277 : vector<1x128xf32> to vector<8x128xf32>
    %279 = arith.addf %276, %278 : vector<8x128xf32>
    %280 = arith.addf %279, %5 : vector<8x128xf32>
    %c0_130 = arith.constant 0 : index
    %c0_131 = arith.constant 0 : index
    %281 = vector.load %arg31[%c0_130, %c0_131] : memref<128x64xf32, #tpu.memory_space<vmem>>, vector<128x64xf32>
    %cst_132 = arith.constant dense<0.000000e+00> : vector<64x64xf32>
    %282 = tpu.matmul %126, %281, %cst_132 {dimension_numbers = #tpu.dot_dimension_numbers<[1], [0], [0], [1], [0, 0, 1, 1], [], []>} : vector<64x128xf32>, vector<128x64xf32>, vector<64x64xf32> -> vector<64x64xf32>
    %c0_133 = arith.constant 0 : index
    %c0_134 = arith.constant 0 : index
    %283 = vector.load %arg32[%c0_133, %c0_134] : memref<1x64xf32, #tpu.memory_space<vmem>>, vector<1x64xf32>
    %284 = vector.broadcast %283 : vector<1x64xf32> to vector<64x64xf32>
    %285 = arith.addf %282, %284 : vector<64x64xf32>
    %c0_135 = arith.constant 0 : index
    %c0_136 = arith.constant 0 : index
    %286 = vector.load %arg33[%c0_135, %c0_136] : memref<128x64xf32, #tpu.memory_space<vmem>>, vector<128x64xf32>
    %cst_137 = arith.constant dense<0.000000e+00> : vector<8x64xf32>
    %287 = tpu.matmul %280, %286, %cst_137 {dimension_numbers = #tpu.dot_dimension_numbers<[1], [0], [0], [1], [0, 0, 1, 1], [], []>} : vector<8x128xf32>, vector<128x64xf32>, vector<8x64xf32> -> vector<8x64xf32>
    %c0_138 = arith.constant 0 : index
    %c0_139 = arith.constant 0 : index
    %288 = vector.load %arg34[%c0_138, %c0_139] : memref<1x64xf32, #tpu.memory_space<vmem>>, vector<1x64xf32>
    %289 = vector.broadcast %288 : vector<1x64xf32> to vector<8x64xf32>
    %290 = arith.addf %287, %289 : vector<8x64xf32>
    %c0_140 = arith.constant 0 : index
    %c0_141 = arith.constant 0 : index
    %291 = vector.load %arg35[%c0_140, %c0_141] : memref<128x64xf32, #tpu.memory_space<vmem>>, vector<128x64xf32>
    %cst_142 = arith.constant dense<0.000000e+00> : vector<8x64xf32>
    %292 = tpu.matmul %279, %291, %cst_142 {dimension_numbers = #tpu.dot_dimension_numbers<[1], [0], [0], [1], [0, 0, 1, 1], [], []>} : vector<8x128xf32>, vector<128x64xf32>, vector<8x64xf32> -> vector<8x64xf32>
    %c0_143 = arith.constant 0 : index
    %c0_144 = arith.constant 0 : index
    %293 = vector.load %arg36[%c0_143, %c0_144] : memref<1x64xf32, #tpu.memory_space<vmem>>, vector<1x64xf32>
    %294 = vector.broadcast %293 : vector<1x64xf32> to vector<8x64xf32>
    %295 = arith.addf %292, %294 : vector<8x64xf32>
    %cst_145 = arith.constant 2.500000e-01 : f32
    %296 = vector.broadcast %cst_145 : f32 to vector<64x64xf32>
    %297 = arith.mulf %285, %296 : vector<64x64xf32>
    %c0_146 = arith.constant 0 : index
    %c0_147 = arith.constant 0 : index
    %298 = vector.load %arg37[%c0_146, %c0_147] : memref<64x128xf32, #tpu.memory_space<vmem>>, vector<64x128xf32>
    %cst_148 = arith.constant 0.000000e+00 : f32
    %299 = vector.broadcast %cst_148 : f32 to vector<64x128xf32>
    %300 = vector.extract_strided_slice %297 {offsets = [0, 0], sizes = [64, 16], strides = [1, 1]} : vector<64x64xf32> to vector<64x16xf32>
    %301 = vector.extract_strided_slice %290 {offsets = [0, 0], sizes = [8, 16], strides = [1, 1]} : vector<8x64xf32> to vector<8x16xf32>
    %cst_149 = arith.constant dense<0.000000e+00> : vector<64x8xf32>
    %302 = tpu.matmul %300, %301, %cst_149 {dimension_numbers = #tpu.dot_dimension_numbers<[1], [1], [0], [0], [0, 0, 1, 0], [], []>} : vector<64x16xf32>, vector<8x16xf32>, vector<64x8xf32> -> vector<64x8xf32>
    %cst_150 = arith.constant dense<0xFF800000> : vector<64xf32>
    %303 = vector.multi_reduction <maximumf>, %302, %cst_150 [1] : vector<64x8xf32> to vector<64xf32>
    %304 = vector.shape_cast %303 : vector<64xf32> to vector<64x1xf32>
    %305 = vector.broadcast %304 : vector<64x1xf32> to vector<64x8xf32>
    %306 = arith.subf %302, %305 : vector<64x8xf32>
    %307 = math.exp %306 : vector<64x8xf32>
    %cst_151 = arith.constant dense<0.000000e+00> : vector<64xf32>
    %308 = vector.multi_reduction <add>, %307, %cst_151 [1] : vector<64x8xf32> to vector<64xf32>
    %309 = vector.shape_cast %308 : vector<64xf32> to vector<64x1xf32>
    %310 = tpu.reciprocal %309 : vector<64x1xf32> -> vector<64x1xf32>
    %311 = vector.broadcast %310 : vector<64x1xf32> to vector<64x8xf32>
    %312 = arith.mulf %307, %311 : vector<64x8xf32>
    %313 = vector.extract_strided_slice %295 {offsets = [0, 0], sizes = [8, 16], strides = [1, 1]} : vector<8x64xf32> to vector<8x16xf32>
    %cst_152 = arith.constant dense<0.000000e+00> : vector<64x16xf32>
    %314 = tpu.matmul %312, %313, %cst_152 {dimension_numbers = #tpu.dot_dimension_numbers<[1], [0], [0], [1], [0, 0, 1, 1], [], []>} : vector<64x8xf32>, vector<8x16xf32>, vector<64x16xf32> -> vector<64x16xf32>
    %315 = vector.extract_strided_slice %298 {offsets = [0, 0], sizes = [16, 128], strides = [1, 1]} : vector<64x128xf32> to vector<16x128xf32>
    %cst_153 = arith.constant dense<0.000000e+00> : vector<64x128xf32>
    %316 = tpu.matmul %314, %315, %cst_153 {dimension_numbers = #tpu.dot_dimension_numbers<[1], [0], [0], [1], [0, 0, 1, 1], [], []>} : vector<64x16xf32>, vector<16x128xf32>, vector<64x128xf32> -> vector<64x128xf32>
    %317 = arith.addf %299, %316 : vector<64x128xf32>
    %318 = vector.extract_strided_slice %297 {offsets = [0, 16], sizes = [64, 16], strides = [1, 1]} : vector<64x64xf32> to vector<64x16xf32>
    %319 = vector.extract_strided_slice %290 {offsets = [0, 16], sizes = [8, 16], strides = [1, 1]} : vector<8x64xf32> to vector<8x16xf32>
    %cst_154 = arith.constant dense<0.000000e+00> : vector<64x8xf32>
    %320 = tpu.matmul %318, %319, %cst_154 {dimension_numbers = #tpu.dot_dimension_numbers<[1], [1], [0], [0], [0, 0, 1, 0], [], []>} : vector<64x16xf32>, vector<8x16xf32>, vector<64x8xf32> -> vector<64x8xf32>
    %cst_155 = arith.constant dense<0xFF800000> : vector<64xf32>
    %321 = vector.multi_reduction <maximumf>, %320, %cst_155 [1] : vector<64x8xf32> to vector<64xf32>
    %322 = vector.shape_cast %321 : vector<64xf32> to vector<64x1xf32>
    %323 = vector.broadcast %322 : vector<64x1xf32> to vector<64x8xf32>
    %324 = arith.subf %320, %323 : vector<64x8xf32>
    %325 = math.exp %324 : vector<64x8xf32>
    %cst_156 = arith.constant dense<0.000000e+00> : vector<64xf32>
    %326 = vector.multi_reduction <add>, %325, %cst_156 [1] : vector<64x8xf32> to vector<64xf32>
    %327 = vector.shape_cast %326 : vector<64xf32> to vector<64x1xf32>
    %328 = tpu.reciprocal %327 : vector<64x1xf32> -> vector<64x1xf32>
    %329 = vector.broadcast %328 : vector<64x1xf32> to vector<64x8xf32>
    %330 = arith.mulf %325, %329 : vector<64x8xf32>
    %331 = vector.extract_strided_slice %295 {offsets = [0, 16], sizes = [8, 16], strides = [1, 1]} : vector<8x64xf32> to vector<8x16xf32>
    %cst_157 = arith.constant dense<0.000000e+00> : vector<64x16xf32>
    %332 = tpu.matmul %330, %331, %cst_157 {dimension_numbers = #tpu.dot_dimension_numbers<[1], [0], [0], [1], [0, 0, 1, 1], [], []>} : vector<64x8xf32>, vector<8x16xf32>, vector<64x16xf32> -> vector<64x16xf32>
    %333 = vector.extract_strided_slice %298 {offsets = [16, 0], sizes = [16, 128], strides = [1, 1]} : vector<64x128xf32> to vector<16x128xf32>
    %cst_158 = arith.constant dense<0.000000e+00> : vector<64x128xf32>
    %334 = tpu.matmul %332, %333, %cst_158 {dimension_numbers = #tpu.dot_dimension_numbers<[1], [0], [0], [1], [0, 0, 1, 1], [], []>} : vector<64x16xf32>, vector<16x128xf32>, vector<64x128xf32> -> vector<64x128xf32>
    %335 = arith.addf %317, %334 : vector<64x128xf32>
    %336 = vector.extract_strided_slice %297 {offsets = [0, 32], sizes = [64, 16], strides = [1, 1]} : vector<64x64xf32> to vector<64x16xf32>
    %337 = vector.extract_strided_slice %290 {offsets = [0, 32], sizes = [8, 16], strides = [1, 1]} : vector<8x64xf32> to vector<8x16xf32>
    %cst_159 = arith.constant dense<0.000000e+00> : vector<64x8xf32>
    %338 = tpu.matmul %336, %337, %cst_159 {dimension_numbers = #tpu.dot_dimension_numbers<[1], [1], [0], [0], [0, 0, 1, 0], [], []>} : vector<64x16xf32>, vector<8x16xf32>, vector<64x8xf32> -> vector<64x8xf32>
    %cst_160 = arith.constant dense<0xFF800000> : vector<64xf32>
    %339 = vector.multi_reduction <maximumf>, %338, %cst_160 [1] : vector<64x8xf32> to vector<64xf32>
    %340 = vector.shape_cast %339 : vector<64xf32> to vector<64x1xf32>
    %341 = vector.broadcast %340 : vector<64x1xf32> to vector<64x8xf32>
    %342 = arith.subf %338, %341 : vector<64x8xf32>
    %343 = math.exp %342 : vector<64x8xf32>
    %cst_161 = arith.constant dense<0.000000e+00> : vector<64xf32>
    %344 = vector.multi_reduction <add>, %343, %cst_161 [1] : vector<64x8xf32> to vector<64xf32>
    %345 = vector.shape_cast %344 : vector<64xf32> to vector<64x1xf32>
    %346 = tpu.reciprocal %345 : vector<64x1xf32> -> vector<64x1xf32>
    %347 = vector.broadcast %346 : vector<64x1xf32> to vector<64x8xf32>
    %348 = arith.mulf %343, %347 : vector<64x8xf32>
    %349 = vector.extract_strided_slice %295 {offsets = [0, 32], sizes = [8, 16], strides = [1, 1]} : vector<8x64xf32> to vector<8x16xf32>
    %cst_162 = arith.constant dense<0.000000e+00> : vector<64x16xf32>
    %350 = tpu.matmul %348, %349, %cst_162 {dimension_numbers = #tpu.dot_dimension_numbers<[1], [0], [0], [1], [0, 0, 1, 1], [], []>} : vector<64x8xf32>, vector<8x16xf32>, vector<64x16xf32> -> vector<64x16xf32>
    %351 = vector.extract_strided_slice %298 {offsets = [32, 0], sizes = [16, 128], strides = [1, 1]} : vector<64x128xf32> to vector<16x128xf32>
    %cst_163 = arith.constant dense<0.000000e+00> : vector<64x128xf32>
    %352 = tpu.matmul %350, %351, %cst_163 {dimension_numbers = #tpu.dot_dimension_numbers<[1], [0], [0], [1], [0, 0, 1, 1], [], []>} : vector<64x16xf32>, vector<16x128xf32>, vector<64x128xf32> -> vector<64x128xf32>
    %353 = arith.addf %335, %352 : vector<64x128xf32>
    %354 = vector.extract_strided_slice %297 {offsets = [0, 48], sizes = [64, 16], strides = [1, 1]} : vector<64x64xf32> to vector<64x16xf32>
    %355 = vector.extract_strided_slice %290 {offsets = [0, 48], sizes = [8, 16], strides = [1, 1]} : vector<8x64xf32> to vector<8x16xf32>
    %cst_164 = arith.constant dense<0.000000e+00> : vector<64x8xf32>
    %356 = tpu.matmul %354, %355, %cst_164 {dimension_numbers = #tpu.dot_dimension_numbers<[1], [1], [0], [0], [0, 0, 1, 0], [], []>} : vector<64x16xf32>, vector<8x16xf32>, vector<64x8xf32> -> vector<64x8xf32>
    %cst_165 = arith.constant dense<0xFF800000> : vector<64xf32>
    %357 = vector.multi_reduction <maximumf>, %356, %cst_165 [1] : vector<64x8xf32> to vector<64xf32>
    %358 = vector.shape_cast %357 : vector<64xf32> to vector<64x1xf32>
    %359 = vector.broadcast %358 : vector<64x1xf32> to vector<64x8xf32>
    %360 = arith.subf %356, %359 : vector<64x8xf32>
    %361 = math.exp %360 : vector<64x8xf32>
    %cst_166 = arith.constant dense<0.000000e+00> : vector<64xf32>
    %362 = vector.multi_reduction <add>, %361, %cst_166 [1] : vector<64x8xf32> to vector<64xf32>
    %363 = vector.shape_cast %362 : vector<64xf32> to vector<64x1xf32>
    %364 = tpu.reciprocal %363 : vector<64x1xf32> -> vector<64x1xf32>
    %365 = vector.broadcast %364 : vector<64x1xf32> to vector<64x8xf32>
    %366 = arith.mulf %361, %365 : vector<64x8xf32>
    %367 = vector.extract_strided_slice %295 {offsets = [0, 48], sizes = [8, 16], strides = [1, 1]} : vector<8x64xf32> to vector<8x16xf32>
    %cst_167 = arith.constant dense<0.000000e+00> : vector<64x16xf32>
    %368 = tpu.matmul %366, %367, %cst_167 {dimension_numbers = #tpu.dot_dimension_numbers<[1], [0], [0], [1], [0, 0, 1, 1], [], []>} : vector<64x8xf32>, vector<8x16xf32>, vector<64x16xf32> -> vector<64x16xf32>
    %369 = vector.extract_strided_slice %298 {offsets = [48, 0], sizes = [16, 128], strides = [1, 1]} : vector<64x128xf32> to vector<16x128xf32>
    %cst_168 = arith.constant dense<0.000000e+00> : vector<64x128xf32>
    %370 = tpu.matmul %368, %369, %cst_168 {dimension_numbers = #tpu.dot_dimension_numbers<[1], [0], [0], [1], [0, 0, 1, 1], [], []>} : vector<64x16xf32>, vector<16x128xf32>, vector<64x128xf32> -> vector<64x128xf32>
    %371 = arith.addf %353, %370 : vector<64x128xf32>
    %c0_169 = arith.constant 0 : index
    %c0_170 = arith.constant 0 : index
    %372 = vector.load %arg38[%c0_169, %c0_170] : memref<1x128xf32, #tpu.memory_space<vmem>>, vector<1x128xf32>
    %373 = vector.broadcast %372 : vector<1x128xf32> to vector<64x128xf32>
    %374 = arith.addf %371, %373 : vector<64x128xf32>
    %375 = arith.addf %3, %374 : vector<64x128xf32>
    %cst_171 = arith.constant dense<0.000000e+00> : vector<64xf32>
    %376 = vector.multi_reduction <add>, %375, %cst_171 [1] : vector<64x128xf32> to vector<64xf32>
    %377 = vector.shape_cast %376 : vector<64xf32> to vector<64x1xf32>
    %cst_172 = arith.constant 1.280000e+02 : f32
    %378 = vector.broadcast %cst_172 : f32 to vector<64x1xf32>
    %379 = arith.divf %377, %378 : vector<64x1xf32>
    %380 = vector.broadcast %379 : vector<64x1xf32> to vector<64x128xf32>
    %381 = arith.subf %375, %380 : vector<64x128xf32>
    %382 = arith.mulf %381, %381 : vector<64x128xf32>
    %cst_173 = arith.constant dense<0.000000e+00> : vector<64xf32>
    %383 = vector.multi_reduction <add>, %382, %cst_173 [1] : vector<64x128xf32> to vector<64xf32>
    %384 = vector.shape_cast %383 : vector<64xf32> to vector<64x1xf32>
    %cst_174 = arith.constant 1.280000e+02 : f32
    %385 = vector.broadcast %cst_174 : f32 to vector<64x1xf32>
    %386 = arith.divf %384, %385 : vector<64x1xf32>
    %cst_175 = arith.constant 9.99999974E-6 : f32
    %387 = vector.broadcast %cst_175 : f32 to vector<64x1xf32>
    %388 = arith.addf %386, %387 : vector<64x1xf32>
    %389 = math.rsqrt %388 : vector<64x1xf32>
    %390 = vector.broadcast %389 : vector<64x1xf32> to vector<64x128xf32>
    %391 = arith.mulf %381, %390 : vector<64x128xf32>
    %c0_176 = arith.constant 0 : index
    %c0_177 = arith.constant 0 : index
    %392 = vector.load %arg39[%c0_176, %c0_177] : memref<1x128xf32, #tpu.memory_space<vmem>>, vector<1x128xf32>
    %393 = vector.broadcast %392 : vector<1x128xf32> to vector<64x128xf32>
    %394 = arith.mulf %391, %393 : vector<64x128xf32>
    %c0_178 = arith.constant 0 : index
    %c0_179 = arith.constant 0 : index
    %395 = vector.load %arg40[%c0_178, %c0_179] : memref<1x128xf32, #tpu.memory_space<vmem>>, vector<1x128xf32>
    %396 = vector.broadcast %395 : vector<1x128xf32> to vector<64x128xf32>
    %397 = arith.addf %394, %396 : vector<64x128xf32>
    %c0_180 = arith.constant 0 : index
    %c0_181 = arith.constant 0 : index
    %c0_182 = arith.constant 0 : index
    %398 = vector.load %arg41[%c0_180, %c0_181, %c0_182] : memref<1x8x128xf32, #tpu.memory_space<vmem>>, vector<1x8x128xf32>
    %399 = vector.shape_cast %398 : vector<1x8x128xf32> to vector<8x128xf32>
    %400 = vector.shape_cast %279 : vector<8x128xf32> to vector<1x8x128xf32>
    tpu.vector_store %arg41[%c0_180, %c0_181, %c0_182], %400 {strides = array<i32>} : memref<1x8x128xf32, #tpu.memory_space<vmem>>, vector<1x8x128xf32>,
    %c0_183 = arith.constant 0 : index
    %c0_184 = arith.constant 0 : index
    %c0_185 = arith.constant 0 : index
    %401 = vector.load %arg42[%c0_183, %c0_184, %c0_185] : memref<1x64x128xf32, #tpu.memory_space<vmem>>, vector<1x64x128xf32>
    %402 = vector.shape_cast %401 : vector<1x64x128xf32> to vector<64x128xf32>
    %403 = vector.shape_cast %397 : vector<64x128xf32> to vector<1x64x128xf32>
    tpu.vector_store %arg42[%c0_183, %c0_184, %c0_185], %403 {strides = array<i32>} : memref<1x64x128xf32, #tpu.memory_space<vmem>>, vector<1x64x128xf32>,
    return
  }
  func.func @transform_0(%arg0: i32) -> (i32, i32, i32) {
    %c0_i32 = arith.constant 0 : i32
    %c0_i32_0 = arith.constant 0 : i32
    %c0_i32_1 = arith.constant 0 : i32
    return %arg0, %c0_i32, %c0_i32_0 : i32, i32, i32
  }
  func.func @transform_1(%arg0: i32) -> (i32, i32, i32) {
    %c0_i32 = arith.constant 0 : i32
    %c0_i32_0 = arith.constant 0 : i32
    %c0_i32_1 = arith.constant 0 : i32
    return %arg0, %c0_i32, %c0_i32_0 : i32, i32, i32
  }
  func.func @transform_2(%arg0: i32) -> (i32, i32, i32) {
    %c0_i32 = arith.constant 0 : i32
    %c0_i32_0 = arith.constant 0 : i32
    %c0_i32_1 = arith.constant 0 : i32
    return %arg0, %c0_i32, %c0_i32_0 : i32, i32, i32
  }
  func.func @transform_3(%arg0: i32) -> (i32, i32, i32) {
    %c0_i32 = arith.constant 0 : i32
    %c0_i32_0 = arith.constant 0 : i32
    %c0_i32_1 = arith.constant 0 : i32
    return %arg0, %c0_i32, %c0_i32_0 : i32, i32, i32
  }
  func.func @transform_4(%arg0: i32) -> (i32, i32) {
    %c0_i32 = arith.constant 0 : i32
    %c0_i32_0 = arith.constant 0 : i32
    %c0_i32_1 = arith.constant 0 : i32
    return %c0_i32, %c0_i32_0 : i32, i32
  }
  func.func @transform_5(%arg0: i32) -> (i32, i32) {
    %c0_i32 = arith.constant 0 : i32
    %c0_i32_0 = arith.constant 0 : i32
    %c0_i32_1 = arith.constant 0 : i32
    return %c0_i32, %c0_i32_0 : i32, i32
  }
  func.func @transform_6(%arg0: i32) -> (i32, i32) {
    %c0_i32 = arith.constant 0 : i32
    %c0_i32_0 = arith.constant 0 : i32
    %c0_i32_1 = arith.constant 0 : i32
    return %c0_i32, %c0_i32_0 : i32, i32
  }
  func.func @transform_7(%arg0: i32) -> (i32, i32) {
    %c0_i32 = arith.constant 0 : i32
    %c0_i32_0 = arith.constant 0 : i32
    %c0_i32_1 = arith.constant 0 : i32
    return %c0_i32, %c0_i32_0 : i32, i32
  }
  func.func @transform_8(%arg0: i32) -> (i32, i32) {
    %c0_i32 = arith.constant 0 : i32
    %c0_i32_0 = arith.constant 0 : i32
    %c0_i32_1 = arith.constant 0 : i32
    return %c0_i32, %c0_i32_0 : i32, i32
  }
  func.func @transform_9(%arg0: i32) -> (i32, i32) {
    %c0_i32 = arith.constant 0 : i32
    %c0_i32_0 = arith.constant 0 : i32
    %c0_i32_1 = arith.constant 0 : i32
    return %c0_i32, %c0_i32_0 : i32, i32
  }
  func.func @transform_10(%arg0: i32) -> (i32, i32) {
    %c0_i32 = arith.constant 0 : i32
    %c0_i32_0 = arith.constant 0 : i32
    %c0_i32_1 = arith.constant 0 : i32
    return %c0_i32, %c0_i32_0 : i32, i32
  }
  func.func @transform_11(%arg0: i32) -> (i32, i32) {
    %c0_i32 = arith.constant 0 : i32
    %c0_i32_0 = arith.constant 0 : i32
    %c0_i32_1 = arith.constant 0 : i32
    return %c0_i32, %c0_i32_0 : i32, i32
  }
  func.func @transform_12(%arg0: i32) -> (i32, i32) {
    %c0_i32 = arith.constant 0 : i32
    %c0_i32_0 = arith.constant 0 : i32
    %c0_i32_1 = arith.constant 0 : i32
    return %c0_i32, %c0_i32_0 : i32, i32
  }
  func.func @transform_13(%arg0: i32) -> (i32, i32) {
    %c0_i32 = arith.constant 0 : i32
    %c0_i32_0 = arith.constant 0 : i32
    %c0_i32_1 = arith.constant 0 : i32
    return %c0_i32, %c0_i32_0 : i32, i32
  }
  func.func @transform_14(%arg0: i32) -> (i32, i32) {
    %c0_i32 = arith.constant 0 : i32
    %c0_i32_0 = arith.constant 0 : i32
    %c0_i32_1 = arith.constant 0 : i32
    return %c0_i32, %c0_i32_0 : i32, i32
  }
  func.func @transform_15(%arg0: i32) -> (i32, i32) {
    %c0_i32 = arith.constant 0 : i32
    %c0_i32_0 = arith.constant 0 : i32
    %c0_i32_1 = arith.constant 0 : i32
    return %c0_i32, %c0_i32_0 : i32, i32
  }
  func.func @transform_16(%arg0: i32) -> (i32, i32) {
    %c0_i32 = arith.constant 0 : i32
    %c0_i32_0 = arith.constant 0 : i32
    %c0_i32_1 = arith.constant 0 : i32
    return %c0_i32, %c0_i32_0 : i32, i32
  }
  func.func @transform_17(%arg0: i32) -> (i32, i32) {
    %c0_i32 = arith.constant 0 : i32
    %c0_i32_0 = arith.constant 0 : i32
    %c0_i32_1 = arith.constant 0 : i32
    return %c0_i32, %c0_i32_0 : i32, i32
  }
  func.func @transform_18(%arg0: i32) -> (i32, i32) {
    %c0_i32 = arith.constant 0 : i32
    %c0_i32_0 = arith.constant 0 : i32
    %c0_i32_1 = arith.constant 0 : i32
    return %c0_i32, %c0_i32_0 : i32, i32
  }
  func.func @transform_19(%arg0: i32) -> (i32, i32) {
    %c0_i32 = arith.constant 0 : i32
    %c0_i32_0 = arith.constant 0 : i32
    %c0_i32_1 = arith.constant 0 : i32
    return %c0_i32, %c0_i32_0 : i32, i32
  }
  func.func @transform_20(%arg0: i32) -> (i32, i32) {
    %c0_i32 = arith.constant 0 : i32
    %c0_i32_0 = arith.constant 0 : i32
    %c0_i32_1 = arith.constant 0 : i32
    return %c0_i32, %c0_i32_0 : i32, i32
  }
  func.func @transform_21(%arg0: i32) -> (i32, i32) {
    %c0_i32 = arith.constant 0 : i32
    %c0_i32_0 = arith.constant 0 : i32
    %c0_i32_1 = arith.constant 0 : i32
    return %c0_i32, %c0_i32_0 : i32, i32
  }
  func.func @transform_22(%arg0: i32) -> (i32, i32) {
    %c0_i32 = arith.constant 0 : i32
    %c0_i32_0 = arith.constant 0 : i32
    %c0_i32_1 = arith.constant 0 : i32
    return %c0_i32, %c0_i32_0 : i32, i32
  }
  func.func @transform_23(%arg0: i32) -> (i32, i32) {
    %c0_i32 = arith.constant 0 : i32
    %c0_i32_0 = arith.constant 0 : i32
    %c0_i32_1 = arith.constant 0 : i32
    return %c0_i32, %c0_i32_0 : i32, i32
  }
  func.func @transform_24(%arg0: i32) -> (i32, i32) {
    %c0_i32 = arith.constant 0 : i32
    %c0_i32_0 = arith.constant 0 : i32
    %c0_i32_1 = arith.constant 0 : i32
    return %c0_i32, %c0_i32_0 : i32, i32
  }
  func.func @transform_25(%arg0: i32) -> (i32, i32) {
    %c0_i32 = arith.constant 0 : i32
    %c0_i32_0 = arith.constant 0 : i32
    %c0_i32_1 = arith.constant 0 : i32
    return %c0_i32, %c0_i32_0 : i32, i32
  }
  func.func @transform_26(%arg0: i32) -> (i32, i32) {
    %c0_i32 = arith.constant 0 : i32
    %c0_i32_0 = arith.constant 0 : i32
    %c0_i32_1 = arith.constant 0 : i32
    return %c0_i32, %c0_i32_0 : i32, i32
  }
  func.func @transform_27(%arg0: i32) -> (i32, i32) {
    %c0_i32 = arith.constant 0 : i32
    %c0_i32_0 = arith.constant 0 : i32
    %c0_i32_1 = arith.constant 0 : i32
    return %c0_i32, %c0_i32_0 : i32, i32
  }
  func.func @transform_28(%arg0: i32) -> (i32, i32) {
    %c0_i32 = arith.constant 0 : i32
    %c0_i32_0 = arith.constant 0 : i32
    %c0_i32_1 = arith.constant 0 : i32
    return %c0_i32, %c0_i32_0 : i32, i32
  }
  func.func @transform_29(%arg0: i32) -> (i32, i32) {
    %c0_i32 = arith.constant 0 : i32
    %c0_i32_0 = arith.constant 0 : i32
    %c0_i32_1 = arith.constant 0 : i32
    return %c0_i32, %c0_i32_0 : i32, i32
  }
  func.func @transform_30(%arg0: i32) -> (i32, i32) {
    %c0_i32 = arith.constant 0 : i32
    %c0_i32_0 = arith.constant 0 : i32
    %c0_i32_1 = arith.constant 0 : i32
    return %c0_i32, %c0_i32_0 : i32, i32
  }
  func.func @transform_31(%arg0: i32) -> (i32, i32) {
    %c0_i32 = arith.constant 0 : i32
    %c0_i32_0 = arith.constant 0 : i32
    %c0_i32_1 = arith.constant 0 : i32
    return %c0_i32, %c0_i32_0 : i32, i32
  }
  func.func @transform_32(%arg0: i32) -> (i32, i32) {
    %c0_i32 = arith.constant 0 : i32
    %c0_i32_0 = arith.constant 0 : i32
    %c0_i32_1 = arith.constant 0 : i32
    return %c0_i32, %c0_i32_0 : i32, i32
  }
  func.func @transform_33(%arg0: i32) -> (i32, i32) {
    %c0_i32 = arith.constant 0 : i32
    %c0_i32_0 = arith.constant 0 : i32
    %c0_i32_1 = arith.constant 0 : i32
    return %c0_i32, %c0_i32_0 : i32, i32
  }
  func.func @transform_34(%arg0: i32) -> (i32, i32) {
    %c0_i32 = arith.constant 0 : i32
    %c0_i32_0 = arith.constant 0 : i32
    %c0_i32_1 = arith.constant 0 : i32
    return %c0_i32, %c0_i32_0 : i32, i32
  }
  func.func @transform_35(%arg0: i32) -> (i32, i32) {
    %c0_i32 = arith.constant 0 : i32
    %c0_i32_0 = arith.constant 0 : i32
    %c0_i32_1 = arith.constant 0 : i32
    return %c0_i32, %c0_i32_0 : i32, i32
  }
  func.func @transform_36(%arg0: i32) -> (i32, i32) {
    %c0_i32 = arith.constant 0 : i32
    %c0_i32_0 = arith.constant 0 : i32
    %c0_i32_1 = arith.constant 0 : i32
    return %c0_i32, %c0_i32_0 : i32, i32
  }
  func.func @transform_37(%arg0: i32) -> (i32, i32) {
    %c0_i32 = arith.constant 0 : i32
    %c0_i32_0 = arith.constant 0 : i32
    %c0_i32_1 = arith.constant 0 : i32
    return %c0_i32, %c0_i32_0 : i32, i32
  }
  func.func @transform_38(%arg0: i32) -> (i32, i32) {
    %c0_i32 = arith.constant 0 : i32
    %c0_i32_0 = arith.constant 0 : i32
    %c0_i32_1 = arith.constant 0 : i32
    return %c0_i32, %c0_i32_0 : i32, i32
  }
  func.func @transform_39(%arg0: i32) -> (i32, i32) {
    %c0_i32 = arith.constant 0 : i32
    %c0_i32_0 = arith.constant 0 : i32
    %c0_i32_1 = arith.constant 0 : i32
    return %c0_i32, %c0_i32_0 : i32, i32
  }
  func.func @transform_40(%arg0: i32) -> (i32, i32, i32) {
    %c0_i32 = arith.constant 0 : i32
    %c0_i32_0 = arith.constant 0 : i32
    %c0_i32_1 = arith.constant 0 : i32
    return %arg0, %c0_i32, %c0_i32_0 : i32, i32, i32
  }
  func.func @transform_41(%arg0: i32) -> (i32, i32, i32) {
    %c0_i32 = arith.constant 0 : i32
    %c0_i32_0 = arith.constant 0 : i32
    %c0_i32_1 = arith.constant 0 : i32
    return %arg0, %c0_i32, %c0_i32_0 : i32, i32, i32
  }
}

</mosaic_0001>

<llo_original>
// kernel: tpu_custom_call.1
$region0: #{tpu_custom_call.1}
  #allocation0 [shape = 'u32[]', space=smem, size = 0x4, offset = 0x4, fixed_abs, tag = 'smem constant byte address 0x4 - core index']
  #allocation1 [shape = 'u32[72,128]{1,0:T(1,128)}', space=vmem, size = 0x9000, scoped, tag = 'internal scratch']
  %s0 = inlined_call_operand.smem [shape: u32[42], index: -1, kind: input, shape index: {}]
  %s1 = sld [smem:[%s0]]
  %s2 = scalar_lea.smem %s0, 1
  %s3 = sld [smem:[%s2]]
  %s4 = scalar_lea.smem %s0, 2
  %s5 = sld [smem:[%s4]]
  %s6 = scalar_lea.smem %s0, 3
  %s7 = sld [smem:[%s6]]
  %s8 = scalar_lea.smem %s0, 4
  %s9 = sld [smem:[%s8]]
  %s10 = scalar_lea.smem %s0, 5
  %s11 = sld [smem:[%s10]]
  %s12 = scalar_lea.smem %s0, 6
  %s13 = sld [smem:[%s12]]
  %s14 = scalar_lea.smem %s0, 7
  %s15 = sld [smem:[%s14]]
  %s16 = scalar_lea.smem %s0, 8
  %s17 = sld [smem:[%s16]]
  %s18 = scalar_lea.smem %s0, 9
  %s19 = sld [smem:[%s18]]
  %s20 = scalar_lea.smem %s0, 10
  %s21 = sld [smem:[%s20]]
  %s22 = scalar_lea.smem %s0, 11
  %s23 = sld [smem:[%s22]]
  %s24 = scalar_lea.smem %s0, 12
  %s25 = sld [smem:[%s24]]
  %s26 = scalar_lea.smem %s0, 13
  %s27 = sld [smem:[%s26]]
  %s28 = scalar_lea.smem %s0, 14
  %s29 = sld [smem:[%s28]]
  %s30 = scalar_lea.smem %s0, 15
  %s31 = sld [smem:[%s30]]
  %s32 = scalar_lea.smem %s0, 16
  %s33 = sld [smem:[%s32]]
  %s34 = scalar_lea.smem %s0, 17
  %s35 = sld [smem:[%s34]]
  %s36 = scalar_lea.smem %s0, 18
  %s37 = sld [smem:[%s36]]
  %s38 = scalar_lea.smem %s0, 19
  %s39 = sld [smem:[%s38]]
  %s40 = scalar_lea.smem %s0, 20
  %s41 = sld [smem:[%s40]]
  %s42 = scalar_lea.smem %s0, 21
  %s43 = sld [smem:[%s42]]
  %s44 = scalar_lea.smem %s0, 22
  %s45 = sld [smem:[%s44]]
  %s46 = scalar_lea.smem %s0, 23
  %s47 = sld [smem:[%s46]]
  %s48 = scalar_lea.smem %s0, 24
  %s49 = sld [smem:[%s48]]
  %s50 = scalar_lea.smem %s0, 25
  %s51 = sld [smem:[%s50]]
  %s52 = scalar_lea.smem %s0, 26
  %s53 = sld [smem:[%s52]]
  %s54 = scalar_lea.smem %s0, 27
  %s55 = sld [smem:[%s54]]
  %s56 = scalar_lea.smem %s0, 28
  %s57 = sld [smem:[%s56]]
  %s58 = scalar_lea.smem %s0, 29
  %s59 = sld [smem:[%s58]]
  %s60 = scalar_lea.smem %s0, 30
  %s61 = sld [smem:[%s60]]
  %s62 = scalar_lea.smem %s0, 31
  %s63 = sld [smem:[%s62]]
  %s64 = scalar_lea.smem %s0, 32
  %s65 = sld [smem:[%s64]]
  %s66 = scalar_lea.smem %s0, 33
  %s67 = sld [smem:[%s66]]
  %s68 = scalar_lea.smem %s0, 34
  %s69 = sld [smem:[%s68]]
  %s70 = scalar_lea.smem %s0, 35
  %s71 = sld [smem:[%s70]]
  %s72 = scalar_lea.smem %s0, 36
  %s73 = sld [smem:[%s72]]
  %s74 = scalar_lea.smem %s0, 37
  %s75 = sld [smem:[%s74]]
  %s76 = scalar_lea.smem %s0, 38
  %s77 = sld [smem:[%s76]]
  %s78 = scalar_lea.smem %s0, 39
  %s79 = sld [smem:[%s78]]
  %s80 = scalar_lea.smem %s0, 40
  %s81 = sld [smem:[%s80]]
  %s82 = scalar_lea.smem %s0, 41
  %s83 = sld [smem:[%s82]]
  %84 = xla_tuple %s81, %s83
  %s85 = sld [smem:[#allocation0]]
  $region249: #{tpu_custom_call.1} parent=0
    _
  %s87 = ssub.s32 1, %s85
  %s88 = scalar_select 0, %s87, %s85
  $region1: #{tpu_custom_call.1} parent=0
    #allocation2 [shape = 'u8[8192]{0}', space=vmem, size = 0x2000, scoped, tag = 'input window, operand 0']
    #allocation3 [shape = 's32[2]{0}', space=sflag, size = 0x8, scoped, tag = 'scoped memory for tpu_custom_call.1']
    #allocation4 [shape = 's32[2]{0}', space=sflag, size = 0x8, scoped, tag = 'scoped memory for tpu_custom_call.1']
    #allocation5 [shape = 'u8[8192]{0}', space=vmem, size = 0x2000, scoped, tag = 'input window, operand 2']
    #allocation6 [shape = 's32[2]{0}', space=sflag, size = 0x8, scoped, tag = 'scoped memory for tpu_custom_call.1']
    #allocation7 [shape = 'u8[65536]{0}', space=vmem, size = 0x10000, scoped, tag = 'input window, operand 4, single buffered']
    #allocation8 [shape = 'u8[512]{0}', space=vmem, size = 0x400, scoped, tag = 'input window, operand 5, single buffered']
    #allocation9 [shape = 's32[1]{0}', space=sflag, size = 0x4, scoped, tag = 'scoped memory for tpu_custom_call.1']
    #allocation10 [shape = 'u8[65536]{0}', space=vmem, size = 0x10000, scoped, tag = 'input window, operand 6, single buffered']
    #allocation11 [shape = 'u8[512]{0}', space=vmem, size = 0x400, scoped, tag = 'input window, operand 7, single buffered']
    #allocation12 [shape = 's32[1]{0}', space=sflag, size = 0x4, scoped, tag = 'scoped memory for tpu_custom_call.1']
    #allocation13 [shape = 'u8[65536]{0}', space=vmem, size = 0x10000, scoped, tag = 'input window, operand 8, single buffered']
    #allocation14 [shape = 'u8[512]{0}', space=vmem, size = 0x400, scoped, tag = 'input window, operand 9, single buffered']
    #allocation15 [shape = 's32[1]{0}', space=sflag, size = 0x4, scoped, tag = 'scoped memory for tpu_custom_call.1']
    #allocation16 [shape = 'u8[65536]{0}', space=vmem, size = 0x10000, scoped, tag = 'input window, operand 10, single buffered']
    #allocation17 [shape = 'u8[512]{0}', space=vmem, size = 0x400, scoped, tag = 'input window, operand 11, single buffered']
    #allocation18 [shape = 's32[1]{0}', space=sflag, size = 0x4, scoped, tag = 'scoped memory for tpu_custom_call.1']
    #allocation19 [shape = 'u8[512]{0}', space=vmem, size = 0x400, scoped, tag = 'input window, operand 12, single buffered']
    #allocation20 [shape = 'u8[32768]{0}', space=vmem, size = 0x8000, scoped, tag = 'input window, operand 36, single buffered']
    #allocation21 [shape = 's32[1]{0}', space=sflag, size = 0x4, scoped, tag = 'scoped memory for tpu_custom_call.1']
    #allocation22 [shape = 'u8[8192]{0}', space=vmem, size = 0x2000, scoped, tag = 'output window, operand 0']
    #allocation23 [shape = 'u8[65536]{0}', space=vmem, size = 0x10000, scoped, tag = 'output window, operand 1']
    #allocation24 [shape = 's32[2]{0}', space=sflag, size = 0x8, scoped, tag = 'scoped memory for tpu_custom_call.1']
    %89 = vsyncpa [#allocation3], 0
    %s90 = scalar_lea.sflag [#allocation3], 1
    %91 = vsyncpa %s90, 0
    %92 = vsyncpa [#allocation6], 0
    %s93 = scalar_lea.sflag [#allocation6], 1
    %94 = vsyncpa %s93, 0
    %95 = vsyncpa [#allocation9], 0
    %96 = vsyncpa [#allocation12], 0
    %97 = vsyncpa [#allocation15], 0
    %98 = vsyncpa [#allocation18], 0
    %99 = vsyncpa [#allocation21], 0
    %100 = vsyncpa [#allocation4], 0
    %s101 = scalar_lea.sflag [#allocation4], 1
    %102 = vsyncpa %s101, 0
    %103 = vsyncpa [#allocation24], 0
    %s104 = scalar_lea.sflag [#allocation24], 1
    %105 = vsyncpa %s104, 0
    loop: start=0, step=1, limit=4
    $region2: #{tpu_custom_call.1} parent=1 // loop_pre_header
      _
    $region3: #{tpu_custom_call.1} parent=1 // loop_header
      %s107 = sphi 0, %s111
      %p108 = scmp.ge.s32.totalorder %s107, 4
      %s117 = sphi 0, %s119
      %s120 = sphi 0, %s117
      %s121 = sphi 0, %s120
      %s137 = sphi 0, %s121
      %s143 = sphi 0, %s145
      %s146 = sphi 0, %s143
      %s147 = sphi 0, %s146
      %s163 = sphi 0, %s147
      %s169 = sphi 0, %s171
      %s172 = sphi 0, %s169
      %s173 = sphi 0, %s172
      %s189 = sphi 0, %s173
      %s195 = sphi 0, %s197
      %s198 = sphi 0, %s195
      %s199 = sphi 0, %s198
      %s215 = sphi 0, %s199
      %s219 = sphi 0, %s219
      %s221 = sphi 0, %s219
      %s222 = sphi 0, %s221
      %s236 = sphi 0, %s222
      %s240 = sphi 0, %s240
      %s242 = sphi 0, %s240
      %s243 = sphi 0, %s242
      %s257 = sphi 0, %s243
      %s261 = sphi 0, %s261
      %s263 = sphi 0, %s261
      %s264 = sphi 0, %s263
      %s278 = sphi 0, %s264
      %s282 = sphi 0, %s282
      %s284 = sphi 0, %s282
      %s285 = sphi 0, %s284
      %s299 = sphi 0, %s285
      %s303 = sphi 0, %s303
      %s305 = sphi 0, %s303
      %s306 = sphi 0, %s305
      %s320 = sphi 0, %s306
      %s324 = sphi 0, %s324
      %s326 = sphi 0, %s324
      %s327 = sphi 0, %s326
      %s341 = sphi 0, %s327
      %s345 = sphi 0, %s345
      %s347 = sphi 0, %s345
      %s348 = sphi 0, %s347
      %s362 = sphi 0, %s348
      %s366 = sphi 0, %s366
      %s368 = sphi 0, %s366
      %s369 = sphi 0, %s368
      %s383 = sphi 0, %s369
      %s387 = sphi 0, %s387
      %s389 = sphi 0, %s387
      %s390 = sphi 0, %s389
      %s404 = sphi 0, %s390
      %s408 = sphi 0, %s408
      %s410 = sphi 0, %s408
      %s411 = sphi 0, %s410
      %s425 = sphi 0, %s411
      %s429 = sphi 0, %s429
      %s431 = sphi 0, %s429
      %s432 = sphi 0, %s431
      %s446 = sphi 0, %s432
      %s450 = sphi 0, %s450
      %s452 = sphi 0, %s450
      %s453 = sphi 0, %s452
      %s467 = sphi 0, %s453
      %s471 = sphi 0, %s471
      %s473 = sphi 0, %s471
      %s474 = sphi 0, %s473
      %s488 = sphi 0, %s474
      %s492 = sphi 0, %s492
      %s494 = sphi 0, %s492
      %s495 = sphi 0, %s494
      %s509 = sphi 0, %s495
      %s513 = sphi 0, %s513
      %s515 = sphi 0, %s513
      %s516 = sphi 0, %s515
      %s530 = sphi 0, %s516
      %s534 = sphi 0, %s534
      %s536 = sphi 0, %s534
      %s537 = sphi 0, %s536
      %s551 = sphi 0, %s537
      %s555 = sphi 0, %s555
      %s557 = sphi 0, %s555
      %s558 = sphi 0, %s557
      %s572 = sphi 0, %s558
      %s576 = sphi 0, %s576
      %s578 = sphi 0, %s576
      %s579 = sphi 0, %s578
      %s593 = sphi 0, %s579
      %s597 = sphi 0, %s597
      %s599 = sphi 0, %s597
      %s600 = sphi 0, %s599
      %s614 = sphi 0, %s600
      %s618 = sphi 0, %s618
      %s620 = sphi 0, %s618
      %s621 = sphi 0, %s620
      %s635 = sphi 0, %s621
      %s639 = sphi 0, %s639
      %s641 = sphi 0, %s639
      %s642 = sphi 0, %s641
      %s656 = sphi 0, %s642
      %s660 = sphi 0, %s660
      %s662 = sphi 0, %s660
      %s663 = sphi 0, %s662
      %s677 = sphi 0, %s663
      %s681 = sphi 0, %s681
      %s683 = sphi 0, %s681
      %s684 = sphi 0, %s683
      %s698 = sphi 0, %s684
      %s702 = sphi 0, %s702
      %s704 = sphi 0, %s702
      %s705 = sphi 0, %s704
      %s719 = sphi 0, %s705
      %s723 = sphi 0, %s723
      %s725 = sphi 0, %s723
      %s726 = sphi 0, %s725
      %s740 = sphi 0, %s726
      %s744 = sphi 0, %s744
      %s746 = sphi 0, %s744
      %s747 = sphi 0, %s746
      %s761 = sphi 0, %s747
      %s765 = sphi 0, %s765
      %s767 = sphi 0, %s765
      %s768 = sphi 0, %s767
      %s782 = sphi 0, %s768
      %s786 = sphi 0, %s786
      %s788 = sphi 0, %s786
      %s789 = sphi 0, %s788
      %s803 = sphi 0, %s789
      %s807 = sphi 0, %s807
      %s809 = sphi 0, %s807
      %s810 = sphi 0, %s809
      %s824 = sphi 0, %s810
      %s828 = sphi 0, %s828
      %s830 = sphi 0, %s828
      %s831 = sphi 0, %s830
      %s845 = sphi 0, %s831
      %s849 = sphi 0, %s849
      %s851 = sphi 0, %s849
      %s852 = sphi 0, %s851
      %s866 = sphi 0, %s852
      %s870 = sphi 0, %s870
      %s872 = sphi 0, %s870
      %s873 = sphi 0, %s872
      %s887 = sphi 0, %s873
      %s891 = sphi 0, %s891
      %s893 = sphi 0, %s891
      %s894 = sphi 0, %s893
      %s908 = sphi 0, %s894
      %s912 = sphi 0, %s912
      %s914 = sphi 0, %s912
      %s915 = sphi 0, %s914
      %s929 = sphi 0, %s915
      %s933 = sphi 0, %s933
      %s935 = sphi 0, %s933
      %s936 = sphi 0, %s935
      %s950 = sphi 0, %s936
      %s954 = sphi 0, %s954
      %s956 = sphi 0, %s954
      %s957 = sphi 0, %s956
      %s971 = sphi 0, %s957
      %s977 = sphi 0, %s979
      %s980 = sphi 0, %s977
      %s981 = sphi 0, %s980
      %s997 = sphi 0, %s981
      %s1003 = sphi 0, %s1005
      %s1006 = sphi 0, %s1003
      %s1007 = sphi 0, %s1006
      %s1023 = sphi 0, %s1007
    $region4: #{tpu_custom_call.1} parent=1 // loop_header_branch
      %110 = sbr.rel (%p108) target = $region8
    $region5: #{tpu_custom_call.1} parent=1 // loop_body
      %s112 = ssub.s32 %s107, 1
      %s113 = ssub.s32 %s107, 2
      %s114 = sadd.s32 %s107, 1
      %s115 = ssub.s32 %s107, %s114
      %p116 = scmp.eq.s32.totalorder %s115, 0
      %s118 = sadd.s32 %s117, 1
      %s119 = scalar_select %p116, %s117, %s118
      %p122 = pneg %p116
      %p123 = scmp.eq.s32.totalorder %s107, 1
      %p124 = por %p122, %p123
      %p125 = scmp.ne.s32.totalorder %s117, %s120
      %p126 = scmp.eq.s32.totalorder %s107, 0
      %p127 = por %p125, %p126
      %p128 = scmp.ne.s32.totalorder %s117, %s120
      %p129 = scmp.eq.s32.totalorder %s112, 1
      %p130 = por %p128, %p129
      %p131 = scmp.ne.s32.totalorder %s120, %s121
      %p132 = scmp.eq.s32.totalorder %s112, 0
      %p133 = por %p131, %p132
      %p134 = scmp.ne.s32.totalorder %s120, %s121
      %p135 = scmp.eq.s32.totalorder %s113, 1
      %p136 = por %p134, %p135
      %p138 = scmp.ne.s32.totalorder %s121, %s137
      %p139 = scmp.eq.s32.totalorder %s113, 0
      %p140 = por %p138, %p139
      %s141 = ssub.s32 %s107, %s114
      %p142 = scmp.eq.s32.totalorder %s141, 0
      %s144 = sadd.s32 %s143, 1
      %s145 = scalar_select %p142, %s143, %s144
      %p148 = pneg %p142
      %p149 = scmp.eq.s32.totalorder %s107, 1
      %p150 = por %p148, %p149
      %p151 = scmp.ne.s32.totalorder %s143, %s146
      %p152 = scmp.eq.s32.totalorder %s107, 0
      %p153 = por %p151, %p152
      %p154 = scmp.ne.s32.totalorder %s143, %s146
      %p155 = scmp.eq.s32.totalorder %s112, 1
      %p156 = por %p154, %p155
      %p157 = scmp.ne.s32.totalorder %s146, %s147
      %p158 = scmp.eq.s32.totalorder %s112, 0
      %p159 = por %p157, %p158
      %p160 = scmp.ne.s32.totalorder %s146, %s147
      %p161 = scmp.eq.s32.totalorder %s113, 1
      %p162 = por %p160, %p161
      %p164 = scmp.ne.s32.totalorder %s147, %s163
      %p165 = scmp.eq.s32.totalorder %s113, 0
      %p166 = por %p164, %p165
      %s167 = ssub.s32 %s107, %s114
      %p168 = scmp.eq.s32.totalorder %s167, 0
      %s170 = sadd.s32 %s169, 1
      %s171 = scalar_select %p168, %s169, %s170
      %p174 = pneg %p168
      %p175 = scmp.eq.s32.totalorder %s107, 1
      %p176 = por %p174, %p175
      %p177 = scmp.ne.s32.totalorder %s169, %s172
      %p178 = scmp.eq.s32.totalorder %s107, 0
      %p179 = por %p177, %p178
      %p180 = scmp.ne.s32.totalorder %s169, %s172
      %p181 = scmp.eq.s32.totalorder %s112, 1
      %p182 = por %p180, %p181
      %p183 = scmp.ne.s32.totalorder %s172, %s173
      %p184 = scmp.eq.s32.totalorder %s112, 0
      %p185 = por %p183, %p184
      %p186 = scmp.ne.s32.totalorder %s172, %s173
      %p187 = scmp.eq.s32.totalorder %s113, 1
      %p188 = por %p186, %p187
      %p190 = scmp.ne.s32.totalorder %s173, %s189
      %p191 = scmp.eq.s32.totalorder %s113, 0
      %p192 = por %p190, %p191
      %s193 = ssub.s32 %s107, %s114
      %p194 = scmp.eq.s32.totalorder %s193, 0
      %s196 = sadd.s32 %s195, 1
      %s197 = scalar_select %p194, %s195, %s196
      %p200 = pneg %p194
      %p201 = scmp.eq.s32.totalorder %s107, 1
      %p202 = por %p200, %p201
      %p203 = scmp.ne.s32.totalorder %s195, %s198
      %p204 = scmp.eq.s32.totalorder %s107, 0
      %p205 = por %p203, %p204
      %p206 = scmp.ne.s32.totalorder %s195, %s198
      %p207 = scmp.eq.s32.totalorder %s112, 1
      %p208 = por %p206, %p207
      %p209 = scmp.ne.s32.totalorder %s198, %s199
      %p210 = scmp.eq.s32.totalorder %s112, 0
      %p211 = por %p209, %p210
      %p212 = scmp.ne.s32.totalorder %s198, %s199
      %p213 = scmp.eq.s32.totalorder %s113, 1
      %p214 = por %p212, %p213
      %p216 = scmp.ne.s32.totalorder %s199, %s215
      %p217 = scmp.eq.s32.totalorder %s113, 0
      %p218 = por %p216, %p217
      %s220 = sadd.s32 %s219, 1
      %p223 = scmp.eq.s32.totalorder %s107, 1
      %p224 = scmp.ne.s32.totalorder %s219, %s221
      %p225 = scmp.eq.s32.totalorder %s107, 0
      %p226 = por %p224, %p225
      %p227 = scmp.ne.s32.totalorder %s219, %s221
      %p228 = scmp.eq.s32.totalorder %s112, 1
      %p229 = por %p227, %p228
      %p230 = scmp.ne.s32.totalorder %s221, %s222
      %p231 = scmp.eq.s32.totalorder %s112, 0
      %p232 = por %p230, %p231
      %p233 = scmp.ne.s32.totalorder %s221, %s222
      %p234 = scmp.eq.s32.totalorder %s113, 1
      %p235 = por %p233, %p234
      %p237 = scmp.ne.s32.totalorder %s222, %s236
      %p238 = scmp.eq.s32.totalorder %s113, 0
      %p239 = por %p237, %p238
      %s241 = sadd.s32 %s240, 1
      %p244 = scmp.eq.s32.totalorder %s107, 1
      %p245 = scmp.ne.s32.totalorder %s240, %s242
      %p246 = scmp.eq.s32.totalorder %s107, 0
      %p247 = por %p245, %p246
      %p248 = scmp.ne.s32.totalorder %s240, %s242
      %p249 = scmp.eq.s32.totalorder %s112, 1
      %p250 = por %p248, %p249
      %p251 = scmp.ne.s32.totalorder %s242, %s243
      %p252 = scmp.eq.s32.totalorder %s112, 0
      %p253 = por %p251, %p252
      %p254 = scmp.ne.s32.totalorder %s242, %s243
      %p255 = scmp.eq.s32.totalorder %s113, 1
      %p256 = por %p254, %p255
      %p258 = scmp.ne.s32.totalorder %s243, %s257
      %p259 = scmp.eq.s32.totalorder %s113, 0
      %p260 = por %p258, %p259
      %s262 = sadd.s32 %s261, 1
      %p265 = scmp.eq.s32.totalorder %s107, 1
      %p266 = scmp.ne.s32.totalorder %s261, %s263
      %p267 = scmp.eq.s32.totalorder %s107, 0
      %p268 = por %p266, %p267
      %p269 = scmp.ne.s32.totalorder %s261, %s263
      %p270 = scmp.eq.s32.totalorder %s112, 1
      %p271 = por %p269, %p270
      %p272 = scmp.ne.s32.totalorder %s263, %s264
      %p273 = scmp.eq.s32.totalorder %s112, 0
      %p274 = por %p272, %p273
      %p275 = scmp.ne.s32.totalorder %s263, %s264
      %p276 = scmp.eq.s32.totalorder %s113, 1
      %p277 = por %p275, %p276
      %p279 = scmp.ne.s32.totalorder %s264, %s278
      %p280 = scmp.eq.s32.totalorder %s113, 0
      %p281 = por %p279, %p280
      %s283 = sadd.s32 %s282, 1
      %p286 = scmp.eq.s32.totalorder %s107, 1
      %p287 = scmp.ne.s32.totalorder %s282, %s284
      %p288 = scmp.eq.s32.totalorder %s107, 0
      %p289 = por %p287, %p288
      %p290 = scmp.ne.s32.totalorder %s282, %s284
      %p291 = scmp.eq.s32.totalorder %s112, 1
      %p292 = por %p290, %p291
      %p293 = scmp.ne.s32.totalorder %s284, %s285
      %p294 = scmp.eq.s32.totalorder %s112, 0
      %p295 = por %p293, %p294
      %p296 = scmp.ne.s32.totalorder %s284, %s285
      %p297 = scmp.eq.s32.totalorder %s113, 1
      %p298 = por %p296, %p297
      %p300 = scmp.ne.s32.totalorder %s285, %s299
      %p301 = scmp.eq.s32.totalorder %s113, 0
      %p302 = por %p300, %p301
      %s304 = sadd.s32 %s303, 1
      %p307 = scmp.eq.s32.totalorder %s107, 1
      %p308 = scmp.ne.s32.totalorder %s303, %s305
      %p309 = scmp.eq.s32.totalorder %s107, 0
      %p310 = por %p308, %p309
      %p311 = scmp.ne.s32.totalorder %s303, %s305
      %p312 = scmp.eq.s32.totalorder %s112, 1
      %p313 = por %p311, %p312
      %p314 = scmp.ne.s32.totalorder %s305, %s306
      %p315 = scmp.eq.s32.totalorder %s112, 0
      %p316 = por %p314, %p315
      %p317 = scmp.ne.s32.totalorder %s305, %s306
      %p318 = scmp.eq.s32.totalorder %s113, 1
      %p319 = por %p317, %p318
      %p321 = scmp.ne.s32.totalorder %s306, %s320
      %p322 = scmp.eq.s32.totalorder %s113, 0
      %p323 = por %p321, %p322
      %s325 = sadd.s32 %s324, 1
      %p328 = scmp.eq.s32.totalorder %s107, 1
      %p329 = scmp.ne.s32.totalorder %s324, %s326
      %p330 = scmp.eq.s32.totalorder %s107, 0
      %p331 = por %p329, %p330
      %p332 = scmp.ne.s32.totalorder %s324, %s326
      %p333 = scmp.eq.s32.totalorder %s112, 1
      %p334 = por %p332, %p333
      %p335 = scmp.ne.s32.totalorder %s326, %s327
      %p336 = scmp.eq.s32.totalorder %s112, 0
      %p337 = por %p335, %p336
      %p338 = scmp.ne.s32.totalorder %s326, %s327
      %p339 = scmp.eq.s32.totalorder %s113, 1
      %p340 = por %p338, %p339
      %p342 = scmp.ne.s32.totalorder %s327, %s341
      %p343 = scmp.eq.s32.totalorder %s113, 0
      %p344 = por %p342, %p343
      %s346 = sadd.s32 %s345, 1
      %p349 = scmp.eq.s32.totalorder %s107, 1
      %p350 = scmp.ne.s32.totalorder %s345, %s347
      %p351 = scmp.eq.s32.totalorder %s107, 0
      %p352 = por %p350, %p351
      %p353 = scmp.ne.s32.totalorder %s345, %s347
      %p354 = scmp.eq.s32.totalorder %s112, 1
      %p355 = por %p353, %p354
      %p356 = scmp.ne.s32.totalorder %s347, %s348
      %p357 = scmp.eq.s32.totalorder %s112, 0
      %p358 = por %p356, %p357
      %p359 = scmp.ne.s32.totalorder %s347, %s348
      %p360 = scmp.eq.s32.totalorder %s113, 1
      %p361 = por %p359, %p360
      %p363 = scmp.ne.s32.totalorder %s348, %s362
      %p364 = scmp.eq.s32.totalorder %s113, 0
      %p365 = por %p363, %p364
      %s367 = sadd.s32 %s366, 1
      %p370 = scmp.eq.s32.totalorder %s107, 1
      %p371 = scmp.ne.s32.totalorder %s366, %s368
      %p372 = scmp.eq.s32.totalorder %s107, 0
      %p373 = por %p371, %p372
      %p374 = scmp.ne.s32.totalorder %s366, %s368
      %p375 = scmp.eq.s32.totalorder %s112, 1
      %p376 = por %p374, %p375
      %p377 = scmp.ne.s32.totalorder %s368, %s369
      %p378 = scmp.eq.s32.totalorder %s112, 0
      %p379 = por %p377, %p378
      %p380 = scmp.ne.s32.totalorder %s368, %s369
      %p381 = scmp.eq.s32.totalorder %s113, 1
      %p382 = por %p380, %p381
      %p384 = scmp.ne.s32.totalorder %s369, %s383
      %p385 = scmp.eq.s32.totalorder %s113, 0
      %p386 = por %p384, %p385
      %s388 = sadd.s32 %s387, 1
      %p391 = scmp.eq.s32.totalorder %s107, 1
      %p392 = scmp.ne.s32.totalorder %s387, %s389
      %p393 = scmp.eq.s32.totalorder %s107, 0
      %p394 = por %p392, %p393
      %p395 = scmp.ne.s32.totalorder %s387, %s389
      %p396 = scmp.eq.s32.totalorder %s112, 1
      %p397 = por %p395, %p396
      %p398 = scmp.ne.s32.totalorder %s389, %s390
      %p399 = scmp.eq.s32.totalorder %s112, 0
      %p400 = por %p398, %p399
      %p401 = scmp.ne.s32.totalorder %s389, %s390
      %p402 = scmp.eq.s32.totalorder %s113, 1
      %p403 = por %p401, %p402
      %p405 = scmp.ne.s32.totalorder %s390, %s404
      %p406 = scmp.eq.s32.totalorder %s113, 0
      %p407 = por %p405, %p406
      %s409 = sadd.s32 %s408, 1
      %p412 = scmp.eq.s32.totalorder %s107, 1
      %p413 = scmp.ne.s32.totalorder %s408, %s410
      %p414 = scmp.eq.s32.totalorder %s107, 0
      %p415 = por %p413, %p414
      %p416 = scmp.ne.s32.totalorder %s408, %s410
      %p417 = scmp.eq.s32.totalorder %s112, 1
      %p418 = por %p416, %p417
      %p419 = scmp.ne.s32.totalorder %s410, %s411
      %p420 = scmp.eq.s32.totalorder %s112, 0
      %p421 = por %p419, %p420
      %p422 = scmp.ne.s32.totalorder %s410, %s411
      %p423 = scmp.eq.s32.totalorder %s113, 1
      %p424 = por %p422, %p423
      %p426 = scmp.ne.s32.totalorder %s411, %s425
      %p427 = scmp.eq.s32.totalorder %s113, 0
      %p428 = por %p426, %p427
      %s430 = sadd.s32 %s429, 1
      %p433 = scmp.eq.s32.totalorder %s107, 1
      %p434 = scmp.ne.s32.totalorder %s429, %s431
      %p435 = scmp.eq.s32.totalorder %s107, 0
      %p436 = por %p434, %p435
      %p437 = scmp.ne.s32.totalorder %s429, %s431
      %p438 = scmp.eq.s32.totalorder %s112, 1
      %p439 = por %p437, %p438
      %p440 = scmp.ne.s32.totalorder %s431, %s432
      %p441 = scmp.eq.s32.totalorder %s112, 0
      %p442 = por %p440, %p441
      %p443 = scmp.ne.s32.totalorder %s431, %s432
      %p444 = scmp.eq.s32.totalorder %s113, 1
      %p445 = por %p443, %p444
      %p447 = scmp.ne.s32.totalorder %s432, %s446
      %p448 = scmp.eq.s32.totalorder %s113, 0
      %p449 = por %p447, %p448
      %s451 = sadd.s32 %s450, 1
      %p454 = scmp.eq.s32.totalorder %s107, 1
      %p455 = scmp.ne.s32.totalorder %s450, %s452
      %p456 = scmp.eq.s32.totalorder %s107, 0
      %p457 = por %p455, %p456
      %p458 = scmp.ne.s32.totalorder %s450, %s452
      %p459 = scmp.eq.s32.totalorder %s112, 1
      %p460 = por %p458, %p459
      %p461 = scmp.ne.s32.totalorder %s452, %s453
      %p462 = scmp.eq.s32.totalorder %s112, 0
      %p463 = por %p461, %p462
      %p464 = scmp.ne.s32.totalorder %s452, %s453
      %p465 = scmp.eq.s32.totalorder %s113, 1
      %p466 = por %p464, %p465
      %p468 = scmp.ne.s32.totalorder %s453, %s467
      %p469 = scmp.eq.s32.totalorder %s113, 0
      %p470 = por %p468, %p469
      %s472 = sadd.s32 %s471, 1
      %p475 = scmp.eq.s32.totalorder %s107, 1
      %p476 = scmp.ne.s32.totalorder %s471, %s473
      %p477 = scmp.eq.s32.totalorder %s107, 0
      %p478 = por %p476, %p477
      %p479 = scmp.ne.s32.totalorder %s471, %s473
      %p480 = scmp.eq.s32.totalorder %s112, 1
      %p481 = por %p479, %p480
      %p482 = scmp.ne.s32.totalorder %s473, %s474
      %p483 = scmp.eq.s32.totalorder %s112, 0
      %p484 = por %p482, %p483
      %p485 = scmp.ne.s32.totalorder %s473, %s474
      %p486 = scmp.eq.s32.totalorder %s113, 1
      %p487 = por %p485, %p486
      %p489 = scmp.ne.s32.totalorder %s474, %s488
      %p490 = scmp.eq.s32.totalorder %s113, 0
      %p491 = por %p489, %p490
      %s493 = sadd.s32 %s492, 1
      %p496 = scmp.eq.s32.totalorder %s107, 1
      %p497 = scmp.ne.s32.totalorder %s492, %s494
      %p498 = scmp.eq.s32.totalorder %s107, 0
      %p499 = por %p497, %p498
      %p500 = scmp.ne.s32.totalorder %s492, %s494
      %p501 = scmp.eq.s32.totalorder %s112, 1
      %p502 = por %p500, %p501
      %p503 = scmp.ne.s32.totalorder %s494, %s495
      %p504 = scmp.eq.s32.totalorder %s112, 0
      %p505 = por %p503, %p504
      %p506 = scmp.ne.s32.totalorder %s494, %s495
      %p507 = scmp.eq.s32.totalorder %s113, 1
      %p508 = por %p506, %p507
      %p510 = scmp.ne.s32.totalorder %s495, %s509
      %p511 = scmp.eq.s32.totalorder %s113, 0
      %p512 = por %p510, %p511
      %s514 = sadd.s32 %s513, 1
      %p517 = scmp.eq.s32.totalorder %s107, 1
      %p518 = scmp.ne.s32.totalorder %s513, %s515
      %p519 = scmp.eq.s32.totalorder %s107, 0
      %p520 = por %p518, %p519
      %p521 = scmp.ne.s32.totalorder %s513, %s515
      %p522 = scmp.eq.s32.totalorder %s112, 1
      %p523 = por %p521, %p522
      %p524 = scmp.ne.s32.totalorder %s515, %s516
      %p525 = scmp.eq.s32.totalorder %s112, 0
      %p526 = por %p524, %p525
      %p527 = scmp.ne.s32.totalorder %s515, %s516
      %p528 = scmp.eq.s32.totalorder %s113, 1
      %p529 = por %p527, %p528
      %p531 = scmp.ne.s32.totalorder %s516, %s530
      %p532 = scmp.eq.s32.totalorder %s113, 0
      %p533 = por %p531, %p532
      %s535 = sadd.s32 %s534, 1
      %p538 = scmp.eq.s32.totalorder %s107, 1
      %p539 = scmp.ne.s32.totalorder %s534, %s536
      %p540 = scmp.eq.s32.totalorder %s107, 0
      %p541 = por %p539, %p540
      %p542 = scmp.ne.s32.totalorder %s534, %s536
      %p543 = scmp.eq.s32.totalorder %s112, 1
      %p544 = por %p542, %p543
      %p545 = scmp.ne.s32.totalorder %s536, %s537
      %p546 = scmp.eq.s32.totalorder %s112, 0
      %p547 = por %p545, %p546
      %p548 = scmp.ne.s32.totalorder %s536, %s537
      %p549 = scmp.eq.s32.totalorder %s113, 1
      %p550 = por %p548, %p549
      %p552 = scmp.ne.s32.totalorder %s537, %s551
      %p553 = scmp.eq.s32.totalorder %s113, 0
      %p554 = por %p552, %p553
      %s556 = sadd.s32 %s555, 1
      %p559 = scmp.eq.s32.totalorder %s107, 1
      %p560 = scmp.ne.s32.totalorder %s555, %s557
      %p561 = scmp.eq.s32.totalorder %s107, 0
      %p562 = por %p560, %p561
      %p563 = scmp.ne.s32.totalorder %s555, %s557
      %p564 = scmp.eq.s32.totalorder %s112, 1
      %p565 = por %p563, %p564
      %p566 = scmp.ne.s32.totalorder %s557, %s558
      %p567 = scmp.eq.s32.totalorder %s112, 0
      %p568 = por %p566, %p567
      %p569 = scmp.ne.s32.totalorder %s557, %s558
      %p570 = scmp.eq.s32.totalorder %s113, 1
      %p571 = por %p569, %p570
      %p573 = scmp.ne.s32.totalorder %s558, %s572
      %p574 = scmp.eq.s32.totalorder %s113, 0
      %p575 = por %p573, %p574
      %s577 = sadd.s32 %s576, 1
      %p580 = scmp.eq.s32.totalorder %s107, 1
      %p581 = scmp.ne.s32.totalorder %s576, %s578
      %p582 = scmp.eq.s32.totalorder %s107, 0
      %p583 = por %p581, %p582
      %p584 = scmp.ne.s32.totalorder %s576, %s578
      %p585 = scmp.eq.s32.totalorder %s112, 1
      %p586 = por %p584, %p585
      %p587 = scmp.ne.s32.totalorder %s578, %s579
      %p588 = scmp.eq.s32.totalorder %s112, 0
      %p589 = por %p587, %p588
      %p590 = scmp.ne.s32.totalorder %s578, %s579
      %p591 = scmp.eq.s32.totalorder %s113, 1
      %p592 = por %p590, %p591
      %p594 = scmp.ne.s32.totalorder %s579, %s593
      %p595 = scmp.eq.s32.totalorder %s113, 0
      %p596 = por %p594, %p595
      %s598 = sadd.s32 %s597, 1
      %p601 = scmp.eq.s32.totalorder %s107, 1
      %p602 = scmp.ne.s32.totalorder %s597, %s599
      %p603 = scmp.eq.s32.totalorder %s107, 0
      %p604 = por %p602, %p603
      %p605 = scmp.ne.s32.totalorder %s597, %s599
      %p606 = scmp.eq.s32.totalorder %s112, 1
      %p607 = por %p605, %p606
      %p608 = scmp.ne.s32.totalorder %s599, %s600
      %p609 = scmp.eq.s32.totalorder %s112, 0
      %p610 = por %p608, %p609
      %p611 = scmp.ne.s32.totalorder %s599, %s600
      %p612 = scmp.eq.s32.totalorder %s113, 1
      %p613 = por %p611, %p612
      %p615 = scmp.ne.s32.totalorder %s600, %s614
      %p616 = scmp.eq.s32.totalorder %s113, 0
      %p617 = por %p615, %p616
      %s619 = sadd.s32 %s618, 1
      %p622 = scmp.eq.s32.totalorder %s107, 1
      %p623 = scmp.ne.s32.totalorder %s618, %s620
      %p624 = scmp.eq.s32.totalorder %s107, 0
      %p625 = por %p623, %p624
      %p626 = scmp.ne.s32.totalorder %s618, %s620
      %p627 = scmp.eq.s32.totalorder %s112, 1
      %p628 = por %p626, %p627
      %p629 = scmp.ne.s32.totalorder %s620, %s621
      %p630 = scmp.eq.s32.totalorder %s112, 0
      %p631 = por %p629, %p630
      %p632 = scmp.ne.s32.totalorder %s620, %s621
      %p633 = scmp.eq.s32.totalorder %s113, 1
      %p634 = por %p632, %p633
      %p636 = scmp.ne.s32.totalorder %s621, %s635
      %p637 = scmp.eq.s32.totalorder %s113, 0
      %p638 = por %p636, %p637
      %s640 = sadd.s32 %s639, 1
      %p643 = scmp.eq.s32.totalorder %s107, 1
      %p644 = scmp.ne.s32.totalorder %s639, %s641
      %p645 = scmp.eq.s32.totalorder %s107, 0
      %p646 = por %p644, %p645
      %p647 = scmp.ne.s32.totalorder %s639, %s641
      %p648 = scmp.eq.s32.totalorder %s112, 1
      %p649 = por %p647, %p648
      %p650 = scmp.ne.s32.totalorder %s641, %s642
      %p651 = scmp.eq.s32.totalorder %s112, 0
      %p652 = por %p650, %p651
      %p653 = scmp.ne.s32.totalorder %s641, %s642
      %p654 = scmp.eq.s32.totalorder %s113, 1
      %p655 = por %p653, %p654
      %p657 = scmp.ne.s32.totalorder %s642, %s656
      %p658 = scmp.eq.s32.totalorder %s113, 0
      %p659 = por %p657, %p658
      %s661 = sadd.s32 %s660, 1
      %p664 = scmp.eq.s32.totalorder %s107, 1
      %p665 = scmp.ne.s32.totalorder %s660, %s662
      %p666 = scmp.eq.s32.totalorder %s107, 0
      %p667 = por %p665, %p666
      %p668 = scmp.ne.s32.totalorder %s660, %s662
      %p669 = scmp.eq.s32.totalorder %s112, 1
      %p670 = por %p668, %p669
      %p671 = scmp.ne.s32.totalorder %s662, %s663
      %p672 = scmp.eq.s32.totalorder %s112, 0
      %p673 = por %p671, %p672
      %p674 = scmp.ne.s32.totalorder %s662, %s663
      %p675 = scmp.eq.s32.totalorder %s113, 1
      %p676 = por %p674, %p675
      %p678 = scmp.ne.s32.totalorder %s663, %s677
      %p679 = scmp.eq.s32.totalorder %s113, 0
      %p680 = por %p678, %p679
      %s682 = sadd.s32 %s681, 1
      %p685 = scmp.eq.s32.totalorder %s107, 1
      %p686 = scmp.ne.s32.totalorder %s681, %s683
      %p687 = scmp.eq.s32.totalorder %s107, 0
      %p688 = por %p686, %p687
      %p689 = scmp.ne.s32.totalorder %s681, %s683
      %p690 = scmp.eq.s32.totalorder %s112, 1
      %p691 = por %p689, %p690
      %p692 = scmp.ne.s32.totalorder %s683, %s684
      %p693 = scmp.eq.s32.totalorder %s112, 0
      %p694 = por %p692, %p693
      %p695 = scmp.ne.s32.totalorder %s683, %s684
      %p696 = scmp.eq.s32.totalorder %s113, 1
      %p697 = por %p695, %p696
      %p699 = scmp.ne.s32.totalorder %s684, %s698
      %p700 = scmp.eq.s32.totalorder %s113, 0
      %p701 = por %p699, %p700
      %s703 = sadd.s32 %s702, 1
      %p706 = scmp.eq.s32.totalorder %s107, 1
      %p707 = scmp.ne.s32.totalorder %s702, %s704
      %p708 = scmp.eq.s32.totalorder %s107, 0
      %p709 = por %p707, %p708
      %p710 = scmp.ne.s32.totalorder %s702, %s704
      %p711 = scmp.eq.s32.totalorder %s112, 1
      %p712 = por %p710, %p711
      %p713 = scmp.ne.s32.totalorder %s704, %s705
      %p714 = scmp.eq.s32.totalorder %s112, 0
      %p715 = por %p713, %p714
      %p716 = scmp.ne.s32.totalorder %s704, %s705
      %p717 = scmp.eq.s32.totalorder %s113, 1
      %p718 = por %p716, %p717
      %p720 = scmp.ne.s32.totalorder %s705, %s719
      %p721 = scmp.eq.s32.totalorder %s113, 0
      %p722 = por %p720, %p721
      %s724 = sadd.s32 %s723, 1
      %p727 = scmp.eq.s32.totalorder %s107, 1
      %p728 = scmp.ne.s32.totalorder %s723, %s725
      %p729 = scmp.eq.s32.totalorder %s107, 0
      %p730 = por %p728, %p729
      %p731 = scmp.ne.s32.totalorder %s723, %s725
      %p732 = scmp.eq.s32.totalorder %s112, 1
      %p733 = por %p731, %p732
      %p734 = scmp.ne.s32.totalorder %s725, %s726
      %p735 = scmp.eq.s32.totalorder %s112, 0
      %p736 = por %p734, %p735
      %p737 = scmp.ne.s32.totalorder %s725, %s726
      %p738 = scmp.eq.s32.totalorder %s113, 1
      %p739 = por %p737, %p738
      %p741 = scmp.ne.s32.totalorder %s726, %s740
      %p742 = scmp.eq.s32.totalorder %s113, 0
      %p743 = por %p741, %p742
      %s745 = sadd.s32 %s744, 1
      %p748 = scmp.eq.s32.totalorder %s107, 1
      %p749 = scmp.ne.s32.totalorder %s744, %s746
      %p750 = scmp.eq.s32.totalorder %s107, 0
      %p751 = por %p749, %p750
      %p752 = scmp.ne.s32.totalorder %s744, %s746
      %p753 = scmp.eq.s32.totalorder %s112, 1
      %p754 = por %p752, %p753
      %p755 = scmp.ne.s32.totalorder %s746, %s747
      %p756 = scmp.eq.s32.totalorder %s112, 0
      %p757 = por %p755, %p756
      %p758 = scmp.ne.s32.totalorder %s746, %s747
      %p759 = scmp.eq.s32.totalorder %s113, 1
      %p760 = por %p758, %p759
      %p762 = scmp.ne.s32.totalorder %s747, %s761
      %p763 = scmp.eq.s32.totalorder %s113, 0
      %p764 = por %p762, %p763
      %s766 = sadd.s32 %s765, 1
      %p769 = scmp.eq.s32.totalorder %s107, 1
      %p770 = scmp.ne.s32.totalorder %s765, %s767
      %p771 = scmp.eq.s32.totalorder %s107, 0
      %p772 = por %p770, %p771
      %p773 = scmp.ne.s32.totalorder %s765, %s767
      %p774 = scmp.eq.s32.totalorder %s112, 1
      %p775 = por %p773, %p774
      %p776 = scmp.ne.s32.totalorder %s767, %s768
      %p777 = scmp.eq.s32.totalorder %s112, 0
      %p778 = por %p776, %p777
      %p779 = scmp.ne.s32.totalorder %s767, %s768
      %p780 = scmp.eq.s32.totalorder %s113, 1
      %p781 = por %p779, %p780
      %p783 = scmp.ne.s32.totalorder %s768, %s782
      %p784 = scmp.eq.s32.totalorder %s113, 0
      %p785 = por %p783, %p784
      %s787 = sadd.s32 %s786, 1
      %p790 = scmp.eq.s32.totalorder %s107, 1
      %p791 = scmp.ne.s32.totalorder %s786, %s788
      %p792 = scmp.eq.s32.totalorder %s107, 0
      %p793 = por %p791, %p792
      %p794 = scmp.ne.s32.totalorder %s786, %s788
      %p795 = scmp.eq.s32.totalorder %s112, 1
      %p796 = por %p794, %p795
      %p797 = scmp.ne.s32.totalorder %s788, %s789
      %p798 = scmp.eq.s32.totalorder %s112, 0
      %p799 = por %p797, %p798
      %p800 = scmp.ne.s32.totalorder %s788, %s789
      %p801 = scmp.eq.s32.totalorder %s113, 1
      %p802 = por %p800, %p801
      %p804 = scmp.ne.s32.totalorder %s789, %s803
      %p805 = scmp.eq.s32.totalorder %s113, 0
      %p806 = por %p804, %p805
      %s808 = sadd.s32 %s807, 1
      %p811 = scmp.eq.s32.totalorder %s107, 1
      %p812 = scmp.ne.s32.totalorder %s807, %s809
      %p813 = scmp.eq.s32.totalorder %s107, 0
      %p814 = por %p812, %p813
      %p815 = scmp.ne.s32.totalorder %s807, %s809
      %p816 = scmp.eq.s32.totalorder %s112, 1
      %p817 = por %p815, %p816
      %p818 = scmp.ne.s32.totalorder %s809, %s810
      %p819 = scmp.eq.s32.totalorder %s112, 0
      %p820 = por %p818, %p819
      %p821 = scmp.ne.s32.totalorder %s809, %s810
      %p822 = scmp.eq.s32.totalorder %s113, 1
      %p823 = por %p821, %p822
      %p825 = scmp.ne.s32.totalorder %s810, %s824
      %p826 = scmp.eq.s32.totalorder %s113, 0
      %p827 = por %p825, %p826
      %s829 = sadd.s32 %s828, 1
      %p832 = scmp.eq.s32.totalorder %s107, 1
      %p833 = scmp.ne.s32.totalorder %s828, %s830
      %p834 = scmp.eq.s32.totalorder %s107, 0
      %p835 = por %p833, %p834
      %p836 = scmp.ne.s32.totalorder %s828, %s830
      %p837 = scmp.eq.s32.totalorder %s112, 1
      %p838 = por %p836, %p837
      %p839 = scmp.ne.s32.totalorder %s830, %s831
      %p840 = scmp.eq.s32.totalorder %s112, 0
      %p841 = por %p839, %p840
      %p842 = scmp.ne.s32.totalorder %s830, %s831
      %p843 = scmp.eq.s32.totalorder %s113, 1
      %p844 = por %p842, %p843
      %p846 = scmp.ne.s32.totalorder %s831, %s845
      %p847 = scmp.eq.s32.totalorder %s113, 0
      %p848 = por %p846, %p847
      %s850 = sadd.s32 %s849, 1
      %p853 = scmp.eq.s32.totalorder %s107, 1
      %p854 = scmp.ne.s32.totalorder %s849, %s851
      %p855 = scmp.eq.s32.totalorder %s107, 0
      %p856 = por %p854, %p855
      %p857 = scmp.ne.s32.totalorder %s849, %s851
      %p858 = scmp.eq.s32.totalorder %s112, 1
      %p859 = por %p857, %p858
      %p860 = scmp.ne.s32.totalorder %s851, %s852
      %p861 = scmp.eq.s32.totalorder %s112, 0
      %p862 = por %p860, %p861
      %p863 = scmp.ne.s32.totalorder %s851, %s852
      %p864 = scmp.eq.s32.totalorder %s113, 1
      %p865 = por %p863, %p864
      %p867 = scmp.ne.s32.totalorder %s852, %s866
      %p868 = scmp.eq.s32.totalorder %s113, 0
      %p869 = por %p867, %p868
      %s871 = sadd.s32 %s870, 1
      %p874 = scmp.eq.s32.totalorder %s107, 1
      %p875 = scmp.ne.s32.totalorder %s870, %s872
      %p876 = scmp.eq.s32.totalorder %s107, 0
      %p877 = por %p875, %p876
      %p878 = scmp.ne.s32.totalorder %s870, %s872
      %p879 = scmp.eq.s32.totalorder %s112, 1
      %p880 = por %p878, %p879
      %p881 = scmp.ne.s32.totalorder %s872, %s873
      %p882 = scmp.eq.s32.totalorder %s112, 0
      %p883 = por %p881, %p882
      %p884 = scmp.ne.s32.totalorder %s872, %s873
      %p885 = scmp.eq.s32.totalorder %s113, 1
      %p886 = por %p884, %p885
      %p888 = scmp.ne.s32.totalorder %s873, %s887
      %p889 = scmp.eq.s32.totalorder %s113, 0
      %p890 = por %p888, %p889
      %s892 = sadd.s32 %s891, 1
      %p895 = scmp.eq.s32.totalorder %s107, 1
      %p896 = scmp.ne.s32.totalorder %s891, %s893
      %p897 = scmp.eq.s32.totalorder %s107, 0
      %p898 = por %p896, %p897
      %p899 = scmp.ne.s32.totalorder %s891, %s893
      %p900 = scmp.eq.s32.totalorder %s112, 1
      %p901 = por %p899, %p900
      %p902 = scmp.ne.s32.totalorder %s893, %s894
      %p903 = scmp.eq.s32.totalorder %s112, 0
      %p904 = por %p902, %p903
      %p905 = scmp.ne.s32.totalorder %s893, %s894
      %p906 = scmp.eq.s32.totalorder %s113, 1
      %p907 = por %p905, %p906
      %p909 = scmp.ne.s32.totalorder %s894, %s908
      %p910 = scmp.eq.s32.totalorder %s113, 0
      %p911 = por %p909, %p910
      %s913 = sadd.s32 %s912, 1
      %p916 = scmp.eq.s32.totalorder %s107, 1
      %p917 = scmp.ne.s32.totalorder %s912, %s914
      %p918 = scmp.eq.s32.totalorder %s107, 0
      %p919 = por %p917, %p918
      %p920 = scmp.ne.s32.totalorder %s912, %s914
      %p921 = scmp.eq.s32.totalorder %s112, 1
      %p922 = por %p920, %p921
      %p923 = scmp.ne.s32.totalorder %s914, %s915
      %p924 = scmp.eq.s32.totalorder %s112, 0
      %p925 = por %p923, %p924
      %p926 = scmp.ne.s32.totalorder %s914, %s915
      %p927 = scmp.eq.s32.totalorder %s113, 1
      %p928 = por %p926, %p927
      %p930 = scmp.ne.s32.totalorder %s915, %s929
      %p931 = scmp.eq.s32.totalorder %s113, 0
      %p932 = por %p930, %p931
      %s934 = sadd.s32 %s933, 1
      %p937 = scmp.eq.s32.totalorder %s107, 1
      %p938 = scmp.ne.s32.totalorder %s933, %s935
      %p939 = scmp.eq.s32.totalorder %s107, 0
      %p940 = por %p938, %p939
      %p941 = scmp.ne.s32.totalorder %s933, %s935
      %p942 = scmp.eq.s32.totalorder %s112, 1
      %p943 = por %p941, %p942
      %p944 = scmp.ne.s32.totalorder %s935, %s936
      %p945 = scmp.eq.s32.totalorder %s112, 0
      %p946 = por %p944, %p945
      %p947 = scmp.ne.s32.totalorder %s935, %s936
      %p948 = scmp.eq.s32.totalorder %s113, 1
      %p949 = por %p947, %p948
      %p951 = scmp.ne.s32.totalorder %s936, %s950
      %p952 = scmp.eq.s32.totalorder %s113, 0
      %p953 = por %p951, %p952
      %s955 = sadd.s32 %s954, 1
      %p958 = scmp.eq.s32.totalorder %s107, 1
      %p959 = scmp.ne.s32.totalorder %s954, %s956
      %p960 = scmp.eq.s32.totalorder %s107, 0
      %p961 = por %p959, %p960
      %p962 = scmp.ne.s32.totalorder %s954, %s956
      %p963 = scmp.eq.s32.totalorder %s112, 1
      %p964 = por %p962, %p963
      %p965 = scmp.ne.s32.totalorder %s956, %s957
      %p966 = scmp.eq.s32.totalorder %s112, 0
      %p967 = por %p965, %p966
      %p968 = scmp.ne.s32.totalorder %s956, %s957
      %p969 = scmp.eq.s32.totalorder %s113, 1
      %p970 = por %p968, %p969
      %p972 = scmp.ne.s32.totalorder %s957, %s971
      %p973 = scmp.eq.s32.totalorder %s113, 0
      %p974 = por %p972, %p973
      %s975 = ssub.s32 %s107, %s114
      %p976 = scmp.eq.s32.totalorder %s975, 0
      %s978 = sadd.s32 %s977, 1
      %s979 = scalar_select %p976, %s977, %s978
      %p982 = pneg %p976
      %p983 = scmp.eq.s32.totalorder %s107, 1
      %p984 = por %p982, %p983
      %p985 = scmp.ne.s32.totalorder %s977, %s980
      %p986 = scmp.eq.s32.totalorder %s107, 0
      %p987 = por %p985, %p986
      %p988 = scmp.ne.s32.totalorder %s977, %s980
      %p989 = scmp.eq.s32.totalorder %s112, 1
      %p990 = por %p988, %p989
      %p991 = scmp.ne.s32.totalorder %s980, %s981
      %p992 = scmp.eq.s32.totalorder %s112, 0
      %p993 = por %p991, %p992
      %p994 = scmp.ne.s32.totalorder %s980, %s981
      %p995 = scmp.eq.s32.totalorder %s113, 1
      %p996 = por %p994, %p995
      %p998 = scmp.ne.s32.totalorder %s981, %s997
      %p999 = scmp.eq.s32.totalorder %s113, 0
      %p1000 = por %p998, %p999
      %s1001 = ssub.s32 %s107, %s114
      %p1002 = scmp.eq.s32.totalorder %s1001, 0
      %s1004 = sadd.s32 %s1003, 1
      %s1005 = scalar_select %p1002, %s1003, %s1004
      %p1008 = pneg %p1002
      %p1009 = scmp.eq.s32.totalorder %s107, 1
      %p1010 = por %p1008, %p1009
      %p1011 = scmp.ne.s32.totalorder %s1003, %s1006
      %p1012 = scmp.eq.s32.totalorder %s107, 0
      %p1013 = por %p1011, %p1012
      %p1014 = scmp.ne.s32.totalorder %s1003, %s1006
      %p1015 = scmp.eq.s32.totalorder %s112, 1
      %p1016 = por %p1014, %p1015
      %p1017 = scmp.ne.s32.totalorder %s1006, %s1007
      %p1018 = scmp.eq.s32.totalorder %s112, 0
      %p1019 = por %p1017, %p1018
      %p1020 = scmp.ne.s32.totalorder %s1006, %s1007
      %p1021 = scmp.eq.s32.totalorder %s113, 1
      %p1022 = por %p1020, %p1021
      %p1024 = scmp.ne.s32.totalorder %s1007, %s1023
      %p1025 = scmp.eq.s32.totalorder %s113, 0
      %p1026 = por %p1024, %p1025
      %p1027 = scmp.le.s32.totalorder 1, %s107
      %p1028 = scmp.lt.s32.totalorder %s107, 3
      %p1029 = pnand %p1027, %p1028
      %p1030 = pneg %p1029
      // Predicated region
      $region9: #{tpu_custom_call.1} parent=5 // pred_check
        _
      $region10: #{tpu_custom_call.1} parent=5 // pred_check_branch
        %1032 = sbr.rel (%p1029) target = $region12
      $region11: #{tpu_custom_call.1} parent=5 // pred_region
        %s1033 = ssub.s32 %s107, 1
        // Predicated region
        $region13: #{tpu_custom_call.1} parent=11 // pred_check
          %p1034 = pneg %p232
        $region14: #{tpu_custom_call.1} parent=11 // pred_check_branch
          %1036 = sbr.rel (%p1034) target = $region16
        $region15: #{tpu_custom_call.1} parent=11 // pred_region
          %1038 = vsyncadd [#allocation6], 0
          %s1039 = sshll.u32 %s9, 4
          %s1040 = int_to_ptr.hbm [resolvable:$true] %s1039
          %s1041 = sshll.u32 [#allocation7], 4
          %s1042 = int_to_ptr.vmem [resolvable:$true] %s1041
          %1047 = dma.hbm_to_vmem [thread:$0]  %s1040, 2048, %s1042, [#allocation6], 128, 128, 8
        $region16: #{tpu_custom_call.1} parent=11 // pred_fallthru
          _
        // Predicated region
        $region17: #{tpu_custom_call.1} parent=11 // pred_check
          %p1048 = pneg %p253
        $region18: #{tpu_custom_call.1} parent=11 // pred_check_branch
          %1050 = sbr.rel (%p1048) target = $region20
        $region19: #{tpu_custom_call.1} parent=11 // pred_region
          %1052 = vsyncadd [#allocation9], 0
          %s1054 = sshll.u32 %s11, 4
          %s1055 = int_to_ptr.hbm [resolvable:$true] %s1054
          %s1056 = sshll.u32 [#allocation8], 4
          %s1057 = int_to_ptr.vmem [resolvable:$true] %s1056
          %1059 = dma.hbm_to_vmem [thread:$0]  %s1055, 16, %s1057, [#allocation9]
        $region20: #{tpu_custom_call.1} parent=11 // pred_fallthru
          _
        // Predicated region
        $region21: #{tpu_custom_call.1} parent=11 // pred_check
          %p1060 = pneg %p274
        $region22: #{tpu_custom_call.1} parent=11 // pred_check_branch
          %1062 = sbr.rel (%p1060) target = $region24
        $region23: #{tpu_custom_call.1} parent=11 // pred_region
          %1064 = vsyncadd [#allocation9], 0
          %s1065 = sshll.u32 %s13, 4
          %s1066 = int_to_ptr.hbm [resolvable:$true] %s1065
          %s1067 = sshll.u32 [#allocation10], 4
          %s1068 = int_to_ptr.vmem [resolvable:$true] %s1067
          %1073 = dma.hbm_to_vmem [thread:$0]  %s1066, 2048, %s1068, [#allocation9], 128, 128, 8
        $region24: #{tpu_custom_call.1} parent=11 // pred_fallthru
          _
        // Predicated region
        $region25: #{tpu_custom_call.1} parent=11 // pred_check
          %p1074 = pneg %p295
        $region26: #{tpu_custom_call.1} parent=11 // pred_check_branch
          %1076 = sbr.rel (%p1074) target = $region28
        $region27: #{tpu_custom_call.1} parent=11 // pred_region
          %1078 = vsyncadd [#allocation12], 0
          %s1080 = sshll.u32 %s15, 4
          %s1081 = int_to_ptr.hbm [resolvable:$true] %s1080
          %s1082 = sshll.u32 [#allocation11], 4
          %s1083 = int_to_ptr.vmem [resolvable:$true] %s1082
          %1085 = dma.hbm_to_vmem [thread:$0]  %s1081, 16, %s1083, [#allocation12]
        $region28: #{tpu_custom_call.1} parent=11 // pred_fallthru
          _
        // Predicated region
        $region29: #{tpu_custom_call.1} parent=11 // pred_check
          %p1086 = pneg %p316
        $region30: #{tpu_custom_call.1} parent=11 // pred_check_branch
          %1088 = sbr.rel (%p1086) target = $region32
        $region31: #{tpu_custom_call.1} parent=11 // pred_region
          %1090 = vsyncadd [#allocation12], 0
          %s1091 = sshll.u32 %s17, 4
          %s1092 = int_to_ptr.hbm [resolvable:$true] %s1091
          %s1093 = sshll.u32 [#allocation13], 4
          %s1094 = int_to_ptr.vmem [resolvable:$true] %s1093
          %1099 = dma.hbm_to_vmem [thread:$0]  %s1092, 2048, %s1094, [#allocation12], 128, 128, 8
        $region32: #{tpu_custom_call.1} parent=11 // pred_fallthru
          _
        // Predicated region
        $region33: #{tpu_custom_call.1} parent=11 // pred_check
          %p1100 = pneg %p337
        $region34: #{tpu_custom_call.1} parent=11 // pred_check_branch
          %1102 = sbr.rel (%p1100) target = $region36
        $region35: #{tpu_custom_call.1} parent=11 // pred_region
          %1104 = vsyncadd [#allocation15], 0
          %s1106 = sshll.u32 %s19, 4
          %s1107 = int_to_ptr.hbm [resolvable:$true] %s1106
          %s1108 = sshll.u32 [#allocation14], 4
          %s1109 = int_to_ptr.vmem [resolvable:$true] %s1108
          %1111 = dma.hbm_to_vmem [thread:$0]  %s1107, 16, %s1109, [#allocation15]
        $region36: #{tpu_custom_call.1} parent=11 // pred_fallthru
          _
        // Predicated region
        $region37: #{tpu_custom_call.1} parent=11 // pred_check
          %p1112 = pneg %p358
        $region38: #{tpu_custom_call.1} parent=11 // pred_check_branch
          %1114 = sbr.rel (%p1112) target = $region40
        $region39: #{tpu_custom_call.1} parent=11 // pred_region
          %1116 = vsyncadd [#allocation15], 0
          %s1117 = sshll.u32 %s21, 4
          %s1118 = int_to_ptr.hbm [resolvable:$true] %s1117
          %s1119 = sshll.u32 [#allocation16], 4
          %s1120 = int_to_ptr.vmem [resolvable:$true] %s1119
          %1125 = dma.hbm_to_vmem [thread:$0]  %s1118, 2048, %s1120, [#allocation15], 128, 128, 8
        $region40: #{tpu_custom_call.1} parent=11 // pred_fallthru
          _
        // Predicated region
        $region41: #{tpu_custom_call.1} parent=11 // pred_check
          %p1126 = pneg %p379
        $region42: #{tpu_custom_call.1} parent=11 // pred_check_branch
          %1128 = sbr.rel (%p1126) target = $region44
        $region43: #{tpu_custom_call.1} parent=11 // pred_region
          %1130 = vsyncadd [#allocation18], 0
          %s1132 = sshll.u32 %s23, 4
          %s1133 = int_to_ptr.hbm [resolvable:$true] %s1132
          %s1134 = sshll.u32 [#allocation17], 4
          %s1135 = int_to_ptr.vmem [resolvable:$true] %s1134
          %1137 = dma.hbm_to_vmem [thread:$0]  %s1133, 16, %s1135, [#allocation18]
        $region44: #{tpu_custom_call.1} parent=11 // pred_fallthru
          _
        // Predicated region
        $region45: #{tpu_custom_call.1} parent=11 // pred_check
          %p1138 = pneg %p400
        $region46: #{tpu_custom_call.1} parent=11 // pred_check_branch
          %1140 = sbr.rel (%p1138) target = $region48
        $region47: #{tpu_custom_call.1} parent=11 // pred_region
          %1142 = vsyncadd [#allocation18], 0
          %s1144 = sshll.u32 %s25, 4
          %s1145 = int_to_ptr.hbm [resolvable:$true] %s1144
          %s1146 = sshll.u32 [#allocation19], 4
          %s1147 = int_to_ptr.vmem [resolvable:$true] %s1146
          %1149 = dma.hbm_to_vmem [thread:$0]  %s1145, 16, %s1147, [#allocation18]
        $region48: #{tpu_custom_call.1} parent=11 // pred_fallthru
          _
        // Predicated region
        $region49: #{tpu_custom_call.1} parent=11 // pred_check
          %p1150 = pneg %p421
        $region50: #{tpu_custom_call.1} parent=11 // pred_check_branch
          %1152 = sbr.rel (%p1150) target = $region52
        $region51: #{tpu_custom_call.1} parent=11 // pred_region
          _
        $region52: #{tpu_custom_call.1} parent=11 // pred_fallthru
          _
        // Predicated region
        $region53: #{tpu_custom_call.1} parent=11 // pred_check
          %p1153 = pneg %p442
        $region54: #{tpu_custom_call.1} parent=11 // pred_check_branch
          %1155 = sbr.rel (%p1153) target = $region56
        $region55: #{tpu_custom_call.1} parent=11 // pred_region
          _
        $region56: #{tpu_custom_call.1} parent=11 // pred_fallthru
          _
        // Predicated region
        $region57: #{tpu_custom_call.1} parent=11 // pred_check
          %p1156 = pneg %p463
        $region58: #{tpu_custom_call.1} parent=11 // pred_check_branch
          %1158 = sbr.rel (%p1156) target = $region60
        $region59: #{tpu_custom_call.1} parent=11 // pred_region
          _
        $region60: #{tpu_custom_call.1} parent=11 // pred_fallthru
          _
        // Predicated region
        $region61: #{tpu_custom_call.1} parent=11 // pred_check
          %p1159 = pneg %p484
        $region62: #{tpu_custom_call.1} parent=11 // pred_check_branch
          %1161 = sbr.rel (%p1159) target = $region64
        $region63: #{tpu_custom_call.1} parent=11 // pred_region
          _
        $region64: #{tpu_custom_call.1} parent=11 // pred_fallthru
          _
        // Predicated region
        $region65: #{tpu_custom_call.1} parent=11 // pred_check
          %p1162 = pneg %p505
        $region66: #{tpu_custom_call.1} parent=11 // pred_check_branch
          %1164 = sbr.rel (%p1162) target = $region68
        $region67: #{tpu_custom_call.1} parent=11 // pred_region
          _
        $region68: #{tpu_custom_call.1} parent=11 // pred_fallthru
          _
        // Predicated region
        $region69: #{tpu_custom_call.1} parent=11 // pred_check
          %p1165 = pneg %p526
        $region70: #{tpu_custom_call.1} parent=11 // pred_check_branch
          %1167 = sbr.rel (%p1165) target = $region72
        $region71: #{tpu_custom_call.1} parent=11 // pred_region
          _
        $region72: #{tpu_custom_call.1} parent=11 // pred_fallthru
          _
        // Predicated region
        $region73: #{tpu_custom_call.1} parent=11 // pred_check
          %p1168 = pneg %p547
        $region74: #{tpu_custom_call.1} parent=11 // pred_check_branch
          %1170 = sbr.rel (%p1168) target = $region76
        $region75: #{tpu_custom_call.1} parent=11 // pred_region
          _
        $region76: #{tpu_custom_call.1} parent=11 // pred_fallthru
          _
        // Predicated region
        $region77: #{tpu_custom_call.1} parent=11 // pred_check
          %p1171 = pneg %p568
        $region78: #{tpu_custom_call.1} parent=11 // pred_check_branch
          %1173 = sbr.rel (%p1171) target = $region80
        $region79: #{tpu_custom_call.1} parent=11 // pred_region
          _
        $region80: #{tpu_custom_call.1} parent=11 // pred_fallthru
          _
        // Predicated region
        $region81: #{tpu_custom_call.1} parent=11 // pred_check
          %p1174 = pneg %p589
        $region82: #{tpu_custom_call.1} parent=11 // pred_check_branch
          %1176 = sbr.rel (%p1174) target = $region84
        $region83: #{tpu_custom_call.1} parent=11 // pred_region
          _
        $region84: #{tpu_custom_call.1} parent=11 // pred_fallthru
          _
        // Predicated region
        $region85: #{tpu_custom_call.1} parent=11 // pred_check
          %p1177 = pneg %p610
        $region86: #{tpu_custom_call.1} parent=11 // pred_check_branch
          %1179 = sbr.rel (%p1177) target = $region88
        $region87: #{tpu_custom_call.1} parent=11 // pred_region
          _
        $region88: #{tpu_custom_call.1} parent=11 // pred_fallthru
          _
        // Predicated region
        $region89: #{tpu_custom_call.1} parent=11 // pred_check
          %p1180 = pneg %p631
        $region90: #{tpu_custom_call.1} parent=11 // pred_check_branch
          %1182 = sbr.rel (%p1180) target = $region92
        $region91: #{tpu_custom_call.1} parent=11 // pred_region
          _
        $region92: #{tpu_custom_call.1} parent=11 // pred_fallthru
          _
        // Predicated region
        $region93: #{tpu_custom_call.1} parent=11 // pred_check
          %p1183 = pneg %p652
        $region94: #{tpu_custom_call.1} parent=11 // pred_check_branch
          %1185 = sbr.rel (%p1183) target = $region96
        $region95: #{tpu_custom_call.1} parent=11 // pred_region
          _
        $region96: #{tpu_custom_call.1} parent=11 // pred_fallthru
          _
        // Predicated region
        $region97: #{tpu_custom_call.1} parent=11 // pred_check
          %p1186 = pneg %p673
        $region98: #{tpu_custom_call.1} parent=11 // pred_check_branch
          %1188 = sbr.rel (%p1186) target = $region100
        $region99: #{tpu_custom_call.1} parent=11 // pred_region
          _
        $region100: #{tpu_custom_call.1} parent=11 // pred_fallthru
          _
        // Predicated region
        $region101: #{tpu_custom_call.1} parent=11 // pred_check
          %p1189 = pneg %p694
        $region102: #{tpu_custom_call.1} parent=11 // pred_check_branch
          %1191 = sbr.rel (%p1189) target = $region104
        $region103: #{tpu_custom_call.1} parent=11 // pred_region
          _
        $region104: #{tpu_custom_call.1} parent=11 // pred_fallthru
          _
        // Predicated region
        $region105: #{tpu_custom_call.1} parent=11 // pred_check
          %p1192 = pneg %p715
        $region106: #{tpu_custom_call.1} parent=11 // pred_check_branch
          %1194 = sbr.rel (%p1192) target = $region108
        $region107: #{tpu_custom_call.1} parent=11 // pred_region
          _
        $region108: #{tpu_custom_call.1} parent=11 // pred_fallthru
          _
        // Predicated region
        $region109: #{tpu_custom_call.1} parent=11 // pred_check
          %p1195 = pneg %p736
        $region110: #{tpu_custom_call.1} parent=11 // pred_check_branch
          %1197 = sbr.rel (%p1195) target = $region112
        $region111: #{tpu_custom_call.1} parent=11 // pred_region
          _
        $region112: #{tpu_custom_call.1} parent=11 // pred_fallthru
          _
        // Predicated region
        $region113: #{tpu_custom_call.1} parent=11 // pred_check
          %p1198 = pneg %p757
        $region114: #{tpu_custom_call.1} parent=11 // pred_check_branch
          %1200 = sbr.rel (%p1198) target = $region116
        $region115: #{tpu_custom_call.1} parent=11 // pred_region
          _
        $region116: #{tpu_custom_call.1} parent=11 // pred_fallthru
          _
        // Predicated region
        $region117: #{tpu_custom_call.1} parent=11 // pred_check
          %p1201 = pneg %p778
        $region118: #{tpu_custom_call.1} parent=11 // pred_check_branch
          %1203 = sbr.rel (%p1201) target = $region120
        $region119: #{tpu_custom_call.1} parent=11 // pred_region
          _
        $region120: #{tpu_custom_call.1} parent=11 // pred_fallthru
          _
        // Predicated region
        $region121: #{tpu_custom_call.1} parent=11 // pred_check
          %p1204 = pneg %p799
        $region122: #{tpu_custom_call.1} parent=11 // pred_check_branch
          %1206 = sbr.rel (%p1204) target = $region124
        $region123: #{tpu_custom_call.1} parent=11 // pred_region
          _
        $region124: #{tpu_custom_call.1} parent=11 // pred_fallthru
          _
        // Predicated region
        $region125: #{tpu_custom_call.1} parent=11 // pred_check
          %p1207 = pneg %p820
        $region126: #{tpu_custom_call.1} parent=11 // pred_check_branch
          %1209 = sbr.rel (%p1207) target = $region128
        $region127: #{tpu_custom_call.1} parent=11 // pred_region
          _
        $region128: #{tpu_custom_call.1} parent=11 // pred_fallthru
          _
        // Predicated region
        $region129: #{tpu_custom_call.1} parent=11 // pred_check
          %p1210 = pneg %p841
        $region130: #{tpu_custom_call.1} parent=11 // pred_check_branch
          %1212 = sbr.rel (%p1210) target = $region132
        $region131: #{tpu_custom_call.1} parent=11 // pred_region
          _
        $region132: #{tpu_custom_call.1} parent=11 // pred_fallthru
          _
        // Predicated region
        $region133: #{tpu_custom_call.1} parent=11 // pred_check
          %p1213 = pneg %p862
        $region134: #{tpu_custom_call.1} parent=11 // pred_check_branch
          %1215 = sbr.rel (%p1213) target = $region136
        $region135: #{tpu_custom_call.1} parent=11 // pred_region
          _
        $region136: #{tpu_custom_call.1} parent=11 // pred_fallthru
          _
        // Predicated region
        $region137: #{tpu_custom_call.1} parent=11 // pred_check
          %p1216 = pneg %p883
        $region138: #{tpu_custom_call.1} parent=11 // pred_check_branch
          %1218 = sbr.rel (%p1216) target = $region140
        $region139: #{tpu_custom_call.1} parent=11 // pred_region
          _
        $region140: #{tpu_custom_call.1} parent=11 // pred_fallthru
          _
        // Predicated region
        $region141: #{tpu_custom_call.1} parent=11 // pred_check
          %p1219 = pneg %p904
        $region142: #{tpu_custom_call.1} parent=11 // pred_check_branch
          %1221 = sbr.rel (%p1219) target = $region144
        $region143: #{tpu_custom_call.1} parent=11 // pred_region
          %1223 = vsyncadd [#allocation21], 0
          %s1224 = sshll.u32 %s73, 4
          %s1225 = int_to_ptr.hbm [resolvable:$true] %s1224
          %s1226 = sshll.u32 [#allocation20], 4
          %s1227 = int_to_ptr.vmem [resolvable:$true] %s1226
          %1232 = dma.hbm_to_vmem [thread:$0]  %s1225, 1024, %s1227, [#allocation21], 128, 128, 8
        $region144: #{tpu_custom_call.1} parent=11 // pred_fallthru
          _
        // Predicated region
        $region145: #{tpu_custom_call.1} parent=11 // pred_check
          %p1233 = pneg %p925
        $region146: #{tpu_custom_call.1} parent=11 // pred_check_branch
          %1235 = sbr.rel (%p1233) target = $region148
        $region147: #{tpu_custom_call.1} parent=11 // pred_region
          _
        $region148: #{tpu_custom_call.1} parent=11 // pred_fallthru
          _
        // Predicated region
        $region149: #{tpu_custom_call.1} parent=11 // pred_check
          %p1236 = pneg %p946
        $region150: #{tpu_custom_call.1} parent=11 // pred_check_branch
          %1238 = sbr.rel (%p1236) target = $region152
        $region151: #{tpu_custom_call.1} parent=11 // pred_region
          _
        $region152: #{tpu_custom_call.1} parent=11 // pred_fallthru
          _
        // Predicated region
        $region153: #{tpu_custom_call.1} parent=11 // pred_check
          %p1239 = pneg %p967
        $region154: #{tpu_custom_call.1} parent=11 // pred_check_branch
          %1241 = sbr.rel (%p1239) target = $region156
        $region155: #{tpu_custom_call.1} parent=11 // pred_region
          _
        $region156: #{tpu_custom_call.1} parent=11 // pred_fallthru
          _
      $region12: #{tpu_custom_call.1} parent=5 // pred_fallthru
        _
      %p1242 = scmp.lt.s32.totalorder %s107, 2
      // Predicated region
      $region157: #{tpu_custom_call.1} parent=5 // pred_check
        %p1243 = pneg %p1242
      $region158: #{tpu_custom_call.1} parent=5 // pred_check_branch
        %1245 = sbr.rel (%p1243) target = $region160
      $region159: #{tpu_custom_call.1} parent=5 // pred_region
        // Predicated region
        $region161: #{tpu_custom_call.1} parent=159 // pred_check
          %p1246 = pneg %p127
        $region162: #{tpu_custom_call.1} parent=159 // pred_check_branch
          %1248 = sbr.rel (%p1246) target = $region164
        $region163: #{tpu_custom_call.1} parent=159 // pred_region
          %s1249 = sand.u32 %s117, 1
          %s1250 = scalar_lea.sflag [#allocation3], %s1249
          %s1251 = sand.u32 %s117, 1
          %s1252 = smul.addr %s1251, 8
          %s1253 = scalar_lea.vmem [#allocation2], %s1252
          %1255 = vsyncadd %s1250, 0
          %s1256 = smul.addr %s107, 8
          %s1257 = scalar_lea.hbm %s1, %s1256
          %s1259 = sshll.u32 %s1257, 4
          %s1260 = int_to_ptr.hbm [resolvable:$true] %s1259
          %s1261 = sshll.u32 %s1253, 4
          %s1262 = int_to_ptr.vmem [resolvable:$true] %s1261
          %1264 = dma.hbm_to_vmem [thread:$0]  %s1260, 128, %s1262, %s1250
        $region164: #{tpu_custom_call.1} parent=159 // pred_fallthru
          _
        // Predicated region
        $region165: #{tpu_custom_call.1} parent=159 // pred_check
          %p1265 = pneg %p153
        $region166: #{tpu_custom_call.1} parent=159 // pred_check_branch
          %1267 = sbr.rel (%p1265) target = $region168
        $region167: #{tpu_custom_call.1} parent=159 // pred_region
          %p1268 = scmp.lt.s32.totalorder %s107, 1
          %s1269 = scalar_select %p1268, %s107, 1
          %s1270 = smul.addr %s1269, 8
          %s1271 = smul.addr %s1270, 8
          %s1272 = scalar_lea.vmem %s3, %s1271
        $region168: #{tpu_custom_call.1} parent=159 // pred_fallthru
          _
        // Predicated region
        $region169: #{tpu_custom_call.1} parent=159 // pred_check
          %p1273 = pneg %p179
        $region170: #{tpu_custom_call.1} parent=159 // pred_check_branch
          %1275 = sbr.rel (%p1273) target = $region172
        $region171: #{tpu_custom_call.1} parent=159 // pred_region
          %s1276 = sand.u32 %s107, 1
          %s1277 = scalar_lea.sflag [#allocation6], %s1276
          %s1278 = sand.u32 %s169, 1
          %s1279 = smul.addr %s1278, 8
          %s1280 = scalar_lea.vmem [#allocation5], %s1279
          %1282 = vsyncadd %s1277, 0
          %s1283 = smul.addr %s107, 8
          %s1284 = scalar_lea.hbm %s5, %s1283
          %s1286 = sshll.u32 %s1284, 4
          %s1287 = int_to_ptr.hbm [resolvable:$true] %s1286
          %s1288 = sshll.u32 %s1280, 4
          %s1289 = int_to_ptr.vmem [resolvable:$true] %s1288
          %1291 = dma.hbm_to_vmem [thread:$0]  %s1287, 128, %s1289, %s1277
        $region172: #{tpu_custom_call.1} parent=159 // pred_fallthru
          _
        // Predicated region
        $region173: #{tpu_custom_call.1} parent=159 // pred_check
          %p1292 = pneg %p205
        $region174: #{tpu_custom_call.1} parent=159 // pred_check_branch
          %1294 = sbr.rel (%p1292) target = $region176
        $region175: #{tpu_custom_call.1} parent=159 // pred_region
          %p1295 = scmp.lt.s32.totalorder %s107, 1
          %s1296 = scalar_select %p1295, %s107, 1
          %s1297 = smul.addr %s1296, 8
          %s1298 = smul.addr %s1297, 8
          %s1299 = scalar_lea.vmem %s7, %s1298
        $region176: #{tpu_custom_call.1} parent=159 // pred_fallthru
          _
      $region160: #{tpu_custom_call.1} parent=5 // pred_fallthru
        _
      %p1300 = scmp.le.s32.totalorder 1, %s107
      %p1301 = scmp.lt.s32.totalorder %s107, 3
      %p1302 = pnand %p1300, %p1301
      %p1303 = pneg %p1302
      // Predicated region
      $region177: #{tpu_custom_call.1} parent=5 // pred_check
        _
      $region178: #{tpu_custom_call.1} parent=5 // pred_check_branch
        %1305 = sbr.rel (%p1302) target = $region180
      $region179: #{tpu_custom_call.1} parent=5 // pred_region
        %s1306 = ssub.s32 %s107, 1
        %s1307 = sand.u32 %s120, 1
        %s1308 = scalar_lea.sflag [#allocation3], %s1307
        %s1309 = sand.u32 %s120, 1
        %s1310 = smul.addr %s1309, 8
        %s1311 = scalar_lea.vmem [#allocation2], %s1310
        // Predicated region
        $region181: #{tpu_custom_call.1} parent=179 // pred_check
          %p1312 = pneg %p133
        $region182: #{tpu_custom_call.1} parent=179 // pred_check_branch
          %1314 = sbr.rel (%p1312) target = $region184
        $region183: #{tpu_custom_call.1} parent=179 // pred_region
          %1316 = dma.done %s1308, 128
        $region184: #{tpu_custom_call.1} parent=179 // pred_fallthru
          _
        %s1317 = sand.u32 %s112, 1
        %s1318 = scalar_lea.sflag [#allocation6], %s1317
        %s1319 = sand.u32 %s172, 1
        %s1320 = smul.addr %s1319, 8
        %s1321 = scalar_lea.vmem [#allocation5], %s1320
        // Predicated region
        $region185: #{tpu_custom_call.1} parent=179 // pred_check
          %p1322 = pneg %p185
        $region186: #{tpu_custom_call.1} parent=179 // pred_check_branch
          %1324 = sbr.rel (%p1322) target = $region188
        $region187: #{tpu_custom_call.1} parent=179 // pred_region
          %1326 = dma.done %s1318, 128
        $region188: #{tpu_custom_call.1} parent=179 // pred_fallthru
          _
        // Predicated region
        $region189: #{tpu_custom_call.1} parent=179 // pred_check
          %p1327 = pneg %p232
        $region190: #{tpu_custom_call.1} parent=179 // pred_check_branch
          %1329 = sbr.rel (%p1327) target = $region192
        $region191: #{tpu_custom_call.1} parent=179 // pred_region
          %1331 = dma.done [#allocation6], 2048
        $region192: #{tpu_custom_call.1} parent=179 // pred_fallthru
          _
        // Predicated region
        $region193: #{tpu_custom_call.1} parent=179 // pred_check
          %p1332 = pneg %p253
        $region194: #{tpu_custom_call.1} parent=179 // pred_check_branch
          %1334 = sbr.rel (%p1332) target = $region196
        $region195: #{tpu_custom_call.1} parent=179 // pred_region
          %1336 = dma.done [#allocation9], 16
        $region196: #{tpu_custom_call.1} parent=179 // pred_fallthru
          _
        // Predicated region
        $region197: #{tpu_custom_call.1} parent=179 // pred_check
          %p1337 = pneg %p274
        $region198: #{tpu_custom_call.1} parent=179 // pred_check_branch
          %1339 = sbr.rel (%p1337) target = $region200
        $region199: #{tpu_custom_call.1} parent=179 // pred_region
          %1341 = dma.done [#allocation9], 2048
        $region200: #{tpu_custom_call.1} parent=179 // pred_fallthru
          _
        // Predicated region
        $region201: #{tpu_custom_call.1} parent=179 // pred_check
          %p1342 = pneg %p295
        $region202: #{tpu_custom_call.1} parent=179 // pred_check_branch
          %1344 = sbr.rel (%p1342) target = $region204
        $region203: #{tpu_custom_call.1} parent=179 // pred_region
          %1346 = dma.done [#allocation12], 16
        $region204: #{tpu_custom_call.1} parent=179 // pred_fallthru
          _
        // Predicated region
        $region205: #{tpu_custom_call.1} parent=179 // pred_check
          %p1347 = pneg %p316
        $region206: #{tpu_custom_call.1} parent=179 // pred_check_branch
          %1349 = sbr.rel (%p1347) target = $region208
        $region207: #{tpu_custom_call.1} parent=179 // pred_region
          %1351 = dma.done [#allocation12], 2048
        $region208: #{tpu_custom_call.1} parent=179 // pred_fallthru
          _
        // Predicated region
        $region209: #{tpu_custom_call.1} parent=179 // pred_check
          %p1352 = pneg %p337
        $region210: #{tpu_custom_call.1} parent=179 // pred_check_branch
          %1354 = sbr.rel (%p1352) target = $region212
        $region211: #{tpu_custom_call.1} parent=179 // pred_region
          %1356 = dma.done [#allocation15], 16
        $region212: #{tpu_custom_call.1} parent=179 // pred_fallthru
          _
        // Predicated region
        $region213: #{tpu_custom_call.1} parent=179 // pred_check
          %p1357 = pneg %p358
        $region214: #{tpu_custom_call.1} parent=179 // pred_check_branch
          %1359 = sbr.rel (%p1357) target = $region216
        $region215: #{tpu_custom_call.1} parent=179 // pred_region
          %1361 = dma.done [#allocation15], 2048
        $region216: #{tpu_custom_call.1} parent=179 // pred_fallthru
          _
        // Predicated region
        $region217: #{tpu_custom_call.1} parent=179 // pred_check
          %p1362 = pneg %p379
        $region218: #{tpu_custom_call.1} parent=179 // pred_check_branch
          %1364 = sbr.rel (%p1362) target = $region220
        $region219: #{tpu_custom_call.1} parent=179 // pred_region
          %1366 = dma.done [#allocation18], 16
        $region220: #{tpu_custom_call.1} parent=179 // pred_fallthru
          _
        // Predicated region
        $region221: #{tpu_custom_call.1} parent=179 // pred_check
          %p1367 = pneg %p400
        $region222: #{tpu_custom_call.1} parent=179 // pred_check_branch
          %1369 = sbr.rel (%p1367) target = $region224
        $region223: #{tpu_custom_call.1} parent=179 // pred_region
          %1371 = dma.done [#allocation18], 16
        $region224: #{tpu_custom_call.1} parent=179 // pred_fallthru
          _
        // Predicated region
        $region225: #{tpu_custom_call.1} parent=179 // pred_check
          %p1372 = pneg %p904
        $region226: #{tpu_custom_call.1} parent=179 // pred_check_branch
          %1374 = sbr.rel (%p1372) target = $region228
        $region227: #{tpu_custom_call.1} parent=179 // pred_region
          %1376 = dma.done [#allocation21], 1024
        $region228: #{tpu_custom_call.1} parent=179 // pred_fallthru
          _
        %s1377 = sand.u32 %s120, 1
        %s1378 = scalar_lea.sflag [#allocation3], %s1377
        %s1379 = sand.u32 %s120, 1
        %s1380 = smul.addr %s1379, 8
        %s1381 = scalar_lea.vmem [#allocation2], %s1380
        %p1382 = pneg %p133
        %p1383 = pneg %p130
        %p1384 = scmp.lt.s32.totalorder %s112, 1
        %s1385 = scalar_select %p1384, %s112, 1
        %s1386 = smul.addr %s1385, 8
        %s1387 = smul.addr %s1386, 8
        %s1388 = scalar_lea.vmem %s3, %s1387
        %p1389 = pneg %p159
        %p1390 = pneg %p156
        %s1391 = sand.u32 %s112, 1
        %s1392 = scalar_lea.sflag [#allocation6], %s1391
        %s1393 = sand.u32 %s172, 1
        %s1394 = smul.addr %s1393, 8
        %s1395 = scalar_lea.vmem [#allocation5], %s1394
        %p1396 = pneg %p185
        %p1397 = pneg %p182
        %p1398 = scmp.lt.s32.totalorder %s112, 1
        %s1399 = scalar_select %p1398, %s112, 1
        %s1400 = smul.addr %s1399, 8
        %s1401 = smul.addr %s1400, 8
        %s1402 = scalar_lea.vmem %s7, %s1401
        %p1403 = pneg %p211
        %p1404 = pneg %p208
        %p1405 = pneg %p232
        %p1406 = pneg %p229
        %p1407 = pneg %p253
        %p1408 = pneg %p250
        %p1409 = pneg %p274
        %p1410 = pneg %p271
        %p1411 = pneg %p295
        %p1412 = pneg %p292
        %p1413 = pneg %p316
        %p1414 = pneg %p313
        %p1415 = pneg %p337
        %p1416 = pneg %p334
        %p1417 = pneg %p358
        %p1418 = pneg %p355
        %p1419 = pneg %p379
        %p1420 = pneg %p376
        %p1421 = pneg %p400
        %p1422 = pneg %p397
        %p1423 = pneg %p421
        %p1424 = pneg %p418
        %p1425 = pneg %p442
        %p1426 = pneg %p439
        %p1427 = pneg %p463
        %p1428 = pneg %p460
        %p1429 = pneg %p484
        %p1430 = pneg %p481
        %p1431 = pneg %p505
        %p1432 = pneg %p502
        %p1433 = pneg %p526
        %p1434 = pneg %p523
        %p1435 = pneg %p547
        %p1436 = pneg %p544
        %p1437 = pneg %p568
        %p1438 = pneg %p565
        %p1439 = pneg %p589
        %p1440 = pneg %p586
        %p1441 = pneg %p610
        %p1442 = pneg %p607
        %p1443 = pneg %p631
        %p1444 = pneg %p628
        %p1445 = pneg %p652
        %p1446 = pneg %p649
        %p1447 = pneg %p673
        %p1448 = pneg %p670
        %p1449 = pneg %p694
        %p1450 = pneg %p691
        %p1451 = pneg %p715
        %p1452 = pneg %p712
        %p1453 = pneg %p736
        %p1454 = pneg %p733
        %p1455 = pneg %p757
        %p1456 = pneg %p754
        %p1457 = pneg %p778
        %p1458 = pneg %p775
        %p1459 = pneg %p799
        %p1460 = pneg %p796
        %p1461 = pneg %p820
        %p1462 = pneg %p817
        %p1463 = pneg %p841
        %p1464 = pneg %p838
        %p1465 = pneg %p862
        %p1466 = pneg %p859
        %p1467 = pneg %p883
        %p1468 = pneg %p880
        %p1469 = pneg %p904
        %p1470 = pneg %p901
        %p1471 = pneg %p925
        %p1472 = pneg %p922
        %p1473 = pneg %p946
        %p1474 = pneg %p943
        %p1475 = pneg %p967
        %p1476 = pneg %p964
        %p1477 = pneg %p993
        %p1478 = pneg %p990
        %s1479 = sand.u32 %s980, 1
        %s1480 = scalar_lea.sflag [#allocation4], %s1479
        %s1481 = sand.u32 %s980, 1
        %s1482 = smul.addr %s1481, 8
        %s1483 = scalar_lea.vmem [#allocation22], %s1482
        %p1484 = pneg %p1019
        %p1485 = pneg %p1016
        %s1486 = sand.u32 %s1006, 1
        %s1487 = scalar_lea.sflag [#allocation24], %s1486
        %s1488 = sand.u32 %s1006, 1
        %s1489 = smul.addr %s1488, 64
        %s1490 = scalar_lea.vmem [#allocation23], %s1489
        %p1491 = scmp.lt.s32.totalorder %s112, 1
        %s1492 = scalar_select %p1491, %s112, 1
        %s1493 = smul.addr %s1492, 8
        %s1494 = smul.addr %s1493, 8
        %s1495 = scalar_lea.vmem %s3, %s1494
        %p1496 = scmp.lt.s32.totalorder %s112, 1
        %s1497 = scalar_select %p1496, %s112, 1
        %s1498 = smul.addr %s1497, 8
        %s1499 = smul.addr %s1498, 8
        %s1500 = scalar_lea.vmem %s7, %s1499
        %v1501 = vld [vmem:[%s1311] sm:$0xff]
        %v1502 = vld [vmem:[%s1495] sm:$0xff]
        %v1503 = vld [vmem:[%s1495 + $0x8] sm:$0xff]
        %v1504 = vld [vmem:[%s1495 + $0x10] sm:$0xff]
        %v1505 = vld [vmem:[%s1495 + $0x18] sm:$0xff]
        %v1506 = vld [vmem:[%s1495 + $0x20] sm:$0xff]
        %v1507 = vld [vmem:[%s1495 + $0x28] sm:$0xff]
        %v1508 = vld [vmem:[%s1495 + $0x30] sm:$0xff]
        %v1509 = vld [vmem:[%s1495 + $0x38] sm:$0xff]
        %v1510 = vld [vmem:[%s1321] sm:$0xff]
        %v1511 = vld [vmem:[%s1500] sm:$0xff]
        %v1512 = vld [vmem:[%s1500 + $0x8] sm:$0xff]
        %v1513 = vld [vmem:[%s1500 + $0x10] sm:$0xff]
        %v1514 = vld [vmem:[%s1500 + $0x18] sm:$0xff]
        %v1515 = vld [vmem:[%s1500 + $0x20] sm:$0xff]
        %v1516 = vld [vmem:[%s1500 + $0x28] sm:$0xff]
        %v1517 = vld [vmem:[%s1500 + $0x30] sm:$0xff]
        %v1518 = vld [vmem:[%s1500 + $0x38] sm:$0xff]
        %v1519 = vadd.f32 %v1501, %v1510
        %v1520 = vld [vmem:[#allocation7] sm:$0xff]
        %v1521 = vld [vmem:[#allocation7 + $0x8] sm:$0xff]
        %v1522 = vld [vmem:[#allocation7 + $0x10] sm:$0xff]
        %v1523 = vld [vmem:[#allocation7 + $0x18] sm:$0xff]
        %v1524 = vld [vmem:[#allocation7 + $0x20] sm:$0xff]
        %v1525 = vld [vmem:[#allocation7 + $0x28] sm:$0xff]
        %v1526 = vld [vmem:[#allocation7 + $0x30] sm:$0xff]
        %v1527 = vld [vmem:[#allocation7 + $0x38] sm:$0xff]
        %v1528 = vld [vmem:[#allocation7 + $0x40] sm:$0xff]
        %v1529 = vld [vmem:[#allocation7 + $0x48] sm:$0xff]
        %v1530 = vld [vmem:[#allocation7 + $0x50] sm:$0xff]
        %v1531 = vld [vmem:[#allocation7 + $0x58] sm:$0xff]
        %v1532 = vld [vmem:[#allocation7 + $0x60] sm:$0xff]
        %v1533 = vld [vmem:[#allocation7 + $0x68] sm:$0xff]
        %v1534 = vld [vmem:[#allocation7 + $0x70] sm:$0xff]
        %v1535 = vld [vmem:[#allocation7 + $0x78] sm:$0xff]
        %v1536 = vld [vmem:[#allocation8] sm:$0x1]
        %v1538 = vperm.slane %v1536, 0
        %1540 = vmatpush.msra.mxu0 %v1535
        %1541 = vmatpush.msra.mxu0 %v1534
        %1542 = vmatpush.msra.mxu0 %v1533
        %1543 = vmatpush.msra.mxu0 %v1532
        %1544 = vmatpush.msra.mxu0 %v1531
        %1545 = vmatpush.msra.mxu0 %v1530
        %1546 = vmatpush.msra.mxu0 %v1529
        %1547 = vmatpush.msra.mxu0 %v1528
        %1548 = vmatpush.msra.mxu0 %v1527
        %1549 = vmatpush.msra.mxu0 %v1526
        %1550 = vmatpush.msra.mxu0 %v1525
        %1551 = vmatpush.msra.mxu0 %v1524
        %1552 = vmatpush.msra.mxu0 %v1523
        %1553 = vmatpush.msra.mxu0 %v1522
        %1554 = vmatpush.msra.mxu0 %v1521
        %1555 = vmatpush.msra.mxu0 %v1520
        %1556 = vmatmul.f32.gmra.mxu0 %v1519
        %v1557 = vpop.f32.mrf.mxu0
        %v1558 = vadd.f32 %v1538, %v1557
        %1559 = vdwg.mxu0
        %v1560 = vld [vmem:[#allocation10] sm:$0xff]
        %v1561 = vld [vmem:[#allocation10 + $0x8] sm:$0xff]
        %v1562 = vld [vmem:[#allocation10 + $0x10] sm:$0xff]
        %v1563 = vld [vmem:[#allocation10 + $0x18] sm:$0xff]
        %v1564 = vld [vmem:[#allocation10 + $0x20] sm:$0xff]
        %v1565 = vld [vmem:[#allocation10 + $0x28] sm:$0xff]
        %v1566 = vld [vmem:[#allocation10 + $0x30] sm:$0xff]
        %v1567 = vld [vmem:[#allocation10 + $0x38] sm:$0xff]
        %v1568 = vld [vmem:[#allocation10 + $0x40] sm:$0xff]
        %v1569 = vld [vmem:[#allocation10 + $0x48] sm:$0xff]
        %v1570 = vld [vmem:[#allocation10 + $0x50] sm:$0xff]
        %v1571 = vld [vmem:[#allocation10 + $0x58] sm:$0xff]
        %v1572 = vld [vmem:[#allocation10 + $0x60] sm:$0xff]
        %v1573 = vld [vmem:[#allocation10 + $0x68] sm:$0xff]
        %v1574 = vld [vmem:[#allocation10 + $0x70] sm:$0xff]
        %v1575 = vld [vmem:[#allocation10 + $0x78] sm:$0xff]
        %v1576 = vld [vmem:[#allocation11] sm:$0x1]
        %v1578 = vperm.slane %v1576, 0
        %1580 = vmatpush.msra.mxu0 %v1575
        %1581 = vmatpush.msra.mxu0 %v1574
        %1582 = vmatpush.msra.mxu0 %v1573
        %1583 = vmatpush.msra.mxu0 %v1572
        %1584 = vmatpush.msra.mxu0 %v1571
        %1585 = vmatpush.msra.mxu0 %v1570
        %1586 = vmatpush.msra.mxu0 %v1569
        %1587 = vmatpush.msra.mxu0 %v1568
        %1588 = vmatpush.msra.mxu0 %v1567
        %1589 = vmatpush.msra.mxu0 %v1566
        %1590 = vmatpush.msra.mxu0 %v1565
        %1591 = vmatpush.msra.mxu0 %v1564
        %1592 = vmatpush.msra.mxu0 %v1563
        %1593 = vmatpush.msra.mxu0 %v1562
        %1594 = vmatpush.msra.mxu0 %v1561
        %1595 = vmatpush.msra.mxu0 %v1560
        %1596 = vmatmul.f32.gmra.mxu0 %v1519
        %v1597 = vpop.f32.mrf.mxu0
        %v1598 = vadd.f32 %v1578, %v1597
        %1599 = vdwg.mxu0
        %v1600 = vld [vmem:[#allocation13] sm:$0xff]
        %v1601 = vld [vmem:[#allocation13 + $0x8] sm:$0xff]
        %v1602 = vld [vmem:[#allocation13 + $0x10] sm:$0xff]
        %v1603 = vld [vmem:[#allocation13 + $0x18] sm:$0xff]
        %v1604 = vld [vmem:[#allocation13 + $0x20] sm:$0xff]
        %v1605 = vld [vmem:[#allocation13 + $0x28] sm:$0xff]
        %v1606 = vld [vmem:[#allocation13 + $0x30] sm:$0xff]
        %v1607 = vld [vmem:[#allocation13 + $0x38] sm:$0xff]
        %v1608 = vld [vmem:[#allocation13 + $0x40] sm:$0xff]
        %v1609 = vld [vmem:[#allocation13 + $0x48] sm:$0xff]
        %v1610 = vld [vmem:[#allocation13 + $0x50] sm:$0xff]
        %v1611 = vld [vmem:[#allocation13 + $0x58] sm:$0xff]
        %v1612 = vld [vmem:[#allocation13 + $0x60] sm:$0xff]
        %v1613 = vld [vmem:[#allocation13 + $0x68] sm:$0xff]
        %v1614 = vld [vmem:[#allocation13 + $0x70] sm:$0xff]
        %v1615 = vld [vmem:[#allocation13 + $0x78] sm:$0xff]
        %v1616 = vld [vmem:[#allocation14] sm:$0x1]
        %v1618 = vperm.slane %v1616, 0
        %1620 = vmatpush.msra.mxu0 %v1615
        %1621 = vmatpush.msra.mxu0 %v1614
        %1622 = vmatpush.msra.mxu0 %v1613
        %1623 = vmatpush.msra.mxu0 %v1612
        %1624 = vmatpush.msra.mxu0 %v1611
        %1625 = vmatpush.msra.mxu0 %v1610
        %1626 = vmatpush.msra.mxu0 %v1609
        %1627 = vmatpush.msra.mxu0 %v1608
        %1628 = vmatpush.msra.mxu0 %v1607
        %1629 = vmatpush.msra.mxu0 %v1606
        %1630 = vmatpush.msra.mxu0 %v1605
        %1631 = vmatpush.msra.mxu0 %v1604
        %1632 = vmatpush.msra.mxu0 %v1603
        %1633 = vmatpush.msra.mxu0 %v1602
        %1634 = vmatpush.msra.mxu0 %v1601
        %1635 = vmatpush.msra.mxu0 %v1600
        %1636 = vmatmul.f32.gmra.mxu0 %v1501
        %v1637 = vpop.f32.mrf.mxu0
        %v1638 = vadd.f32 %v1618, %v1637
        %1639 = vdwg.mxu0
        %v1640 = vmul.f32 %v1558, 0.17677669
        %v1641 = vld [vmem:[#allocation16] sm:$0xff]
        %v1642 = vld [vmem:[#allocation16 + $0x8] sm:$0xff]
        %v1643 = vld [vmem:[#allocation16 + $0x10] sm:$0xff]
        %v1644 = vld [vmem:[#allocation16 + $0x18] sm:$0xff]
        %v1645 = vld [vmem:[#allocation16 + $0x20] sm:$0xff]
        %v1646 = vld [vmem:[#allocation16 + $0x28] sm:$0xff]
        %v1647 = vld [vmem:[#allocation16 + $0x30] sm:$0xff]
        %v1648 = vld [vmem:[#allocation16 + $0x38] sm:$0xff]
        %v1649 = vld [vmem:[#allocation16 + $0x40] sm:$0xff]
        %v1650 = vld [vmem:[#allocation16 + $0x48] sm:$0xff]
        %v1651 = vld [vmem:[#allocation16 + $0x50] sm:$0xff]
        %v1652 = vld [vmem:[#allocation16 + $0x58] sm:$0xff]
        %v1653 = vld [vmem:[#allocation16 + $0x60] sm:$0xff]
        %v1654 = vld [vmem:[#allocation16 + $0x68] sm:$0xff]
        %v1655 = vld [vmem:[#allocation16 + $0x70] sm:$0xff]
        %v1656 = vld [vmem:[#allocation16 + $0x78] sm:$0xff]
        %vm1657 = vcmask 261120
        %v1659 = vsel %vm1657, %v1640, 0
        %v1662 = vsel %vm1657, %v1598, 0
        %1664 = vmatpush.xpose.msra.mxu0 0.0
        %1665 = vmatpush.xpose.msra.mxu0 0.0
        %1666 = vmatpush.xpose.msra.mxu0 0.0
        %1667 = vmatpush.xpose.msra.mxu0 0.0
        %1668 = vmatpush.xpose.msra.mxu0 0.0
        %1669 = vmatpush.xpose.msra.mxu0 0.0
        %1670 = vmatpush.xpose.msra.mxu0 0.0
        %1671 = vmatpush.xpose.msra.mxu0 0.0
        %1672 = vmatpush.xpose.msra.mxu0 0.0
        %1673 = vmatpush.xpose.msra.mxu0 0.0
        %1674 = vmatpush.xpose.msra.mxu0 0.0
        %1675 = vmatpush.xpose.msra.mxu0 0.0
        %1676 = vmatpush.xpose.msra.mxu0 0.0
        %1677 = vmatpush.xpose.msra.mxu0 0.0
        %1678 = vmatpush.xpose.msra.mxu0 0.0
        %1679 = vmatpush.xpose.msra.mxu0 %v1662
        %1680 = vmatmul.f32.gmra.mxu0 %v1659
        %v1681 = vpop.f32.mrf.mxu0
        %v1682 = vadd.f32 0.0, %v1681
        %1683 = vdwg.mxu0
        %vm1684 = vcmask 64512
        %v1685 = vsel %vm1684, %v1682, -inf
        %1686 = vmax.xlane.f32.xlu0 %v1685
        %v1687 = vpop.xlane.xlu0 %1686
        %v1688 = vsub.f32 %v1682, %v1687
        %v1689 = vmul.f32 %v1688, 1.442695
        %v1690 = vpow.pop %v1689
        %v1691 = vsel %vm1684, %v1690, 0.0
        %1692 = vadd.xlane.f32.xlu0 %v1691
        %v1693 = vpop.xlane.xlu0 %1692
        %v1694 = vrcp.pop %v1693
        %v1695 = vmul.f32 %v1693, %v1694
        %v1696 = vsub.f32 1.0, %v1695
        %v1697 = vmul.f32 %v1694, %v1696
        %v1698 = vadd.f32 %v1694, %v1697
        %vm1699 = vweird.f32 %v1693
        %vm1700 = vweird.f32 %v1694
        %vm1701 = vmor %vm1699, %vm1700
        %v1702 = vsel %vm1701, %v1694, %v1698
        %v1703 = vand.u32 2147483647, %v1693
        %vm1704 = vcmp.eq.f32.partialorder %v1703, 8.507059e+37
        %v1705 = vand.u32 %v1693, 2147483648
        %v1706 = vor.u32 1.1754944e-38, %v1705
        %v1707 = vsel %vm1704, %v1706, %v1702
        %v1708 = vmul.f32 %v1690, %v1707
        %v1710 = vsel %vm1684, %v1708, 0
        %1712 = vmatpush.msra.mxu0 0.0
        %1713 = vmatpush.msra.mxu0 0.0
        %1714 = vmatpush.msra.mxu0 0.0
        %1715 = vmatpush.msra.mxu0 0.0
        %1716 = vmatpush.msra.mxu0 0.0
        %1717 = vmatpush.msra.mxu0 0.0
        %1718 = vmatpush.msra.mxu0 0.0
        %1719 = vmatpush.msra.mxu0 0.0
        %1720 = vmatpush.msra.mxu0 0.0
        %1721 = vmatpush.msra.mxu0 0.0
        %1722 = vmatpush.msra.mxu0 0.0
        %1723 = vmatpush.msra.mxu0 0.0
        %1724 = vmatpush.msra.mxu0 0.0
        %1725 = vmatpush.msra.mxu0 0.0
        %1726 = vmatpush.msra.mxu0 0.0
        %1727 = vmatpush.msra.mxu0 %v1638
        %1728 = vmatmul.f32.gmra.mxu0 %v1710
        %v1729 = vpop.f32.mrf.mxu0
        %v1730 = vadd.f32 0.0, %v1729
        %1731 = vdwg.mxu0
        %1732 = vrot.lane.b32.xlu0 %v1640, 96
        %v1733 = vpop.permute.xlu0 %1732
        %1734 = vrot.lane.b32.xlu0 %v1598, 96
        %v1735 = vpop.permute.xlu0 %1734
        %v1736 = vsel %vm1657, %v1733, 0
        %v1738 = vsel %vm1657, %v1735, 0
        %1740 = vmatpush.xpose.msra.mxu0 0.0
        %1741 = vmatpush.xpose.msra.mxu0 0.0
        %1742 = vmatpush.xpose.msra.mxu0 0.0
        %1743 = vmatpush.xpose.msra.mxu0 0.0
        %1744 = vmatpush.xpose.msra.mxu0 0.0
        %1745 = vmatpush.xpose.msra.mxu0 0.0
        %1746 = vmatpush.xpose.msra.mxu0 0.0
        %1747 = vmatpush.xpose.msra.mxu0 0.0
        %1748 = vmatpush.xpose.msra.mxu0 0.0
        %1749 = vmatpush.xpose.msra.mxu0 0.0
        %1750 = vmatpush.xpose.msra.mxu0 0.0
        %1751 = vmatpush.xpose.msra.mxu0 0.0
        %1752 = vmatpush.xpose.msra.mxu0 0.0
        %1753 = vmatpush.xpose.msra.mxu0 0.0
        %1754 = vmatpush.xpose.msra.mxu0 0.0
        %1755 = vmatpush.xpose.msra.mxu0 %v1738
        %1756 = vmatmul.f32.gmra.mxu0 %v1736
        %v1757 = vpop.f32.mrf.mxu0
        %v1758 = vadd.f32 0.0, %v1757
        %1759 = vdwg.mxu0
        %v1760 = vsel %vm1684, %v1758, -inf
        %1761 = vmax.xlane.f32.xlu0 %v1760
        %v1762 = vpop.xlane.xlu0 %1761
        %v1763 = vsub.f32 %v1758, %v1762
        %v1764 = vmul.f32 %v1763, 1.442695
        %v1765 = vpow.pop %v1764
        %v1766 = vsel %vm1684, %v1765, 0.0
        %1767 = vadd.xlane.f32.xlu0 %v1766
        %v1768 = vpop.xlane.xlu0 %1767
        %v1769 = vrcp.pop %v1768
        %v1770 = vmul.f32 %v1768, %v1769
        %v1771 = vsub.f32 1.0, %v1770
        %v1772 = vmul.f32 %v1769, %v1771
        %v1773 = vadd.f32 %v1769, %v1772
        %vm1774 = vweird.f32 %v1768
        %vm1775 = vweird.f32 %v1769
        %vm1776 = vmor %vm1774, %vm1775
        %v1777 = vsel %vm1776, %v1769, %v1773
        %v1778 = vand.u32 2147483647, %v1768
        %vm1779 = vcmp.eq.f32.partialorder %v1778, 8.507059e+37
        %v1780 = vand.u32 %v1768, 2147483648
        %v1781 = vor.u32 1.1754944e-38, %v1780
        %v1782 = vsel %vm1779, %v1781, %v1777
        %v1783 = vmul.f32 %v1765, %v1782
        %1785 = vrot.lane.b32.xlu0 %v1638, 96
        %v1786 = vpop.permute.xlu0 %1785
        %v1789 = vsel %vm1684, %v1783, 0
        %1791 = vmatpush.msra.mxu0 0.0
        %1792 = vmatpush.msra.mxu0 0.0
        %1793 = vmatpush.msra.mxu0 0.0
        %1794 = vmatpush.msra.mxu0 0.0
        %1795 = vmatpush.msra.mxu0 0.0
        %1796 = vmatpush.msra.mxu0 0.0
        %1797 = vmatpush.msra.mxu0 0.0
        %1798 = vmatpush.msra.mxu0 0.0
        %1799 = vmatpush.msra.mxu0 0.0
        %1800 = vmatpush.msra.mxu0 0.0
        %1801 = vmatpush.msra.mxu0 0.0
        %1802 = vmatpush.msra.mxu0 0.0
        %1803 = vmatpush.msra.mxu0 0.0
        %1804 = vmatpush.msra.mxu0 0.0
        %1805 = vmatpush.msra.mxu0 0.0
        %1806 = vmatpush.msra.mxu0 %v1786
        %1807 = vmatmul.f32.gmra.mxu0 %v1789
        %v1808 = vpop.f32.mrf.mxu0
        %v1809 = vadd.f32 0.0, %v1808
        %1810 = vdwg.mxu0
        %v1812 = vsel %vm1657, %v1809, 0
        %1814 = vmatpush.msra.mxu0 0.0
        %1815 = vmatpush.msra.mxu0 0.0
        %1816 = vmatpush.msra.mxu0 0.0
        %1817 = vmatpush.msra.mxu0 0.0
        %1818 = vmatpush.msra.mxu0 0.0
        %1819 = vmatpush.msra.mxu0 0.0
        %1820 = vmatpush.msra.mxu0 0.0
        %1821 = vmatpush.msra.mxu0 0.0
        %1822 = vmatpush.msra.mxu0 0.0
        %1823 = vmatpush.msra.mxu0 0.0
        %1824 = vmatpush.msra.mxu0 0.0
        %1825 = vmatpush.msra.mxu0 0.0
        %1826 = vmatpush.msra.mxu0 %v1648
        %1827 = vmatpush.msra.mxu0 %v1647
        %1828 = vmatpush.msra.mxu0 %v1646
        %1829 = vmatpush.msra.mxu0 %v1645
        %1830 = vmatmul.f32.gmra.mxu0 %v1812
        %v1831 = vpop.f32.mrf.mxu0
        %v1832 = vadd.f32 0.0, %v1831
        %1833 = vdwg.mxu0
        %v1835 = vsel %vm1657, %v1730, 0
        %1837 = vmatpush.msra.mxu0 0.0
        %1838 = vmatpush.msra.mxu0 0.0
        %1839 = vmatpush.msra.mxu0 0.0
        %1840 = vmatpush.msra.mxu0 0.0
        %1841 = vmatpush.msra.mxu0 0.0
        %1842 = vmatpush.msra.mxu0 0.0
        %1843 = vmatpush.msra.mxu0 0.0
        %1844 = vmatpush.msra.mxu0 0.0
        %1845 = vmatpush.msra.mxu0 0.0
        %1846 = vmatpush.msra.mxu0 0.0
        %1847 = vmatpush.msra.mxu0 0.0
        %1848 = vmatpush.msra.mxu0 0.0
        %1849 = vmatpush.msra.mxu0 %v1644
        %1850 = vmatpush.msra.mxu0 %v1643
        %1851 = vmatpush.msra.mxu0 %v1642
        %1852 = vmatpush.msra.mxu0 %v1641
        %1853 = vmatmul.f32.gmra.mxu0 %v1835
        %v1854 = vpop.f32.mrf.mxu0
        %v1855 = vadd.f32 %v1832, %v1854
        %1856 = vdwg.mxu0
        %1857 = vrot.lane.b32.xlu0 %v1640, 64
        %v1858 = vpop.permute.xlu0 %1857
        %1859 = vrot.lane.b32.xlu0 %v1598, 64
        %v1860 = vpop.permute.xlu0 %1859
        %v1861 = vsel %vm1657, %v1858, 0
        %v1863 = vsel %vm1657, %v1860, 0
        %1865 = vmatpush.xpose.msra.mxu0 0.0
        %1866 = vmatpush.xpose.msra.mxu0 0.0
        %1867 = vmatpush.xpose.msra.mxu0 0.0
        %1868 = vmatpush.xpose.msra.mxu0 0.0
        %1869 = vmatpush.xpose.msra.mxu0 0.0
        %1870 = vmatpush.xpose.msra.mxu0 0.0
        %1871 = vmatpush.xpose.msra.mxu0 0.0
        %1872 = vmatpush.xpose.msra.mxu0 0.0
        %1873 = vmatpush.xpose.msra.mxu0 0.0
        %1874 = vmatpush.xpose.msra.mxu0 0.0
        %1875 = vmatpush.xpose.msra.mxu0 0.0
        %1876 = vmatpush.xpose.msra.mxu0 0.0
        %1877 = vmatpush.xpose.msra.mxu0 0.0
        %1878 = vmatpush.xpose.msra.mxu0 0.0
        %1879 = vmatpush.xpose.msra.mxu0 0.0
        %1880 = vmatpush.xpose.msra.mxu0 %v1863
        %1881 = vmatmul.f32.gmra.mxu0 %v1861
        %v1882 = vpop.f32.mrf.mxu0
        %v1883 = vadd.f32 0.0, %v1882
        %1884 = vdwg.mxu0
        %v1885 = vsel %vm1684, %v1883, -inf
        %1886 = vmax.xlane.f32.xlu0 %v1885
        %v1887 = vpop.xlane.xlu0 %1886
        %v1888 = vsub.f32 %v1883, %v1887
        %v1889 = vmul.f32 %v1888, 1.442695
        %v1890 = vpow.pop %v1889
        %v1891 = vsel %vm1684, %v1890, 0.0
        %1892 = vadd.xlane.f32.xlu0 %v1891
        %v1893 = vpop.xlane.xlu0 %1892
        %v1894 = vrcp.pop %v1893
        %v1895 = vmul.f32 %v1893, %v1894
        %v1896 = vsub.f32 1.0, %v1895
        %v1897 = vmul.f32 %v1894, %v1896
        %v1898 = vadd.f32 %v1894, %v1897
        %vm1899 = vweird.f32 %v1893
        %vm1900 = vweird.f32 %v1894
        %vm1901 = vmor %vm1899, %vm1900
        %v1902 = vsel %vm1901, %v1894, %v1898
        %v1903 = vand.u32 2147483647, %v1893
        %vm1904 = vcmp.eq.f32.partialorder %v1903, 8.507059e+37
        %v1905 = vand.u32 %v1893, 2147483648
        %v1906 = vor.u32 1.1754944e-38, %v1905
        %v1907 = vsel %vm1904, %v1906, %v1902
        %v1908 = vmul.f32 %v1890, %v1907
        %1909 = vrot.lane.b32.xlu0 %v1638, 64
        %v1910 = vpop.permute.xlu0 %1909
        %v1913 = vsel %vm1684, %v1908, 0
        %1915 = vmatpush.msra.mxu0 0.0
        %1916 = vmatpush.msra.mxu0 0.0
        %1917 = vmatpush.msra.mxu0 0.0
        %1918 = vmatpush.msra.mxu0 0.0
        %1919 = vmatpush.msra.mxu0 0.0
        %1920 = vmatpush.msra.mxu0 0.0
        %1921 = vmatpush.msra.mxu0 0.0
        %1922 = vmatpush.msra.mxu0 0.0
        %1923 = vmatpush.msra.mxu0 0.0
        %1924 = vmatpush.msra.mxu0 0.0
        %1925 = vmatpush.msra.mxu0 0.0
        %1926 = vmatpush.msra.mxu0 0.0
        %1927 = vmatpush.msra.mxu0 0.0
        %1928 = vmatpush.msra.mxu0 0.0
        %1929 = vmatpush.msra.mxu0 0.0
        %1930 = vmatpush.msra.mxu0 %v1910
        %1931 = vmatmul.f32.gmra.mxu0 %v1913
        %v1932 = vpop.f32.mrf.mxu0
        %v1933 = vadd.f32 0.0, %v1932
        %1934 = vdwg.mxu0
        %v1936 = vsel %vm1657, %v1933, 0
        %1938 = vmatpush.msra.mxu0 0.0
        %1939 = vmatpush.msra.mxu0 0.0
        %1940 = vmatpush.msra.mxu0 0.0
        %1941 = vmatpush.msra.mxu0 0.0
        %1942 = vmatpush.msra.mxu0 0.0
        %1943 = vmatpush.msra.mxu0 0.0
        %1944 = vmatpush.msra.mxu0 0.0
        %1945 = vmatpush.msra.mxu0 0.0
        %1946 = vmatpush.msra.mxu0 0.0
        %1947 = vmatpush.msra.mxu0 0.0
        %1948 = vmatpush.msra.mxu0 0.0
        %1949 = vmatpush.msra.mxu0 0.0
        %1950 = vmatpush.msra.mxu0 %v1652
        %1951 = vmatpush.msra.mxu0 %v1651
        %1952 = vmatpush.msra.mxu0 %v1650
        %1953 = vmatpush.msra.mxu0 %v1649
        %1954 = vmatmul.f32.gmra.mxu0 %v1936
        %v1955 = vpop.f32.mrf.mxu0
        %v1956 = vadd.f32 0.0, %v1955
        %1957 = vdwg.mxu0
        %v1958 = vadd.f32 %v1855, %v1956
        %1959 = vrot.lane.b32.xlu0 %v1640, 32
        %v1960 = vpop.permute.xlu0 %1959
        %1961 = vrot.lane.b32.xlu0 %v1598, 32
        %v1962 = vpop.permute.xlu0 %1961
        %v1963 = vsel %vm1657, %v1960, 0
        %v1965 = vsel %vm1657, %v1962, 0
        %1967 = vmatpush.xpose.msra.mxu0 0.0
        %1968 = vmatpush.xpose.msra.mxu0 0.0
        %1969 = vmatpush.xpose.msra.mxu0 0.0
        %1970 = vmatpush.xpose.msra.mxu0 0.0
        %1971 = vmatpush.xpose.msra.mxu0 0.0
        %1972 = vmatpush.xpose.msra.mxu0 0.0
        %1973 = vmatpush.xpose.msra.mxu0 0.0
        %1974 = vmatpush.xpose.msra.mxu0 0.0
        %1975 = vmatpush.xpose.msra.mxu0 0.0
        %1976 = vmatpush.xpose.msra.mxu0 0.0
        %1977 = vmatpush.xpose.msra.mxu0 0.0
        %1978 = vmatpush.xpose.msra.mxu0 0.0
        %1979 = vmatpush.xpose.msra.mxu0 0.0
        %1980 = vmatpush.xpose.msra.mxu0 0.0
        %1981 = vmatpush.xpose.msra.mxu0 0.0
        %1982 = vmatpush.xpose.msra.mxu0 %v1965
        %1983 = vmatmul.f32.gmra.mxu0 %v1963
        %v1984 = vpop.f32.mrf.mxu0
        %v1985 = vadd.f32 0.0, %v1984
        %1986 = vdwg.mxu0
        %v1987 = vsel %vm1684, %v1985, -inf
        %1988 = vmax.xlane.f32.xlu0 %v1987
        %v1989 = vpop.xlane.xlu0 %1988
        %v1990 = vsub.f32 %v1985, %v1989
        %v1991 = vmul.f32 %v1990, 1.442695
        %v1992 = vpow.pop %v1991
        %v1993 = vsel %vm1684, %v1992, 0.0
        %1994 = vadd.xlane.f32.xlu0 %v1993
        %v1995 = vpop.xlane.xlu0 %1994
        %v1996 = vrcp.pop %v1995
        %v1997 = vmul.f32 %v1995, %v1996
        %v1998 = vsub.f32 1.0, %v1997
        %v1999 = vmul.f32 %v1996, %v1998
        %v2000 = vadd.f32 %v1996, %v1999
        %vm2001 = vweird.f32 %v1995
        %vm2002 = vweird.f32 %v1996
        %vm2003 = vmor %vm2001, %vm2002
        %v2004 = vsel %vm2003, %v1996, %v2000
        %v2005 = vand.u32 2147483647, %v1995
        %vm2006 = vcmp.eq.f32.partialorder %v2005, 8.507059e+37
        %v2007 = vand.u32 %v1995, 2147483648
        %v2008 = vor.u32 1.1754944e-38, %v2007
        %v2009 = vsel %vm2006, %v2008, %v2004
        %v2010 = vmul.f32 %v1992, %v2009
        %2011 = vrot.lane.b32.xlu0 %v1638, 32
        %v2012 = vpop.permute.xlu0 %2011
        %v2015 = vsel %vm1684, %v2010, 0
        %2017 = vmatpush.msra.mxu0 0.0
        %2018 = vmatpush.msra.mxu0 0.0
        %2019 = vmatpush.msra.mxu0 0.0
        %2020 = vmatpush.msra.mxu0 0.0
        %2021 = vmatpush.msra.mxu0 0.0
        %2022 = vmatpush.msra.mxu0 0.0
        %2023 = vmatpush.msra.mxu0 0.0
        %2024 = vmatpush.msra.mxu0 0.0
        %2025 = vmatpush.msra.mxu0 0.0
        %2026 = vmatpush.msra.mxu0 0.0
        %2027 = vmatpush.msra.mxu0 0.0
        %2028 = vmatpush.msra.mxu0 0.0
        %2029 = vmatpush.msra.mxu0 0.0
        %2030 = vmatpush.msra.mxu0 0.0
        %2031 = vmatpush.msra.mxu0 0.0
        %2032 = vmatpush.msra.mxu0 %v2012
        %2033 = vmatmul.f32.gmra.mxu0 %v2015
        %v2034 = vpop.f32.mrf.mxu0
        %v2035 = vadd.f32 0.0, %v2034
        %2036 = vdwg.mxu0
        %v2038 = vsel %vm1657, %v2035, 0
        %2040 = vmatpush.msra.mxu0 0.0
        %2041 = vmatpush.msra.mxu0 0.0
        %2042 = vmatpush.msra.mxu0 0.0
        %2043 = vmatpush.msra.mxu0 0.0
        %2044 = vmatpush.msra.mxu0 0.0
        %2045 = vmatpush.msra.mxu0 0.0
        %2046 = vmatpush.msra.mxu0 0.0
        %2047 = vmatpush.msra.mxu0 0.0
        %2048 = vmatpush.msra.mxu0 0.0
        %2049 = vmatpush.msra.mxu0 0.0
        %2050 = vmatpush.msra.mxu0 0.0
        %2051 = vmatpush.msra.mxu0 0.0
        %2052 = vmatpush.msra.mxu0 %v1656
        %2053 = vmatpush.msra.mxu0 %v1655
        %2054 = vmatpush.msra.mxu0 %v1654
        %2055 = vmatpush.msra.mxu0 %v1653
        %2056 = vmatmul.f32.gmra.mxu0 %v2038
        %v2057 = vpop.f32.mrf.mxu0
        %v2058 = vadd.f32 0.0, %v2057
        %2059 = vdwg.mxu0
        %v2060 = vadd.f32 %v1958, %v2058
        %v2061 = vld [vmem:[#allocation17] sm:$0x1]
        %v2063 = vperm.slane %v2061, 0
        %v2065 = vadd.f32 %v2060, %v2063
        %v2066 = vadd.f32 %v1501, %v2065
        %2067 = vadd.xlane.f32.xlu0 %v2066
        %v2068 = vpop.xlane.xlu0 %2067
        %v2069 = vrcp.pop 128.0
        %v2070 = vmul.f32 128.0, %v2069
        %v2071 = vsub.f32 1.0, %v2070
        %v2072 = vmul.f32 %v2069, %v2071
        %v2073 = vadd.f32 %v2069, %v2072
        %vm2074 = vweird.f32 %v2069
        %v2075 = vsel %vm2074, %v2069, %v2073
        %v2076 = vmul.f32 %v2068, %v2075
        %v2077 = vsub.f32 %v2066, %v2076
        %v2078 = vmul.f32 %v2077, %v2077
        %2079 = vadd.xlane.f32.xlu0 %v2078
        %v2080 = vpop.xlane.xlu0 %2079
        %v2081 = vmul.f32 %v2080, %v2075
        %v2082 = vadd.f32 %v2081, 1e-05
        %v2083 = vrsqrt.pop %v2082
        %v2084 = vmul.f32 %v2083, %v2082
        %v2085 = vmul.f32 %v2084, %v2083
        %v2086 = vmul.f32 0.5, %v2085
        %v2087 = vsub.f32 1.5, %v2086
        %v2088 = vmul.f32 %v2083, %v2087
        %vm2089 = vweird.f32 %v2082
        %vm2090 = vweird.f32 %v2083
        %vm2091 = vmor %vm2089, %vm2090
        %v2092 = vsel %vm2091, %v2083, %v2088
        %v2093 = vmul.f32 %v2077, %v2092
        %v2094 = vld [vmem:[#allocation19] sm:$0x1]
        %v2096 = vperm.slane %v2094, 0
        %v2098 = vmul.f32 %v2093, %v2096
        %v2099 = vld [vmem:[%s27] sm:$0x1]
        %v2101 = vperm.slane %v2099, 0
        %v2103 = vadd.f32 %v2098, %v2101
        %v2104 = vadd.f32 %v1502, %v1511
        %v2105 = vadd.f32 %v1503, %v1512
        %v2106 = vadd.f32 %v1504, %v1513
        %v2107 = vadd.f32 %v1505, %v1514
        %v2108 = vadd.f32 %v1506, %v1515
        %v2109 = vadd.f32 %v1507, %v1516
        %v2110 = vadd.f32 %v1508, %v1517
        %v2111 = vadd.f32 %v1509, %v1518
        %v2112 = vadd.f32 %v2103, %v1510
        %v2113 = vld [vmem:[%s29] sm:$0xff]
        %v2114 = vld [vmem:[%s29 + $0x8] sm:$0xff]
        %v2115 = vld [vmem:[%s29 + $0x10] sm:$0xff]
        %v2116 = vld [vmem:[%s29 + $0x18] sm:$0xff]
        %v2117 = vld [vmem:[%s29 + $0x20] sm:$0xff]
        %v2118 = vld [vmem:[%s29 + $0x28] sm:$0xff]
        %v2119 = vld [vmem:[%s29 + $0x30] sm:$0xff]
        %v2120 = vld [vmem:[%s29 + $0x38] sm:$0xff]
        %v2121 = vld [vmem:[%s29 + $0x40] sm:$0xff]
        %v2122 = vld [vmem:[%s29 + $0x48] sm:$0xff]
        %v2123 = vld [vmem:[%s29 + $0x50] sm:$0xff]
        %v2124 = vld [vmem:[%s29 + $0x58] sm:$0xff]
        %v2125 = vld [vmem:[%s29 + $0x60] sm:$0xff]
        %v2126 = vld [vmem:[%s29 + $0x68] sm:$0xff]
        %v2127 = vld [vmem:[%s29 + $0x70] sm:$0xff]
        %v2128 = vld [vmem:[%s29 + $0x78] sm:$0xff]
        %v2129 = vld [vmem:[%s31] sm:$0x1]
        %v2131 = vperm.slane %v2129, 0
        %2133 = vmatpush.msra.mxu0 %v2128
        %2134 = vmatpush.msra.mxu0 %v2127
        %2135 = vmatpush.msra.mxu0 %v2126
        %2136 = vmatpush.msra.mxu0 %v2125
        %2137 = vmatpush.msra.mxu0 %v2124
        %2138 = vmatpush.msra.mxu0 %v2123
        %2139 = vmatpush.msra.mxu0 %v2122
        %2140 = vmatpush.msra.mxu0 %v2121
        %2141 = vmatpush.msra.mxu0 %v2120
        %2142 = vmatpush.msra.mxu0 %v2119
        %2143 = vmatpush.msra.mxu0 %v2118
        %2144 = vmatpush.msra.mxu0 %v2117
        %2145 = vmatpush.msra.mxu0 %v2116
        %2146 = vmatpush.msra.mxu0 %v2115
        %2147 = vmatpush.msra.mxu0 %v2114
        %2148 = vmatpush.msra.mxu0 %v2113
        %2149 = vmatmul.f32.gmra.mxu0 %v2112
        %v2150 = vpop.f32.mrf.mxu0
        %v2151 = vadd.f32 %v2131, %v2150
        %2152 = vdwg.mxu0
        %v2153 = vld [vmem:[%s33] sm:$0xff]
        %v2154 = vld [vmem:[%s33 + $0x8] sm:$0xff]
        %v2155 = vld [vmem:[%s33 + $0x10] sm:$0xff]
        %v2156 = vld [vmem:[%s33 + $0x18] sm:$0xff]
        %v2157 = vld [vmem:[%s33 + $0x20] sm:$0xff]
        %v2158 = vld [vmem:[%s33 + $0x28] sm:$0xff]
        %v2159 = vld [vmem:[%s33 + $0x30] sm:$0xff]
        %v2160 = vld [vmem:[%s33 + $0x38] sm:$0xff]
        %v2161 = vld [vmem:[%s33 + $0x40] sm:$0xff]
        %v2162 = vld [vmem:[%s33 + $0x48] sm:$0xff]
        %v2163 = vld [vmem:[%s33 + $0x50] sm:$0xff]
        %v2164 = vld [vmem:[%s33 + $0x58] sm:$0xff]
        %v2165 = vld [vmem:[%s33 + $0x60] sm:$0xff]
        %v2166 = vld [vmem:[%s33 + $0x68] sm:$0xff]
        %v2167 = vld [vmem:[%s33 + $0x70] sm:$0xff]
        %v2168 = vld [vmem:[%s33 + $0x78] sm:$0xff]
        %v2169 = vld [vmem:[%s35] sm:$0x1]
        %v2171 = vperm.slane %v2169, 0
        %2173 = vmatpush.msra.mxu0 %v2168
        %2174 = vmatpush.msra.mxu0 %v2167
        %2175 = vmatpush.msra.mxu0 %v2166
        %2176 = vmatpush.msra.mxu0 %v2165
        %2177 = vmatpush.msra.mxu0 %v2164
        %2178 = vmatpush.msra.mxu0 %v2163
        %2179 = vmatpush.msra.mxu0 %v2162
        %2180 = vmatpush.msra.mxu0 %v2161
        %2181 = vmatpush.msra.mxu0 %v2160
        %2182 = vmatpush.msra.mxu0 %v2159
        %2183 = vmatpush.msra.mxu0 %v2158
        %2184 = vmatpush.msra.mxu0 %v2157
        %2185 = vmatpush.msra.mxu0 %v2156
        %2186 = vmatpush.msra.mxu0 %v2155
        %2187 = vmatpush.msra.mxu0 %v2154
        %2188 = vmatpush.msra.mxu0 %v2153
        %2189 = vmatmul.f32.gmra.mxu0 %v2104
        %v2190 = vpop.f32.mrf.mxu0
        %v2191 = vadd.f32 %v2171, %v2190
        %2192 = vmatmul.f32.gmra.mxu0 %v2105
        %v2193 = vpop.f32.mrf.mxu0
        %v2194 = vadd.f32 %v2171, %v2193
        %2195 = vmatmul.f32.gmra.mxu0 %v2106
        %v2196 = vpop.f32.mrf.mxu0
        %v2197 = vadd.f32 %v2171, %v2196
        %2198 = vmatmul.f32.gmra.mxu0 %v2107
        %v2199 = vpop.f32.mrf.mxu0
        %v2200 = vadd.f32 %v2171, %v2199
        %2201 = vmatmul.f32.gmra.mxu0 %v2108
        %v2202 = vpop.f32.mrf.mxu0
        %v2203 = vadd.f32 %v2171, %v2202
        %2204 = vmatmul.f32.gmra.mxu0 %v2109
        %v2205 = vpop.f32.mrf.mxu0
        %v2206 = vadd.f32 %v2171, %v2205
        %2207 = vmatmul.f32.gmra.mxu0 %v2110
        %v2208 = vpop.f32.mrf.mxu0
        %v2209 = vadd.f32 %v2171, %v2208
        %2210 = vmatmul.f32.gmra.mxu0 %v2111
        %v2211 = vpop.f32.mrf.mxu0
        %v2212 = vadd.f32 %v2171, %v2211
        %2213 = vdwg.mxu0
        %v2214 = vld [vmem:[%s37] sm:$0xff]
        %v2215 = vld [vmem:[%s37 + $0x8] sm:$0xff]
        %v2216 = vld [vmem:[%s37 + $0x10] sm:$0xff]
        %v2217 = vld [vmem:[%s37 + $0x18] sm:$0xff]
        %v2218 = vld [vmem:[%s37 + $0x20] sm:$0xff]
        %v2219 = vld [vmem:[%s37 + $0x28] sm:$0xff]
        %v2220 = vld [vmem:[%s37 + $0x30] sm:$0xff]
        %v2221 = vld [vmem:[%s37 + $0x38] sm:$0xff]
        %v2222 = vld [vmem:[%s37 + $0x40] sm:$0xff]
        %v2223 = vld [vmem:[%s37 + $0x48] sm:$0xff]
        %v2224 = vld [vmem:[%s37 + $0x50] sm:$0xff]
        %v2225 = vld [vmem:[%s37 + $0x58] sm:$0xff]
        %v2226 = vld [vmem:[%s37 + $0x60] sm:$0xff]
        %v2227 = vld [vmem:[%s37 + $0x68] sm:$0xff]
        %v2228 = vld [vmem:[%s37 + $0x70] sm:$0xff]
        %v2229 = vld [vmem:[%s37 + $0x78] sm:$0xff]
        %v2230 = vld [vmem:[%s39] sm:$0x1]
        %v2232 = vperm.slane %v2230, 0
        %2234 = vmatpush.msra.mxu0 %v2229
        %2235 = vmatpush.msra.mxu0 %v2228
        %2236 = vmatpush.msra.mxu0 %v2227
        %2237 = vmatpush.msra.mxu0 %v2226
        %2238 = vmatpush.msra.mxu0 %v2225
        %2239 = vmatpush.msra.mxu0 %v2224
        %2240 = vmatpush.msra.mxu0 %v2223
        %2241 = vmatpush.msra.mxu0 %v2222
        %2242 = vmatpush.msra.mxu0 %v2221
        %2243 = vmatpush.msra.mxu0 %v2220
        %2244 = vmatpush.msra.mxu0 %v2219
        %2245 = vmatpush.msra.mxu0 %v2218
        %2246 = vmatpush.msra.mxu0 %v2217
        %2247 = vmatpush.msra.mxu0 %v2216
        %2248 = vmatpush.msra.mxu0 %v2215
        %2249 = vmatpush.msra.mxu0 %v2214
        %2250 = vmatmul.f32.gmra.mxu0 %v1502
        %v2251 = vpop.f32.mrf.mxu0
        %v2252 = vadd.f32 %v2232, %v2251
        %2253 = vmatmul.f32.gmra.mxu0 %v1503
        %v2254 = vpop.f32.mrf.mxu0
        %v2255 = vadd.f32 %v2232, %v2254
        %2256 = vmatmul.f32.gmra.mxu0 %v1504
        %v2257 = vpop.f32.mrf.mxu0
        %v2258 = vadd.f32 %v2232, %v2257
        %2259 = vmatmul.f32.gmra.mxu0 %v1505
        %v2260 = vpop.f32.mrf.mxu0
        %v2261 = vadd.f32 %v2232, %v2260
        %2262 = vmatmul.f32.gmra.mxu0 %v1506
        %v2263 = vpop.f32.mrf.mxu0
        %v2264 = vadd.f32 %v2232, %v2263
        %2265 = vmatmul.f32.gmra.mxu0 %v1507
        %v2266 = vpop.f32.mrf.mxu0
        %v2267 = vadd.f32 %v2232, %v2266
        %2268 = vmatmul.f32.gmra.mxu0 %v1508
        %v2269 = vpop.f32.mrf.mxu0
        %v2270 = vadd.f32 %v2232, %v2269
        %2271 = vmatmul.f32.gmra.mxu0 %v1509
        %v2272 = vpop.f32.mrf.mxu0
        %v2273 = vadd.f32 %v2232, %v2272
        %2274 = vdwg.mxu0
        %v2275 = vmul.f32 %v2151, 0.25
        %v2276 = vld [vmem:[%s41] sm:$0xff]
        %v2277 = vld [vmem:[%s41 + $0x8] sm:$0xff]
        %v2278 = vld [vmem:[%s41 + $0x10] sm:$0xff]
        %v2279 = vld [vmem:[%s41 + $0x18] sm:$0xff]
        %v2280 = vld [vmem:[%s41 + $0x20] sm:$0xff]
        %v2281 = vld [vmem:[%s41 + $0x28] sm:$0xff]
        %v2282 = vld [vmem:[%s41 + $0x30] sm:$0xff]
        %v2283 = vld [vmem:[%s41 + $0x38] sm:$0xff]
        %vm2284 = vcmask 130048
        %v2286 = vsel %vm2284, %v2275, 0
        %v2289 = vsel %vm2284, %v2191, 0
        %v2292 = vsel %vm2284, %v2194, 0
        %v2295 = vsel %vm2284, %v2197, 0
        %v2298 = vsel %vm2284, %v2200, 0
        %v2301 = vsel %vm2284, %v2203, 0
        %v2304 = vsel %vm2284, %v2206, 0
        %v2307 = vsel %vm2284, %v2209, 0
        %v2310 = vsel %vm2284, %v2212, 0
        %2312 = vmatpush.xpose.msra.mxu0 0.0
        %2313 = vmatpush.xpose.msra.mxu0 0.0
        %2314 = vmatpush.xpose.msra.mxu0 0.0
        %2315 = vmatpush.xpose.msra.mxu0 0.0
        %2316 = vmatpush.xpose.msra.mxu0 0.0
        %2317 = vmatpush.xpose.msra.mxu0 0.0
        %2318 = vmatpush.xpose.msra.mxu0 0.0
        %2319 = vmatpush.xpose.msra.mxu0 0.0
        %2320 = vmatpush.xpose.msra.mxu0 %v2310
        %2321 = vmatpush.xpose.msra.mxu0 %v2307
        %2322 = vmatpush.xpose.msra.mxu0 %v2304
        %2323 = vmatpush.xpose.msra.mxu0 %v2301
        %2324 = vmatpush.xpose.msra.mxu0 %v2298
        %2325 = vmatpush.xpose.msra.mxu0 %v2295
        %2326 = vmatpush.xpose.msra.mxu0 %v2292
        %2327 = vmatpush.xpose.msra.mxu0 %v2289
        %2328 = vmatmul.f32.gmra.mxu0 %v2286
        %v2329 = vpop.f32.mrf.mxu0
        %v2330 = vadd.f32 0.0, %v2329
        %2331 = vdwg.mxu0
        %vm2332 = vcmask 523264
        %v2333 = vsel %vm2332, %v2330, -inf
        %2334 = vmax.xlane.f32.xlu0 %v2333
        %v2335 = vpop.xlane.xlu0 %2334
        %v2336 = vsub.f32 %v2330, %v2335
        %v2337 = vmul.f32 %v2336, 1.442695
        %v2338 = vpow.pop %v2337
        %v2339 = vsel %vm2332, %v2338, 0.0
        %2340 = vadd.xlane.f32.xlu0 %v2339
        %v2341 = vpop.xlane.xlu0 %2340
        %v2342 = vrcp.pop %v2341
        %v2343 = vmul.f32 %v2341, %v2342
        %v2344 = vsub.f32 1.0, %v2343
        %v2345 = vmul.f32 %v2342, %v2344
        %v2346 = vadd.f32 %v2342, %v2345
        %vm2347 = vweird.f32 %v2341
        %vm2348 = vweird.f32 %v2342
        %vm2349 = vmor %vm2347, %vm2348
        %v2350 = vsel %vm2349, %v2342, %v2346
        %v2351 = vand.u32 2147483647, %v2341
        %vm2352 = vcmp.eq.f32.partialorder %v2351, 8.507059e+37
        %v2353 = vand.u32 %v2341, 2147483648
        %v2354 = vor.u32 1.1754944e-38, %v2353
        %v2355 = vsel %vm2352, %v2354, %v2350
        %v2356 = vmul.f32 %v2338, %v2355
        %v2358 = vsel %vm2332, %v2356, 0
        %2360 = vmatpush.msra.mxu0 0.0
        %2361 = vmatpush.msra.mxu0 0.0
        %2362 = vmatpush.msra.mxu0 0.0
        %2363 = vmatpush.msra.mxu0 0.0
        %2364 = vmatpush.msra.mxu0 0.0
        %2365 = vmatpush.msra.mxu0 0.0
        %2366 = vmatpush.msra.mxu0 0.0
        %2367 = vmatpush.msra.mxu0 0.0
        %2368 = vmatpush.msra.mxu0 %v2273
        %2369 = vmatpush.msra.mxu0 %v2270
        %2370 = vmatpush.msra.mxu0 %v2267
        %2371 = vmatpush.msra.mxu0 %v2264
        %2372 = vmatpush.msra.mxu0 %v2261
        %2373 = vmatpush.msra.mxu0 %v2258
        %2374 = vmatpush.msra.mxu0 %v2255
        %2375 = vmatpush.msra.mxu0 %v2252
        %2376 = vmatmul.f32.gmra.mxu0 %v2358
        %v2377 = vpop.f32.mrf.mxu0
        %v2378 = vadd.f32 0.0, %v2377
        %2379 = vdwg.mxu0
        %2380 = vrot.lane.b32.xlu0 %v2275, 112
        %v2381 = vpop.permute.xlu0 %2380
        %2382 = vrot.lane.b32.xlu0 %v2191, 112
        %v2383 = vpop.permute.xlu0 %2382
        %2384 = vrot.lane.b32.xlu0 %v2194, 112
        %v2385 = vpop.permute.xlu0 %2384
        %2386 = vrot.lane.b32.xlu0 %v2197, 112
        %v2387 = vpop.permute.xlu0 %2386
        %2388 = vrot.lane.b32.xlu0 %v2200, 112
        %v2389 = vpop.permute.xlu0 %2388
        %2390 = vrot.lane.b32.xlu0 %v2203, 112
        %v2391 = vpop.permute.xlu0 %2390
        %2392 = vrot.lane.b32.xlu0 %v2206, 112
        %v2393 = vpop.permute.xlu0 %2392
        %2394 = vrot.lane.b32.xlu0 %v2209, 112
        %v2395 = vpop.permute.xlu0 %2394
        %2396 = vrot.lane.b32.xlu0 %v2212, 112
        %v2397 = vpop.permute.xlu0 %2396
        %v2398 = vsel %vm2284, %v2381, 0
        %v2400 = vsel %vm2284, %v2383, 0
        %v2402 = vsel %vm2284, %v2385, 0
        %v2404 = vsel %vm2284, %v2387, 0
        %v2406 = vsel %vm2284, %v2389, 0
        %v2408 = vsel %vm2284, %v2391, 0
        %v2410 = vsel %vm2284, %v2393, 0
        %v2412 = vsel %vm2284, %v2395, 0
        %v2414 = vsel %vm2284, %v2397, 0
        %2416 = vmatpush.xpose.msra.mxu0 0.0
        %2417 = vmatpush.xpose.msra.mxu0 0.0
        %2418 = vmatpush.xpose.msra.mxu0 0.0
        %2419 = vmatpush.xpose.msra.mxu0 0.0
        %2420 = vmatpush.xpose.msra.mxu0 0.0
        %2421 = vmatpush.xpose.msra.mxu0 0.0
        %2422 = vmatpush.xpose.msra.mxu0 0.0
        %2423 = vmatpush.xpose.msra.mxu0 0.0
        %2424 = vmatpush.xpose.msra.mxu0 %v2414
        %2425 = vmatpush.xpose.msra.mxu0 %v2412
        %2426 = vmatpush.xpose.msra.mxu0 %v2410
        %2427 = vmatpush.xpose.msra.mxu0 %v2408
        %2428 = vmatpush.xpose.msra.mxu0 %v2406
        %2429 = vmatpush.xpose.msra.mxu0 %v2404
        %2430 = vmatpush.xpose.msra.mxu0 %v2402
        %2431 = vmatpush.xpose.msra.mxu0 %v2400
        %2432 = vmatmul.f32.gmra.mxu0 %v2398
        %v2433 = vpop.f32.mrf.mxu0
        %v2434 = vadd.f32 0.0, %v2433
        %2435 = vdwg.mxu0
        %v2436 = vsel %vm2332, %v2434, -inf
        %2437 = vmax.xlane.f32.xlu0 %v2436
        %v2438 = vpop.xlane.xlu0 %2437
        %v2439 = vsub.f32 %v2434, %v2438
        %v2440 = vmul.f32 %v2439, 1.442695
        %v2441 = vpow.pop %v2440
        %v2442 = vsel %vm2332, %v2441, 0.0
        %2443 = vadd.xlane.f32.xlu0 %v2442
        %v2444 = vpop.xlane.xlu0 %2443
        %v2445 = vrcp.pop %v2444
        %v2446 = vmul.f32 %v2444, %v2445
        %v2447 = vsub.f32 1.0, %v2446
        %v2448 = vmul.f32 %v2445, %v2447
        %v2449 = vadd.f32 %v2445, %v2448
        %vm2450 = vweird.f32 %v2444
        %vm2451 = vweird.f32 %v2445
        %vm2452 = vmor %vm2450, %vm2451
        %v2453 = vsel %vm2452, %v2445, %v2449
        %v2454 = vand.u32 2147483647, %v2444
        %vm2455 = vcmp.eq.f32.partialorder %v2454, 8.507059e+37
        %v2456 = vand.u32 %v2444, 2147483648
        %v2457 = vor.u32 1.1754944e-38, %v2456
        %v2458 = vsel %vm2455, %v2457, %v2453
        %v2459 = vmul.f32 %v2441, %v2458
        %2468 = vrot.lane.b32.xlu0 %v2252, 112
        %v2469 = vpop.permute.xlu0 %2468
        %2470 = vrot.lane.b32.xlu0 %v2255, 112
        %v2471 = vpop.permute.xlu0 %2470
        %2472 = vrot.lane.b32.xlu0 %v2258, 112
        %v2473 = vpop.permute.xlu0 %2472
        %2474 = vrot.lane.b32.xlu0 %v2261, 112
        %v2475 = vpop.permute.xlu0 %2474
        %2476 = vrot.lane.b32.xlu0 %v2264, 112
        %v2477 = vpop.permute.xlu0 %2476
        %2478 = vrot.lane.b32.xlu0 %v2267, 112
        %v2479 = vpop.permute.xlu0 %2478
        %2480 = vrot.lane.b32.xlu0 %v2270, 112
        %v2481 = vpop.permute.xlu0 %2480
        %2482 = vrot.lane.b32.xlu0 %v2273, 112
        %v2483 = vpop.permute.xlu0 %2482
        %v2493 = vsel %vm2332, %v2459, 0
        %2495 = vmatpush.msra.mxu0 0.0
        %2496 = vmatpush.msra.mxu0 0.0
        %2497 = vmatpush.msra.mxu0 0.0
        %2498 = vmatpush.msra.mxu0 0.0
        %2499 = vmatpush.msra.mxu0 0.0
        %2500 = vmatpush.msra.mxu0 0.0
        %2501 = vmatpush.msra.mxu0 0.0
        %2502 = vmatpush.msra.mxu0 0.0
        %2503 = vmatpush.msra.mxu0 %v2483
        %2504 = vmatpush.msra.mxu0 %v2481
        %2505 = vmatpush.msra.mxu0 %v2479
        %2506 = vmatpush.msra.mxu0 %v2477
        %2507 = vmatpush.msra.mxu0 %v2475
        %2508 = vmatpush.msra.mxu0 %v2473
        %2509 = vmatpush.msra.mxu0 %v2471
        %2510 = vmatpush.msra.mxu0 %v2469
        %2511 = vmatmul.f32.gmra.mxu0 %v2493
        %v2512 = vpop.f32.mrf.mxu0
        %v2513 = vadd.f32 0.0, %v2512
        %2514 = vdwg.mxu0
        %v2516 = vsel %vm2284, %v2513, 0
        %2518 = vmatpush.msra.mxu0 0.0
        %2519 = vmatpush.msra.mxu0 0.0
        %2520 = vmatpush.msra.mxu0 0.0
        %2521 = vmatpush.msra.mxu0 0.0
        %2522 = vmatpush.msra.mxu0 0.0
        %2523 = vmatpush.msra.mxu0 0.0
        %2524 = vmatpush.msra.mxu0 0.0
        %2525 = vmatpush.msra.mxu0 0.0
        %2526 = vmatpush.msra.mxu0 0.0
        %2527 = vmatpush.msra.mxu0 0.0
        %2528 = vmatpush.msra.mxu0 0.0
        %2529 = vmatpush.msra.mxu0 0.0
        %2530 = vmatpush.msra.mxu0 0.0
        %2531 = vmatpush.msra.mxu0 0.0
        %2532 = vmatpush.msra.mxu0 %v2279
        %2533 = vmatpush.msra.mxu0 %v2278
        %2534 = vmatmul.f32.gmra.mxu0 %v2516
        %v2535 = vpop.f32.mrf.mxu0
        %v2536 = vadd.f32 0.0, %v2535
        %2537 = vdwg.mxu0
        %v2539 = vsel %vm2284, %v2378, 0
        %2541 = vmatpush.msra.mxu0 0.0
        %2542 = vmatpush.msra.mxu0 0.0
        %2543 = vmatpush.msra.mxu0 0.0
        %2544 = vmatpush.msra.mxu0 0.0
        %2545 = vmatpush.msra.mxu0 0.0
        %2546 = vmatpush.msra.mxu0 0.0
        %2547 = vmatpush.msra.mxu0 0.0
        %2548 = vmatpush.msra.mxu0 0.0
        %2549 = vmatpush.msra.mxu0 0.0
        %2550 = vmatpush.msra.mxu0 0.0
        %2551 = vmatpush.msra.mxu0 0.0
        %2552 = vmatpush.msra.mxu0 0.0
        %2553 = vmatpush.msra.mxu0 0.0
        %2554 = vmatpush.msra.mxu0 0.0
        %2555 = vmatpush.msra.mxu0 %v2277
        %2556 = vmatpush.msra.mxu0 %v2276
        %2557 = vmatmul.f32.gmra.mxu0 %v2539
        %v2558 = vpop.f32.mrf.mxu0
        %v2559 = vadd.f32 %v2536, %v2558
        %2560 = vdwg.mxu0
        %2561 = vrot.lane.b32.xlu0 %v2275, 96
        %v2562 = vpop.permute.xlu0 %2561
        %2563 = vrot.lane.b32.xlu0 %v2191, 96
        %v2564 = vpop.permute.xlu0 %2563
        %2565 = vrot.lane.b32.xlu0 %v2194, 96
        %v2566 = vpop.permute.xlu0 %2565
        %2567 = vrot.lane.b32.xlu0 %v2197, 96
        %v2568 = vpop.permute.xlu0 %2567
        %2569 = vrot.lane.b32.xlu0 %v2200, 96
        %v2570 = vpop.permute.xlu0 %2569
        %2571 = vrot.lane.b32.xlu0 %v2203, 96
        %v2572 = vpop.permute.xlu0 %2571
        %2573 = vrot.lane.b32.xlu0 %v2206, 96
        %v2574 = vpop.permute.xlu0 %2573
        %2575 = vrot.lane.b32.xlu0 %v2209, 96
        %v2576 = vpop.permute.xlu0 %2575
        %2577 = vrot.lane.b32.xlu0 %v2212, 96
        %v2578 = vpop.permute.xlu0 %2577
        %v2579 = vsel %vm2284, %v2562, 0
        %v2581 = vsel %vm2284, %v2564, 0
        %v2583 = vsel %vm2284, %v2566, 0
        %v2585 = vsel %vm2284, %v2568, 0
        %v2587 = vsel %vm2284, %v2570, 0
        %v2589 = vsel %vm2284, %v2572, 0
        %v2591 = vsel %vm2284, %v2574, 0
        %v2593 = vsel %vm2284, %v2576, 0
        %v2595 = vsel %vm2284, %v2578, 0
        %2597 = vmatpush.xpose.msra.mxu0 0.0
        %2598 = vmatpush.xpose.msra.mxu0 0.0
        %2599 = vmatpush.xpose.msra.mxu0 0.0
        %2600 = vmatpush.xpose.msra.mxu0 0.0
        %2601 = vmatpush.xpose.msra.mxu0 0.0
        %2602 = vmatpush.xpose.msra.mxu0 0.0
        %2603 = vmatpush.xpose.msra.mxu0 0.0
        %2604 = vmatpush.xpose.msra.mxu0 0.0
        %2605 = vmatpush.xpose.msra.mxu0 %v2595
        %2606 = vmatpush.xpose.msra.mxu0 %v2593
        %2607 = vmatpush.xpose.msra.mxu0 %v2591
        %2608 = vmatpush.xpose.msra.mxu0 %v2589
        %2609 = vmatpush.xpose.msra.mxu0 %v2587
        %2610 = vmatpush.xpose.msra.mxu0 %v2585
        %2611 = vmatpush.xpose.msra.mxu0 %v2583
        %2612 = vmatpush.xpose.msra.mxu0 %v2581
        %2613 = vmatmul.f32.gmra.mxu0 %v2579
        %v2614 = vpop.f32.mrf.mxu0
        %v2615 = vadd.f32 0.0, %v2614
        %2616 = vdwg.mxu0
        %v2617 = vsel %vm2332, %v2615, -inf
        %2618 = vmax.xlane.f32.xlu0 %v2617
        %v2619 = vpop.xlane.xlu0 %2618
        %v2620 = vsub.f32 %v2615, %v2619
        %v2621 = vmul.f32 %v2620, 1.442695
        %v2622 = vpow.pop %v2621
        %v2623 = vsel %vm2332, %v2622, 0.0
        %2624 = vadd.xlane.f32.xlu0 %v2623
        %v2625 = vpop.xlane.xlu0 %2624
        %v2626 = vrcp.pop %v2625
        %v2627 = vmul.f32 %v2625, %v2626
        %v2628 = vsub.f32 1.0, %v2627
        %v2629 = vmul.f32 %v2626, %v2628
        %v2630 = vadd.f32 %v2626, %v2629
        %vm2631 = vweird.f32 %v2625
        %vm2632 = vweird.f32 %v2626
        %vm2633 = vmor %vm2631, %vm2632
        %v2634 = vsel %vm2633, %v2626, %v2630
        %v2635 = vand.u32 2147483647, %v2625
        %vm2636 = vcmp.eq.f32.partialorder %v2635, 8.507059e+37
        %v2637 = vand.u32 %v2625, 2147483648
        %v2638 = vor.u32 1.1754944e-38, %v2637
        %v2639 = vsel %vm2636, %v2638, %v2634
        %v2640 = vmul.f32 %v2622, %v2639
        %2641 = vrot.lane.b32.xlu0 %v2252, 96
        %v2642 = vpop.permute.xlu0 %2641
        %2643 = vrot.lane.b32.xlu0 %v2255, 96
        %v2644 = vpop.permute.xlu0 %2643
        %2645 = vrot.lane.b32.xlu0 %v2258, 96
        %v2646 = vpop.permute.xlu0 %2645
        %2647 = vrot.lane.b32.xlu0 %v2261, 96
        %v2648 = vpop.permute.xlu0 %2647
        %2649 = vrot.lane.b32.xlu0 %v2264, 96
        %v2650 = vpop.permute.xlu0 %2649
        %2651 = vrot.lane.b32.xlu0 %v2267, 96
        %v2652 = vpop.permute.xlu0 %2651
        %2653 = vrot.lane.b32.xlu0 %v2270, 96
        %v2654 = vpop.permute.xlu0 %2653
        %2655 = vrot.lane.b32.xlu0 %v2273, 96
        %v2656 = vpop.permute.xlu0 %2655
        %v2666 = vsel %vm2332, %v2640, 0
        %2668 = vmatpush.msra.mxu0 0.0
        %2669 = vmatpush.msra.mxu0 0.0
        %2670 = vmatpush.msra.mxu0 0.0
        %2671 = vmatpush.msra.mxu0 0.0
        %2672 = vmatpush.msra.mxu0 0.0
        %2673 = vmatpush.msra.mxu0 0.0
        %2674 = vmatpush.msra.mxu0 0.0
        %2675 = vmatpush.msra.mxu0 0.0
        %2676 = vmatpush.msra.mxu0 %v2656
        %2677 = vmatpush.msra.mxu0 %v2654
        %2678 = vmatpush.msra.mxu0 %v2652
        %2679 = vmatpush.msra.mxu0 %v2650
        %2680 = vmatpush.msra.mxu0 %v2648
        %2681 = vmatpush.msra.mxu0 %v2646
        %2682 = vmatpush.msra.mxu0 %v2644
        %2683 = vmatpush.msra.mxu0 %v2642
        %2684 = vmatmul.f32.gmra.mxu0 %v2666
        %v2685 = vpop.f32.mrf.mxu0
        %v2686 = vadd.f32 0.0, %v2685
        %2687 = vdwg.mxu0
        %v2689 = vsel %vm2284, %v2686, 0
        %2691 = vmatpush.msra.mxu0 0.0
        %2692 = vmatpush.msra.mxu0 0.0
        %2693 = vmatpush.msra.mxu0 0.0
        %2694 = vmatpush.msra.mxu0 0.0
        %2695 = vmatpush.msra.mxu0 0.0
        %2696 = vmatpush.msra.mxu0 0.0
        %2697 = vmatpush.msra.mxu0 0.0
        %2698 = vmatpush.msra.mxu0 0.0
        %2699 = vmatpush.msra.mxu0 0.0
        %2700 = vmatpush.msra.mxu0 0.0
        %2701 = vmatpush.msra.mxu0 0.0
        %2702 = vmatpush.msra.mxu0 0.0
        %2703 = vmatpush.msra.mxu0 0.0
        %2704 = vmatpush.msra.mxu0 0.0
        %2705 = vmatpush.msra.mxu0 %v2281
        %2706 = vmatpush.msra.mxu0 %v2280
        %2707 = vmatmul.f32.gmra.mxu0 %v2689
        %v2708 = vpop.f32.mrf.mxu0
        %v2709 = vadd.f32 0.0, %v2708
        %2710 = vdwg.mxu0
        %v2711 = vadd.f32 %v2559, %v2709
        %2712 = vrot.lane.b32.xlu0 %v2275, 80
        %v2713 = vpop.permute.xlu0 %2712
        %2714 = vrot.lane.b32.xlu0 %v2191, 80
        %v2715 = vpop.permute.xlu0 %2714
        %2716 = vrot.lane.b32.xlu0 %v2194, 80
        %v2717 = vpop.permute.xlu0 %2716
        %2718 = vrot.lane.b32.xlu0 %v2197, 80
        %v2719 = vpop.permute.xlu0 %2718
        %2720 = vrot.lane.b32.xlu0 %v2200, 80
        %v2721 = vpop.permute.xlu0 %2720
        %2722 = vrot.lane.b32.xlu0 %v2203, 80
        %v2723 = vpop.permute.xlu0 %2722
        %2724 = vrot.lane.b32.xlu0 %v2206, 80
        %v2725 = vpop.permute.xlu0 %2724
        %2726 = vrot.lane.b32.xlu0 %v2209, 80
        %v2727 = vpop.permute.xlu0 %2726
        %2728 = vrot.lane.b32.xlu0 %v2212, 80
        %v2729 = vpop.permute.xlu0 %2728
        %v2730 = vsel %vm2284, %v2713, 0
        %v2732 = vsel %vm2284, %v2715, 0
        %v2734 = vsel %vm2284, %v2717, 0
        %v2736 = vsel %vm2284, %v2719, 0
        %v2738 = vsel %vm2284, %v2721, 0
        %v2740 = vsel %vm2284, %v2723, 0
        %v2742 = vsel %vm2284, %v2725, 0
        %v2744 = vsel %vm2284, %v2727, 0
        %v2746 = vsel %vm2284, %v2729, 0
        %2748 = vmatpush.xpose.msra.mxu0 0.0
        %2749 = vmatpush.xpose.msra.mxu0 0.0
        %2750 = vmatpush.xpose.msra.mxu0 0.0
        %2751 = vmatpush.xpose.msra.mxu0 0.0
        %2752 = vmatpush.xpose.msra.mxu0 0.0
        %2753 = vmatpush.xpose.msra.mxu0 0.0
        %2754 = vmatpush.xpose.msra.mxu0 0.0
        %2755 = vmatpush.xpose.msra.mxu0 0.0
        %2756 = vmatpush.xpose.msra.mxu0 %v2746
        %2757 = vmatpush.xpose.msra.mxu0 %v2744
        %2758 = vmatpush.xpose.msra.mxu0 %v2742
        %2759 = vmatpush.xpose.msra.mxu0 %v2740
        %2760 = vmatpush.xpose.msra.mxu0 %v2738
        %2761 = vmatpush.xpose.msra.mxu0 %v2736
        %2762 = vmatpush.xpose.msra.mxu0 %v2734
        %2763 = vmatpush.xpose.msra.mxu0 %v2732
        %2764 = vmatmul.f32.gmra.mxu0 %v2730
        %v2765 = vpop.f32.mrf.mxu0
        %v2766 = vadd.f32 0.0, %v2765
        %2767 = vdwg.mxu0
        %v2768 = vsel %vm2332, %v2766, -inf
        %2769 = vmax.xlane.f32.xlu0 %v2768
        %v2770 = vpop.xlane.xlu0 %2769
        %v2771 = vsub.f32 %v2766, %v2770
        %v2772 = vmul.f32 %v2771, 1.442695
        %v2773 = vpow.pop %v2772
        %v2774 = vsel %vm2332, %v2773, 0.0
        %2775 = vadd.xlane.f32.xlu0 %v2774
        %v2776 = vpop.xlane.xlu0 %2775
        %v2777 = vrcp.pop %v2776
        %v2778 = vmul.f32 %v2776, %v2777
        %v2779 = vsub.f32 1.0, %v2778
        %v2780 = vmul.f32 %v2777, %v2779
        %v2781 = vadd.f32 %v2777, %v2780
        %vm2782 = vweird.f32 %v2776
        %vm2783 = vweird.f32 %v2777
        %vm2784 = vmor %vm2782, %vm2783
        %v2785 = vsel %vm2784, %v2777, %v2781
        %v2786 = vand.u32 2147483647, %v2776
        %vm2787 = vcmp.eq.f32.partialorder %v2786, 8.507059e+37
        %v2788 = vand.u32 %v2776, 2147483648
        %v2789 = vor.u32 1.1754944e-38, %v2788
        %v2790 = vsel %vm2787, %v2789, %v2785
        %v2791 = vmul.f32 %v2773, %v2790
        %2792 = vrot.lane.b32.xlu0 %v2252, 80
        %v2793 = vpop.permute.xlu0 %2792
        %2794 = vrot.lane.b32.xlu0 %v2255, 80
        %v2795 = vpop.permute.xlu0 %2794
        %2796 = vrot.lane.b32.xlu0 %v2258, 80
        %v2797 = vpop.permute.xlu0 %2796
        %2798 = vrot.lane.b32.xlu0 %v2261, 80
        %v2799 = vpop.permute.xlu0 %2798
        %2800 = vrot.lane.b32.xlu0 %v2264, 80
        %v2801 = vpop.permute.xlu0 %2800
        %2802 = vrot.lane.b32.xlu0 %v2267, 80
        %v2803 = vpop.permute.xlu0 %2802
        %2804 = vrot.lane.b32.xlu0 %v2270, 80
        %v2805 = vpop.permute.xlu0 %2804
        %2806 = vrot.lane.b32.xlu0 %v2273, 80
        %v2807 = vpop.permute.xlu0 %2806
        %v2817 = vsel %vm2332, %v2791, 0
        %2819 = vmatpush.msra.mxu0 0.0
        %2820 = vmatpush.msra.mxu0 0.0
        %2821 = vmatpush.msra.mxu0 0.0
        %2822 = vmatpush.msra.mxu0 0.0
        %2823 = vmatpush.msra.mxu0 0.0
        %2824 = vmatpush.msra.mxu0 0.0
        %2825 = vmatpush.msra.mxu0 0.0
        %2826 = vmatpush.msra.mxu0 0.0
        %2827 = vmatpush.msra.mxu0 %v2807
        %2828 = vmatpush.msra.mxu0 %v2805
        %2829 = vmatpush.msra.mxu0 %v2803
        %2830 = vmatpush.msra.mxu0 %v2801
        %2831 = vmatpush.msra.mxu0 %v2799
        %2832 = vmatpush.msra.mxu0 %v2797
        %2833 = vmatpush.msra.mxu0 %v2795
        %2834 = vmatpush.msra.mxu0 %v2793
        %2835 = vmatmul.f32.gmra.mxu0 %v2817
        %v2836 = vpop.f32.mrf.mxu0
        %v2837 = vadd.f32 0.0, %v2836
        %2838 = vdwg.mxu0
        %v2840 = vsel %vm2284, %v2837, 0
        %2842 = vmatpush.msra.mxu0 0.0
        %2843 = vmatpush.msra.mxu0 0.0
        %2844 = vmatpush.msra.mxu0 0.0
        %2845 = vmatpush.msra.mxu0 0.0
        %2846 = vmatpush.msra.mxu0 0.0
        %2847 = vmatpush.msra.mxu0 0.0
        %2848 = vmatpush.msra.mxu0 0.0
        %2849 = vmatpush.msra.mxu0 0.0
        %2850 = vmatpush.msra.mxu0 0.0
        %2851 = vmatpush.msra.mxu0 0.0
        %2852 = vmatpush.msra.mxu0 0.0
        %2853 = vmatpush.msra.mxu0 0.0
        %2854 = vmatpush.msra.mxu0 0.0
        %2855 = vmatpush.msra.mxu0 0.0
        %2856 = vmatpush.msra.mxu0 %v2283
        %2857 = vmatpush.msra.mxu0 %v2282
        %2858 = vmatmul.f32.gmra.mxu0 %v2840
        %v2859 = vpop.f32.mrf.mxu0
        %v2860 = vadd.f32 0.0, %v2859
        %2861 = vdwg.mxu0
        %v2862 = vadd.f32 %v2711, %v2860
        %v2863 = vld [vmem:[%s43] sm:$0x1]
        %v2865 = vperm.slane %v2863, 0
        %v2867 = vadd.f32 %v2862, %v2865
        %v2868 = vadd.f32 %v2103, %v2867
        %2869 = vadd.xlane.f32.xlu0 %v2868
        %v2870 = vpop.xlane.xlu0 %2869
        %v2871 = vmul.f32 %v2870, %v2075
        %v2872 = vsub.f32 %v2868, %v2871
        %v2873 = vmul.f32 %v2872, %v2872
        %2874 = vadd.xlane.f32.xlu0 %v2873
        %v2875 = vpop.xlane.xlu0 %2874
        %v2876 = vmul.f32 %v2875, %v2075
        %v2877 = vadd.f32 %v2876, 1e-05
        %v2878 = vrsqrt.pop %v2877
        %v2879 = vmul.f32 %v2878, %v2877
        %v2880 = vmul.f32 %v2879, %v2878
        %v2881 = vmul.f32 0.5, %v2880
        %v2882 = vsub.f32 1.5, %v2881
        %v2883 = vmul.f32 %v2878, %v2882
        %vm2884 = vweird.f32 %v2877
        %vm2885 = vweird.f32 %v2878
        %vm2886 = vmor %vm2884, %vm2885
        %v2887 = vsel %vm2886, %v2878, %v2883
        %v2888 = vmul.f32 %v2872, %v2887
        %v2889 = vld [vmem:[%s45] sm:$0x1]
        %v2891 = vperm.slane %v2889, 0
        %v2893 = vmul.f32 %v2888, %v2891
        %v2894 = vld [vmem:[%s47] sm:$0x1]
        %v2896 = vperm.slane %v2894, 0
        %v2898 = vadd.f32 %v2893, %v2896
        %v2899 = vld [vmem:[%s49] sm:$0xff]
        %v2900 = vld [vmem:[%s49 + $0x8] sm:$0xff]
        %v2901 = vld [vmem:[%s49 + $0x10] sm:$0xff]
        %v2902 = vld [vmem:[%s49 + $0x18] sm:$0xff]
        %v2903 = vld [vmem:[%s49 + $0x20] sm:$0xff]
        %v2904 = vld [vmem:[%s49 + $0x28] sm:$0xff]
        %v2905 = vld [vmem:[%s49 + $0x30] sm:$0xff]
        %v2906 = vld [vmem:[%s49 + $0x38] sm:$0xff]
        %v2907 = vld [vmem:[%s49 + $0x40] sm:$0xff]
        %v2908 = vld [vmem:[%s49 + $0x48] sm:$0xff]
        %v2909 = vld [vmem:[%s49 + $0x50] sm:$0xff]
        %v2910 = vld [vmem:[%s49 + $0x58] sm:$0xff]
        %v2911 = vld [vmem:[%s49 + $0x60] sm:$0xff]
        %v2912 = vld [vmem:[%s49 + $0x68] sm:$0xff]
        %v2913 = vld [vmem:[%s49 + $0x70] sm:$0xff]
        %v2914 = vld [vmem:[%s49 + $0x78] sm:$0xff]
        %v2915 = vld [vmem:[%s49 + $0x80] sm:$0xff]
        %v2916 = vld [vmem:[%s49 + $0x88] sm:$0xff]
        %v2917 = vld [vmem:[%s49 + $0x90] sm:$0xff]
        %v2918 = vld [vmem:[%s49 + $0x98] sm:$0xff]
        %v2919 = vld [vmem:[%s49 + $0xa0] sm:$0xff]
        %v2920 = vld [vmem:[%s49 + $0xa8] sm:$0xff]
        %v2921 = vld [vmem:[%s49 + $0xb0] sm:$0xff]
        %v2922 = vld [vmem:[%s49 + $0xb8] sm:$0xff]
        %v2923 = vld [vmem:[%s49 + $0xc0] sm:$0xff]
        %v2924 = vld [vmem:[%s49 + $0xc8] sm:$0xff]
        %v2925 = vld [vmem:[%s49 + $0xd0] sm:$0xff]
        %v2926 = vld [vmem:[%s49 + $0xd8] sm:$0xff]
        %v2927 = vld [vmem:[%s49 + $0xe0] sm:$0xff]
        %v2928 = vld [vmem:[%s49 + $0xe8] sm:$0xff]
        %v2929 = vld [vmem:[%s49 + $0xf0] sm:$0xff]
        %v2930 = vld [vmem:[%s49 + $0xf8] sm:$0xff]
        %v2931 = vld [vmem:[%s51] sm:$0x3]
        %v2933 = vperm.slane %v2931, 0
        %v2934 = vperm.slane %v2931, 1
        %2937 = vmatpush.msra.mxu0 %v2929
        %2938 = vmatpush.msra.mxu0 %v2927
        %2939 = vmatpush.msra.mxu0 %v2925
        %2940 = vmatpush.msra.mxu0 %v2923
        %2941 = vmatpush.msra.mxu0 %v2921
        %2942 = vmatpush.msra.mxu0 %v2919
        %2943 = vmatpush.msra.mxu0 %v2917
        %2944 = vmatpush.msra.mxu0 %v2915
        %2945 = vmatpush.msra.mxu0 %v2913
        %2946 = vmatpush.msra.mxu0 %v2911
        %2947 = vmatpush.msra.mxu0 %v2909
        %2948 = vmatpush.msra.mxu0 %v2907
        %2949 = vmatpush.msra.mxu0 %v2905
        %2950 = vmatpush.msra.mxu0 %v2903
        %2951 = vmatpush.msra.mxu0 %v2901
        %2952 = vmatpush.msra.mxu0 %v2899
        %2953 = vmatmul.f32.gmra.mxu0 %v2898
        %v2954 = vpop.f32.mrf.mxu0
        %v2955 = vadd.f32 %v2933, %v2954
        %2956 = vdwg.mxu0
        %2957 = vmatpush.msra.mxu0 %v2930
        %2958 = vmatpush.msra.mxu0 %v2928
        %2959 = vmatpush.msra.mxu0 %v2926
        %2960 = vmatpush.msra.mxu0 %v2924
        %2961 = vmatpush.msra.mxu0 %v2922
        %2962 = vmatpush.msra.mxu0 %v2920
        %2963 = vmatpush.msra.mxu0 %v2918
        %2964 = vmatpush.msra.mxu0 %v2916
        %2965 = vmatpush.msra.mxu0 %v2914
        %2966 = vmatpush.msra.mxu0 %v2912
        %2967 = vmatpush.msra.mxu0 %v2910
        %2968 = vmatpush.msra.mxu0 %v2908
        %2969 = vmatpush.msra.mxu0 %v2906
        %2970 = vmatpush.msra.mxu0 %v2904
        %2971 = vmatpush.msra.mxu0 %v2902
        %2972 = vmatpush.msra.mxu0 %v2900
        %2973 = vmatmul.f32.gmra.mxu0 %v2898
        %v2974 = vpop.f32.mrf.mxu0
        %v2975 = vadd.f32 %v2934, %v2974
        %2976 = vdwg.mxu0
        %v2977 = vmax.f32 %v2955, 0.0
        %v2978 = vmax.f32 %v2975, 0.0
        %v2979 = vld [vmem:[%s53] sm:$0xff]
        %v2980 = vld [vmem:[%s53 + $0x8] sm:$0xff]
        %v2981 = vld [vmem:[%s53 + $0x10] sm:$0xff]
        %v2982 = vld [vmem:[%s53 + $0x18] sm:$0xff]
        %v2983 = vld [vmem:[%s53 + $0x20] sm:$0xff]
        %v2984 = vld [vmem:[%s53 + $0x28] sm:$0xff]
        %v2985 = vld [vmem:[%s53 + $0x30] sm:$0xff]
        %v2986 = vld [vmem:[%s53 + $0x38] sm:$0xff]
        %v2987 = vld [vmem:[%s53 + $0x40] sm:$0xff]
        %v2988 = vld [vmem:[%s53 + $0x48] sm:$0xff]
        %v2989 = vld [vmem:[%s53 + $0x50] sm:$0xff]
        %v2990 = vld [vmem:[%s53 + $0x58] sm:$0xff]
        %v2991 = vld [vmem:[%s53 + $0x60] sm:$0xff]
        %v2992 = vld [vmem:[%s53 + $0x68] sm:$0xff]
        %v2993 = vld [vmem:[%s53 + $0x70] sm:$0xff]
        %v2994 = vld [vmem:[%s53 + $0x78] sm:$0xff]
        %v2995 = vld [vmem:[%s53 + $0x80] sm:$0xff]
        %v2996 = vld [vmem:[%s53 + $0x88] sm:$0xff]
        %v2997 = vld [vmem:[%s53 + $0x90] sm:$0xff]
        %v2998 = vld [vmem:[%s53 + $0x98] sm:$0xff]
        %v2999 = vld [vmem:[%s53 + $0xa0] sm:$0xff]
        %v3000 = vld [vmem:[%s53 + $0xa8] sm:$0xff]
        %v3001 = vld [vmem:[%s53 + $0xb0] sm:$0xff]
        %v3002 = vld [vmem:[%s53 + $0xb8] sm:$0xff]
        %v3003 = vld [vmem:[%s53 + $0xc0] sm:$0xff]
        %v3004 = vld [vmem:[%s53 + $0xc8] sm:$0xff]
        %v3005 = vld [vmem:[%s53 + $0xd0] sm:$0xff]
        %v3006 = vld [vmem:[%s53 + $0xd8] sm:$0xff]
        %v3007 = vld [vmem:[%s53 + $0xe0] sm:$0xff]
        %v3008 = vld [vmem:[%s53 + $0xe8] sm:$0xff]
        %v3009 = vld [vmem:[%s53 + $0xf0] sm:$0xff]
        %v3010 = vld [vmem:[%s53 + $0xf8] sm:$0xff]
        %v3011 = vld [vmem:[%s55] sm:$0x1]
        %v3013 = vperm.slane %v3011, 0
        %3015 = vmatpush.msra.mxu0 %v2994
        %3016 = vmatpush.msra.mxu0 %v2993
        %3017 = vmatpush.msra.mxu0 %v2992
        %3018 = vmatpush.msra.mxu0 %v2991
        %3019 = vmatpush.msra.mxu0 %v2990
        %3020 = vmatpush.msra.mxu0 %v2989
        %3021 = vmatpush.msra.mxu0 %v2988
        %3022 = vmatpush.msra.mxu0 %v2987
        %3023 = vmatpush.msra.mxu0 %v2986
        %3024 = vmatpush.msra.mxu0 %v2985
        %3025 = vmatpush.msra.mxu0 %v2984
        %3026 = vmatpush.msra.mxu0 %v2983
        %3027 = vmatpush.msra.mxu0 %v2982
        %3028 = vmatpush.msra.mxu0 %v2981
        %3029 = vmatpush.msra.mxu0 %v2980
        %3030 = vmatpush.msra.mxu0 %v2979
        %3031 = vmatmul.f32.gmra.mxu0 %v2977
        %v3032 = vpop.f32.mrf.mxu0
        %v3033 = vadd.f32 %v3013, %v3032
        %3034 = vdwg.mxu0
        %3035 = vmatpush.msra.mxu0 %v3010
        %3036 = vmatpush.msra.mxu0 %v3009
        %3037 = vmatpush.msra.mxu0 %v3008
        %3038 = vmatpush.msra.mxu0 %v3007
        %3039 = vmatpush.msra.mxu0 %v3006
        %3040 = vmatpush.msra.mxu0 %v3005
        %3041 = vmatpush.msra.mxu0 %v3004
        %3042 = vmatpush.msra.mxu0 %v3003
        %3043 = vmatpush.msra.mxu0 %v3002
        %3044 = vmatpush.msra.mxu0 %v3001
        %3045 = vmatpush.msra.mxu0 %v3000
        %3046 = vmatpush.msra.mxu0 %v2999
        %3047 = vmatpush.msra.mxu0 %v2998
        %3048 = vmatpush.msra.mxu0 %v2997
        %3049 = vmatpush.msra.mxu0 %v2996
        %3050 = vmatpush.msra.mxu0 %v2995
        %3051 = vmatmul.f32.gmra.mxu0 %v2978
        %v3052 = vpop.f32.mrf.mxu0
        %v3053 = vadd.f32 %v3033, %v3052
        %3054 = vdwg.mxu0
        %v3055 = vadd.f32 %v2898, %v3053
        %3056 = vadd.xlane.f32.xlu0 %v3055
        %v3057 = vpop.xlane.xlu0 %3056
        %v3058 = vmul.f32 %v3057, %v2075
        %v3059 = vsub.f32 %v3055, %v3058
        %v3060 = vmul.f32 %v3059, %v3059
        %3061 = vadd.xlane.f32.xlu0 %v3060
        %v3062 = vpop.xlane.xlu0 %3061
        %v3063 = vmul.f32 %v3062, %v2075
        %v3064 = vadd.f32 %v3063, 1e-05
        %v3065 = vrsqrt.pop %v3064
        %v3066 = vmul.f32 %v3065, %v3064
        %v3067 = vmul.f32 %v3066, %v3065
        %v3068 = vmul.f32 0.5, %v3067
        %v3069 = vsub.f32 1.5, %v3068
        %v3070 = vmul.f32 %v3065, %v3069
        %vm3071 = vweird.f32 %v3064
        %vm3072 = vweird.f32 %v3065
        %vm3073 = vmor %vm3071, %vm3072
        %v3074 = vsel %vm3073, %v3065, %v3070
        %v3075 = vmul.f32 %v3059, %v3074
        %v3076 = vld [vmem:[%s57] sm:$0x1]
        %v3078 = vperm.slane %v3076, 0
        %v3080 = vmul.f32 %v3075, %v3078
        %v3081 = vld [vmem:[%s59] sm:$0x1]
        %v3083 = vperm.slane %v3081, 0
        %v3085 = vadd.f32 %v3080, %v3083
        %v3086 = vadd.f32 %v3085, %v1510
        %v3087 = vld [vmem:[%s61] sm:$0xff]
        %v3088 = vld [vmem:[%s61 + $0x8] sm:$0xff]
        %v3089 = vld [vmem:[%s61 + $0x10] sm:$0xff]
        %v3090 = vld [vmem:[%s61 + $0x18] sm:$0xff]
        %v3091 = vld [vmem:[%s61 + $0x20] sm:$0xff]
        %v3092 = vld [vmem:[%s61 + $0x28] sm:$0xff]
        %v3093 = vld [vmem:[%s61 + $0x30] sm:$0xff]
        %v3094 = vld [vmem:[%s61 + $0x38] sm:$0xff]
        %v3095 = vld [vmem:[%s61 + $0x40] sm:$0xff]
        %v3096 = vld [vmem:[%s61 + $0x48] sm:$0xff]
        %v3097 = vld [vmem:[%s61 + $0x50] sm:$0xff]
        %v3098 = vld [vmem:[%s61 + $0x58] sm:$0xff]
        %v3099 = vld [vmem:[%s61 + $0x60] sm:$0xff]
        %v3100 = vld [vmem:[%s61 + $0x68] sm:$0xff]
        %v3101 = vld [vmem:[%s61 + $0x70] sm:$0xff]
        %v3102 = vld [vmem:[%s61 + $0x78] sm:$0xff]
        %v3103 = vld [vmem:[%s63] sm:$0x1]
        %v3105 = vperm.slane %v3103, 0
        %3107 = vmatpush.msra.mxu0 %v3102
        %3108 = vmatpush.msra.mxu0 %v3101
        %3109 = vmatpush.msra.mxu0 %v3100
        %3110 = vmatpush.msra.mxu0 %v3099
        %3111 = vmatpush.msra.mxu0 %v3098
        %3112 = vmatpush.msra.mxu0 %v3097
        %3113 = vmatpush.msra.mxu0 %v3096
        %3114 = vmatpush.msra.mxu0 %v3095
        %3115 = vmatpush.msra.mxu0 %v3094
        %3116 = vmatpush.msra.mxu0 %v3093
        %3117 = vmatpush.msra.mxu0 %v3092
        %3118 = vmatpush.msra.mxu0 %v3091
        %3119 = vmatpush.msra.mxu0 %v3090
        %3120 = vmatpush.msra.mxu0 %v3089
        %3121 = vmatpush.msra.mxu0 %v3088
        %3122 = vmatpush.msra.mxu0 %v3087
        %3123 = vmatmul.f32.gmra.mxu0 %v2104
        %v3124 = vpop.f32.mrf.mxu0
        %v3125 = vadd.f32 %v3105, %v3124
        %3126 = vmatmul.f32.gmra.mxu0 %v2105
        %v3127 = vpop.f32.mrf.mxu0
        %v3128 = vadd.f32 %v3105, %v3127
        %3129 = vmatmul.f32.gmra.mxu0 %v2106
        %v3130 = vpop.f32.mrf.mxu0
        %v3131 = vadd.f32 %v3105, %v3130
        %3132 = vmatmul.f32.gmra.mxu0 %v2107
        %v3133 = vpop.f32.mrf.mxu0
        %v3134 = vadd.f32 %v3105, %v3133
        %3135 = vmatmul.f32.gmra.mxu0 %v2108
        %v3136 = vpop.f32.mrf.mxu0
        %v3137 = vadd.f32 %v3105, %v3136
        %3138 = vmatmul.f32.gmra.mxu0 %v2109
        %v3139 = vpop.f32.mrf.mxu0
        %v3140 = vadd.f32 %v3105, %v3139
        %3141 = vmatmul.f32.gmra.mxu0 %v2110
        %v3142 = vpop.f32.mrf.mxu0
        %v3143 = vadd.f32 %v3105, %v3142
        %3144 = vmatmul.f32.gmra.mxu0 %v2111
        %v3145 = vpop.f32.mrf.mxu0
        %v3146 = vadd.f32 %v3105, %v3145
        %3147 = vdwg.mxu0
        %v3148 = vld [vmem:[%s65] sm:$0xff]
        %v3149 = vld [vmem:[%s65 + $0x8] sm:$0xff]
        %v3150 = vld [vmem:[%s65 + $0x10] sm:$0xff]
        %v3151 = vld [vmem:[%s65 + $0x18] sm:$0xff]
        %v3152 = vld [vmem:[%s65 + $0x20] sm:$0xff]
        %v3153 = vld [vmem:[%s65 + $0x28] sm:$0xff]
        %v3154 = vld [vmem:[%s65 + $0x30] sm:$0xff]
        %v3155 = vld [vmem:[%s65 + $0x38] sm:$0xff]
        %v3156 = vld [vmem:[%s65 + $0x40] sm:$0xff]
        %v3157 = vld [vmem:[%s65 + $0x48] sm:$0xff]
        %v3158 = vld [vmem:[%s65 + $0x50] sm:$0xff]
        %v3159 = vld [vmem:[%s65 + $0x58] sm:$0xff]
        %v3160 = vld [vmem:[%s65 + $0x60] sm:$0xff]
        %v3161 = vld [vmem:[%s65 + $0x68] sm:$0xff]
        %v3162 = vld [vmem:[%s65 + $0x70] sm:$0xff]
        %v3163 = vld [vmem:[%s65 + $0x78] sm:$0xff]
        %v3164 = vld [vmem:[%s67] sm:$0x1]
        %v3166 = vperm.slane %v3164, 0
        %3168 = vmatpush.msra.mxu0 %v3163
        %3169 = vmatpush.msra.mxu0 %v3162
        %3170 = vmatpush.msra.mxu0 %v3161
        %3171 = vmatpush.msra.mxu0 %v3160
        %3172 = vmatpush.msra.mxu0 %v3159
        %3173 = vmatpush.msra.mxu0 %v3158
        %3174 = vmatpush.msra.mxu0 %v3157
        %3175 = vmatpush.msra.mxu0 %v3156
        %3176 = vmatpush.msra.mxu0 %v3155
        %3177 = vmatpush.msra.mxu0 %v3154
        %3178 = vmatpush.msra.mxu0 %v3153
        %3179 = vmatpush.msra.mxu0 %v3152
        %3180 = vmatpush.msra.mxu0 %v3151
        %3181 = vmatpush.msra.mxu0 %v3150
        %3182 = vmatpush.msra.mxu0 %v3149
        %3183 = vmatpush.msra.mxu0 %v3148
        %3184 = vmatmul.f32.gmra.mxu0 %v3086
        %v3185 = vpop.f32.mrf.mxu0
        %v3186 = vadd.f32 %v3166, %v3185
        %3187 = vdwg.mxu0
        %v3188 = vld [vmem:[%s69] sm:$0xff]
        %v3189 = vld [vmem:[%s69 + $0x8] sm:$0xff]
        %v3190 = vld [vmem:[%s69 + $0x10] sm:$0xff]
        %v3191 = vld [vmem:[%s69 + $0x18] sm:$0xff]
        %v3192 = vld [vmem:[%s69 + $0x20] sm:$0xff]
        %v3193 = vld [vmem:[%s69 + $0x28] sm:$0xff]
        %v3194 = vld [vmem:[%s69 + $0x30] sm:$0xff]
        %v3195 = vld [vmem:[%s69 + $0x38] sm:$0xff]
        %v3196 = vld [vmem:[%s69 + $0x40] sm:$0xff]
        %v3197 = vld [vmem:[%s69 + $0x48] sm:$0xff]
        %v3198 = vld [vmem:[%s69 + $0x50] sm:$0xff]
        %v3199 = vld [vmem:[%s69 + $0x58] sm:$0xff]
        %v3200 = vld [vmem:[%s69 + $0x60] sm:$0xff]
        %v3201 = vld [vmem:[%s69 + $0x68] sm:$0xff]
        %v3202 = vld [vmem:[%s69 + $0x70] sm:$0xff]
        %v3203 = vld [vmem:[%s69 + $0x78] sm:$0xff]
        %v3204 = vld [vmem:[%s71] sm:$0x1]
        %v3206 = vperm.slane %v3204, 0
        %3208 = vmatpush.msra.mxu0 %v3203
        %3209 = vmatpush.msra.mxu0 %v3202
        %3210 = vmatpush.msra.mxu0 %v3201
        %3211 = vmatpush.msra.mxu0 %v3200
        %3212 = vmatpush.msra.mxu0 %v3199
        %3213 = vmatpush.msra.mxu0 %v3198
        %3214 = vmatpush.msra.mxu0 %v3197
        %3215 = vmatpush.msra.mxu0 %v3196
        %3216 = vmatpush.msra.mxu0 %v3195
        %3217 = vmatpush.msra.mxu0 %v3194
        %3218 = vmatpush.msra.mxu0 %v3193
        %3219 = vmatpush.msra.mxu0 %v3192
        %3220 = vmatpush.msra.mxu0 %v3191
        %3221 = vmatpush.msra.mxu0 %v3190
        %3222 = vmatpush.msra.mxu0 %v3189
        %3223 = vmatpush.msra.mxu0 %v3188
        %3224 = vmatmul.f32.gmra.mxu0 %v3085
        %v3225 = vpop.f32.mrf.mxu0
        %v3226 = vadd.f32 %v3206, %v3225
        %3227 = vdwg.mxu0
        %v3228 = vmul.f32 %v3125, 0.25
        %v3229 = vmul.f32 %v3128, 0.25
        %v3230 = vmul.f32 %v3131, 0.25
        %v3231 = vmul.f32 %v3134, 0.25
        %v3232 = vmul.f32 %v3137, 0.25
        %v3233 = vmul.f32 %v3140, 0.25
        %v3234 = vmul.f32 %v3143, 0.25
        %v3235 = vmul.f32 %v3146, 0.25
        %v3236 = vld [vmem:[#allocation20] sm:$0xff]
        %v3237 = vld [vmem:[#allocation20 + $0x8] sm:$0xff]
        %v3238 = vld [vmem:[#allocation20 + $0x10] sm:$0xff]
        %v3239 = vld [vmem:[#allocation20 + $0x18] sm:$0xff]
        %v3240 = vld [vmem:[#allocation20 + $0x20] sm:$0xff]
        %v3241 = vld [vmem:[#allocation20 + $0x28] sm:$0xff]
        %v3242 = vld [vmem:[#allocation20 + $0x30] sm:$0xff]
        %v3243 = vld [vmem:[#allocation20 + $0x38] sm:$0xff]
        %v3245 = vsel %vm2284, %v3228, 0
        %v3248 = vsel %vm2284, %v3229, 0
        %v3251 = vsel %vm2284, %v3230, 0
        %v3254 = vsel %vm2284, %v3231, 0
        %v3257 = vsel %vm2284, %v3232, 0
        %v3260 = vsel %vm2284, %v3233, 0
        %v3263 = vsel %vm2284, %v3234, 0
        %v3266 = vsel %vm2284, %v3235, 0
        %v3269 = vsel %vm2284, %v3186, 0
        %3271 = vmatpush.xpose.msra.mxu0 0.0
        %3272 = vmatpush.xpose.msra.mxu0 0.0
        %3273 = vmatpush.xpose.msra.mxu0 0.0
        %3274 = vmatpush.xpose.msra.mxu0 0.0
        %3275 = vmatpush.xpose.msra.mxu0 0.0
        %3276 = vmatpush.xpose.msra.mxu0 0.0
        %3277 = vmatpush.xpose.msra.mxu0 0.0
        %3278 = vmatpush.xpose.msra.mxu0 0.0
        %3279 = vmatpush.xpose.msra.mxu0 0.0
        %3280 = vmatpush.xpose.msra.mxu0 0.0
        %3281 = vmatpush.xpose.msra.mxu0 0.0
        %3282 = vmatpush.xpose.msra.mxu0 0.0
        %3283 = vmatpush.xpose.msra.mxu0 0.0
        %3284 = vmatpush.xpose.msra.mxu0 0.0
        %3285 = vmatpush.xpose.msra.mxu0 0.0
        %3286 = vmatpush.xpose.msra.mxu0 %v3269
        %3287 = vmatmul.f32.gmra.mxu0 %v3245
        %v3288 = vpop.f32.mrf.mxu0
        %v3289 = vadd.f32 0.0, %v3288
        %3290 = vmatmul.f32.gmra.mxu0 %v3248
        %v3291 = vpop.f32.mrf.mxu0
        %v3292 = vadd.f32 0.0, %v3291
        %3293 = vmatmul.f32.gmra.mxu0 %v3251
        %v3294 = vpop.f32.mrf.mxu0
        %v3295 = vadd.f32 0.0, %v3294
        %3296 = vmatmul.f32.gmra.mxu0 %v3254
        %v3297 = vpop.f32.mrf.mxu0
        %v3298 = vadd.f32 0.0, %v3297
        %3299 = vmatmul.f32.gmra.mxu0 %v3257
        %v3300 = vpop.f32.mrf.mxu0
        %v3301 = vadd.f32 0.0, %v3300
        %3302 = vmatmul.f32.gmra.mxu0 %v3260
        %v3303 = vpop.f32.mrf.mxu0
        %v3304 = vadd.f32 0.0, %v3303
        %3305 = vmatmul.f32.gmra.mxu0 %v3263
        %v3306 = vpop.f32.mrf.mxu0
        %v3307 = vadd.f32 0.0, %v3306
        %3308 = vmatmul.f32.gmra.mxu0 %v3266
        %v3309 = vpop.f32.mrf.mxu0
        %v3310 = vadd.f32 0.0, %v3309
        %3311 = vdwg.mxu0
        %v3312 = vsel %vm1684, %v3289, -inf
        %3313 = vmax.xlane.f32.xlu0 %v3312
        %v3314 = vpop.xlane.xlu0 %3313
        %v3315 = vsel %vm1684, %v3292, -inf
        %3316 = vmax.xlane.f32.xlu0 %v3315
        %v3317 = vpop.xlane.xlu0 %3316
        %v3318 = vsel %vm1684, %v3295, -inf
        %3319 = vmax.xlane.f32.xlu0 %v3318
        %v3320 = vpop.xlane.xlu0 %3319
        %v3321 = vsel %vm1684, %v3298, -inf
        %3322 = vmax.xlane.f32.xlu0 %v3321
        %v3323 = vpop.xlane.xlu0 %3322
        %v3324 = vsel %vm1684, %v3301, -inf
        %3325 = vmax.xlane.f32.xlu0 %v3324
        %v3326 = vpop.xlane.xlu0 %3325
        %v3327 = vsel %vm1684, %v3304, -inf
        %3328 = vmax.xlane.f32.xlu0 %v3327
        %v3329 = vpop.xlane.xlu0 %3328
        %v3330 = vsel %vm1684, %v3307, -inf
        %3331 = vmax.xlane.f32.xlu0 %v3330
        %v3332 = vpop.xlane.xlu0 %3331
        %v3333 = vsel %vm1684, %v3310, -inf
        %3334 = vmax.xlane.f32.xlu0 %v3333
        %v3335 = vpop.xlane.xlu0 %3334
        %v3336 = vsub.f32 %v3289, %v3314
        %v3337 = vsub.f32 %v3292, %v3317
        %v3338 = vsub.f32 %v3295, %v3320
        %v3339 = vsub.f32 %v3298, %v3323
        %v3340 = vsub.f32 %v3301, %v3326
        %v3341 = vsub.f32 %v3304, %v3329
        %v3342 = vsub.f32 %v3307, %v3332
        %v3343 = vsub.f32 %v3310, %v3335
        %v3344 = vmul.f32 %v3336, 1.442695
        %v3345 = vpow.pop %v3344
        %v3346 = vmul.f32 %v3337, 1.442695
        %v3347 = vpow.pop %v3346
        %v3348 = vmul.f32 %v3338, 1.442695
        %v3349 = vpow.pop %v3348
        %v3350 = vmul.f32 %v3339, 1.442695
        %v3351 = vpow.pop %v3350
        %v3352 = vmul.f32 %v3340, 1.442695
        %v3353 = vpow.pop %v3352
        %v3354 = vmul.f32 %v3341, 1.442695
        %v3355 = vpow.pop %v3354
        %v3356 = vmul.f32 %v3342, 1.442695
        %v3357 = vpow.pop %v3356
        %v3358 = vmul.f32 %v3343, 1.442695
        %v3359 = vpow.pop %v3358
        %v3360 = vsel %vm1684, %v3345, 0.0
        %3361 = vadd.xlane.f32.xlu0 %v3360
        %v3362 = vpop.xlane.xlu0 %3361
        %v3363 = vsel %vm1684, %v3347, 0.0
        %3364 = vadd.xlane.f32.xlu0 %v3363
        %v3365 = vpop.xlane.xlu0 %3364
        %v3366 = vsel %vm1684, %v3349, 0.0
        %3367 = vadd.xlane.f32.xlu0 %v3366
        %v3368 = vpop.xlane.xlu0 %3367
        %v3369 = vsel %vm1684, %v3351, 0.0
        %3370 = vadd.xlane.f32.xlu0 %v3369
        %v3371 = vpop.xlane.xlu0 %3370
        %v3372 = vsel %vm1684, %v3353, 0.0
        %3373 = vadd.xlane.f32.xlu0 %v3372
        %v3374 = vpop.xlane.xlu0 %3373
        %v3375 = vsel %vm1684, %v3355, 0.0
        %3376 = vadd.xlane.f32.xlu0 %v3375
        %v3377 = vpop.xlane.xlu0 %3376
        %v3378 = vsel %vm1684, %v3357, 0.0
        %3379 = vadd.xlane.f32.xlu0 %v3378
        %v3380 = vpop.xlane.xlu0 %3379
        %v3381 = vsel %vm1684, %v3359, 0.0
        %3382 = vadd.xlane.f32.xlu0 %v3381
        %v3383 = vpop.xlane.xlu0 %3382
        %v3384 = vrcp.pop %v3362
        %v3385 = vmul.f32 %v3362, %v3384
        %v3386 = vsub.f32 1.0, %v3385
        %v3387 = vmul.f32 %v3384, %v3386
        %v3388 = vadd.f32 %v3384, %v3387
        %vm3389 = vweird.f32 %v3362
        %vm3390 = vweird.f32 %v3384
        %vm3391 = vmor %vm3389, %vm3390
        %v3392 = vsel %vm3391, %v3384, %v3388
        %v3393 = vand.u32 2147483647, %v3362
        %vm3394 = vcmp.eq.f32.partialorder %v3393, 8.507059e+37
        %v3395 = vand.u32 %v3362, 2147483648
        %v3396 = vor.u32 1.1754944e-38, %v3395
        %v3397 = vsel %vm3394, %v3396, %v3392
        %v3398 = vrcp.pop %v3365
        %v3399 = vmul.f32 %v3365, %v3398
        %v3400 = vsub.f32 1.0, %v3399
        %v3401 = vmul.f32 %v3398, %v3400
        %v3402 = vadd.f32 %v3398, %v3401
        %vm3403 = vweird.f32 %v3365
        %vm3404 = vweird.f32 %v3398
        %vm3405 = vmor %vm3403, %vm3404
        %v3406 = vsel %vm3405, %v3398, %v3402
        %v3407 = vand.u32 2147483647, %v3365
        %vm3408 = vcmp.eq.f32.partialorder %v3407, 8.507059e+37
        %v3409 = vand.u32 %v3365, 2147483648
        %v3410 = vor.u32 1.1754944e-38, %v3409
        %v3411 = vsel %vm3408, %v3410, %v3406
        %v3412 = vrcp.pop %v3368
        %v3413 = vmul.f32 %v3368, %v3412
        %v3414 = vsub.f32 1.0, %v3413
        %v3415 = vmul.f32 %v3412, %v3414
        %v3416 = vadd.f32 %v3412, %v3415
        %vm3417 = vweird.f32 %v3368
        %vm3418 = vweird.f32 %v3412
        %vm3419 = vmor %vm3417, %vm3418
        %v3420 = vsel %vm3419, %v3412, %v3416
        %v3421 = vand.u32 2147483647, %v3368
        %vm3422 = vcmp.eq.f32.partialorder %v3421, 8.507059e+37
        %v3423 = vand.u32 %v3368, 2147483648
        %v3424 = vor.u32 1.1754944e-38, %v3423
        %v3425 = vsel %vm3422, %v3424, %v3420
        %v3426 = vrcp.pop %v3371
        %v3427 = vmul.f32 %v3371, %v3426
        %v3428 = vsub.f32 1.0, %v3427
        %v3429 = vmul.f32 %v3426, %v3428
        %v3430 = vadd.f32 %v3426, %v3429
        %vm3431 = vweird.f32 %v3371
        %vm3432 = vweird.f32 %v3426
        %vm3433 = vmor %vm3431, %vm3432
        %v3434 = vsel %vm3433, %v3426, %v3430
        %v3435 = vand.u32 2147483647, %v3371
        %vm3436 = vcmp.eq.f32.partialorder %v3435, 8.507059e+37
        %v3437 = vand.u32 %v3371, 2147483648
        %v3438 = vor.u32 1.1754944e-38, %v3437
        %v3439 = vsel %vm3436, %v3438, %v3434
        %v3440 = vrcp.pop %v3374
        %v3441 = vmul.f32 %v3374, %v3440
        %v3442 = vsub.f32 1.0, %v3441
        %v3443 = vmul.f32 %v3440, %v3442
        %v3444 = vadd.f32 %v3440, %v3443
        %vm3445 = vweird.f32 %v3374
        %vm3446 = vweird.f32 %v3440
        %vm3447 = vmor %vm3445, %vm3446
        %v3448 = vsel %vm3447, %v3440, %v3444
        %v3449 = vand.u32 2147483647, %v3374
        %vm3450 = vcmp.eq.f32.partialorder %v3449, 8.507059e+37
        %v3451 = vand.u32 %v3374, 2147483648
        %v3452 = vor.u32 1.1754944e-38, %v3451
        %v3453 = vsel %vm3450, %v3452, %v3448
        %v3454 = vrcp.pop %v3377
        %v3455 = vmul.f32 %v3377, %v3454
        %v3456 = vsub.f32 1.0, %v3455
        %v3457 = vmul.f32 %v3454, %v3456
        %v3458 = vadd.f32 %v3454, %v3457
        %vm3459 = vweird.f32 %v3377
        %vm3460 = vweird.f32 %v3454
        %vm3461 = vmor %vm3459, %vm3460
        %v3462 = vsel %vm3461, %v3454, %v3458
        %v3463 = vand.u32 2147483647, %v3377
        %vm3464 = vcmp.eq.f32.partialorder %v3463, 8.507059e+37
        %v3465 = vand.u32 %v3377, 2147483648
        %v3466 = vor.u32 1.1754944e-38, %v3465
        %v3467 = vsel %vm3464, %v3466, %v3462
        %v3468 = vrcp.pop %v3380
        %v3469 = vmul.f32 %v3380, %v3468
        %v3470 = vsub.f32 1.0, %v3469
        %v3471 = vmul.f32 %v3468, %v3470
        %v3472 = vadd.f32 %v3468, %v3471
        %vm3473 = vweird.f32 %v3380
        %vm3474 = vweird.f32 %v3468
        %vm3475 = vmor %vm3473, %vm3474
        %v3476 = vsel %vm3475, %v3468, %v3472
        %v3477 = vand.u32 2147483647, %v3380
        %vm3478 = vcmp.eq.f32.partialorder %v3477, 8.507059e+37
        %v3479 = vand.u32 %v3380, 2147483648
        %v3480 = vor.u32 1.1754944e-38, %v3479
        %v3481 = vsel %vm3478, %v3480, %v3476
        %v3482 = vrcp.pop %v3383
        %v3483 = vmul.f32 %v3383, %v3482
        %v3484 = vsub.f32 1.0, %v3483
        %v3485 = vmul.f32 %v3482, %v3484
        %v3486 = vadd.f32 %v3482, %v3485
        %vm3487 = vweird.f32 %v3383
        %vm3488 = vweird.f32 %v3482
        %vm3489 = vmor %vm3487, %vm3488
        %v3490 = vsel %vm3489, %v3482, %v3486
        %v3491 = vand.u32 2147483647, %v3383
        %vm3492 = vcmp.eq.f32.partialorder %v3491, 8.507059e+37
        %v3493 = vand.u32 %v3383, 2147483648
        %v3494 = vor.u32 1.1754944e-38, %v3493
        %v3495 = vsel %vm3492, %v3494, %v3490
        %v3496 = vmul.f32 %v3345, %v3397
        %v3497 = vmul.f32 %v3347, %v3411
        %v3498 = vmul.f32 %v3349, %v3425
        %v3499 = vmul.f32 %v3351, %v3439
        %v3500 = vmul.f32 %v3353, %v3453
        %v3501 = vmul.f32 %v3355, %v3467
        %v3502 = vmul.f32 %v3357, %v3481
        %v3503 = vmul.f32 %v3359, %v3495
        %v3505 = vsel %vm1684, %v3496, 0
        %v3508 = vsel %vm1684, %v3497, 0
        %v3511 = vsel %vm1684, %v3498, 0
        %v3514 = vsel %vm1684, %v3499, 0
        %v3517 = vsel %vm1684, %v3500, 0
        %v3520 = vsel %vm1684, %v3501, 0
        %v3523 = vsel %vm1684, %v3502, 0
        %v3526 = vsel %vm1684, %v3503, 0
        %3528 = vmatpush.msra.mxu0 0.0
        %3529 = vmatpush.msra.mxu0 0.0
        %3530 = vmatpush.msra.mxu0 0.0
        %3531 = vmatpush.msra.mxu0 0.0
        %3532 = vmatpush.msra.mxu0 0.0
        %3533 = vmatpush.msra.mxu0 0.0
        %3534 = vmatpush.msra.mxu0 0.0
        %3535 = vmatpush.msra.mxu0 0.0
        %3536 = vmatpush.msra.mxu0 0.0
        %3537 = vmatpush.msra.mxu0 0.0
        %3538 = vmatpush.msra.mxu0 0.0
        %3539 = vmatpush.msra.mxu0 0.0
        %3540 = vmatpush.msra.mxu0 0.0
        %3541 = vmatpush.msra.mxu0 0.0
        %3542 = vmatpush.msra.mxu0 0.0
        %3543 = vmatpush.msra.mxu0 %v3226
        %3544 = vmatmul.f32.gmra.mxu0 %v3505
        %v3545 = vpop.f32.mrf.mxu0
        %v3546 = vadd.f32 0.0, %v3545
        %3547 = vmatmul.f32.gmra.mxu0 %v3508
        %v3548 = vpop.f32.mrf.mxu0
        %v3549 = vadd.f32 0.0, %v3548
        %3550 = vmatmul.f32.gmra.mxu0 %v3511
        %v3551 = vpop.f32.mrf.mxu0
        %v3552 = vadd.f32 0.0, %v3551
        %3553 = vmatmul.f32.gmra.mxu0 %v3514
        %v3554 = vpop.f32.mrf.mxu0
        %v3555 = vadd.f32 0.0, %v3554
        %3556 = vmatmul.f32.gmra.mxu0 %v3517
        %v3557 = vpop.f32.mrf.mxu0
        %v3558 = vadd.f32 0.0, %v3557
        %3559 = vmatmul.f32.gmra.mxu0 %v3520
        %v3560 = vpop.f32.mrf.mxu0
        %v3561 = vadd.f32 0.0, %v3560
        %3562 = vmatmul.f32.gmra.mxu0 %v3523
        %v3563 = vpop.f32.mrf.mxu0
        %v3564 = vadd.f32 0.0, %v3563
        %3565 = vmatmul.f32.gmra.mxu0 %v3526
        %v3566 = vpop.f32.mrf.mxu0
        %v3567 = vadd.f32 0.0, %v3566
        %3568 = vdwg.mxu0
        %3569 = vrot.lane.b32.xlu0 %v3228, 112
        %v3570 = vpop.permute.xlu0 %3569
        %3571 = vrot.lane.b32.xlu0 %v3229, 112
        %v3572 = vpop.permute.xlu0 %3571
        %3573 = vrot.lane.b32.xlu0 %v3230, 112
        %v3574 = vpop.permute.xlu0 %3573
        %3575 = vrot.lane.b32.xlu0 %v3231, 112
        %v3576 = vpop.permute.xlu0 %3575
        %3577 = vrot.lane.b32.xlu0 %v3232, 112
        %v3578 = vpop.permute.xlu0 %3577
        %3579 = vrot.lane.b32.xlu0 %v3233, 112
        %v3580 = vpop.permute.xlu0 %3579
        %3581 = vrot.lane.b32.xlu0 %v3234, 112
        %v3582 = vpop.permute.xlu0 %3581
        %3583 = vrot.lane.b32.xlu0 %v3235, 112
        %v3584 = vpop.permute.xlu0 %3583
        %3585 = vrot.lane.b32.xlu0 %v3186, 112
        %v3586 = vpop.permute.xlu0 %3585
        %v3587 = vsel %vm2284, %v3570, 0
        %v3589 = vsel %vm2284, %v3572, 0
        %v3591 = vsel %vm2284, %v3574, 0
        %v3593 = vsel %vm2284, %v3576, 0
        %v3595 = vsel %vm2284, %v3578, 0
        %v3597 = vsel %vm2284, %v3580, 0
        %v3599 = vsel %vm2284, %v3582, 0
        %v3601 = vsel %vm2284, %v3584, 0
        %v3603 = vsel %vm2284, %v3586, 0
        %3605 = vmatpush.xpose.msra.mxu0 0.0
        %3606 = vmatpush.xpose.msra.mxu0 0.0
        %3607 = vmatpush.xpose.msra.mxu0 0.0
        %3608 = vmatpush.xpose.msra.mxu0 0.0
        %3609 = vmatpush.xpose.msra.mxu0 0.0
        %3610 = vmatpush.xpose.msra.mxu0 0.0
        %3611 = vmatpush.xpose.msra.mxu0 0.0
        %3612 = vmatpush.xpose.msra.mxu0 0.0
        %3613 = vmatpush.xpose.msra.mxu0 0.0
        %3614 = vmatpush.xpose.msra.mxu0 0.0
        %3615 = vmatpush.xpose.msra.mxu0 0.0
        %3616 = vmatpush.xpose.msra.mxu0 0.0
        %3617 = vmatpush.xpose.msra.mxu0 0.0
        %3618 = vmatpush.xpose.msra.mxu0 0.0
        %3619 = vmatpush.xpose.msra.mxu0 0.0
        %3620 = vmatpush.xpose.msra.mxu0 %v3603
        %3621 = vmatmul.f32.gmra.mxu0 %v3587
        %v3622 = vpop.f32.mrf.mxu0
        %v3623 = vadd.f32 0.0, %v3622
        %3624 = vmatmul.f32.gmra.mxu0 %v3589
        %v3625 = vpop.f32.mrf.mxu0
        %v3626 = vadd.f32 0.0, %v3625
        %3627 = vmatmul.f32.gmra.mxu0 %v3591
        %v3628 = vpop.f32.mrf.mxu0
        %v3629 = vadd.f32 0.0, %v3628
        %3630 = vmatmul.f32.gmra.mxu0 %v3593
        %v3631 = vpop.f32.mrf.mxu0
        %v3632 = vadd.f32 0.0, %v3631
        %3633 = vmatmul.f32.gmra.mxu0 %v3595
        %v3634 = vpop.f32.mrf.mxu0
        %v3635 = vadd.f32 0.0, %v3634
        %3636 = vmatmul.f32.gmra.mxu0 %v3597
        %v3637 = vpop.f32.mrf.mxu0
        %v3638 = vadd.f32 0.0, %v3637
        %3639 = vmatmul.f32.gmra.mxu0 %v3599
        %v3640 = vpop.f32.mrf.mxu0
        %v3641 = vadd.f32 0.0, %v3640
        %3642 = vmatmul.f32.gmra.mxu0 %v3601
        %v3643 = vpop.f32.mrf.mxu0
        %v3644 = vadd.f32 0.0, %v3643
        %3645 = vdwg.mxu0
        %v3646 = vsel %vm1684, %v3623, -inf
        %3647 = vmax.xlane.f32.xlu0 %v3646
        %v3648 = vpop.xlane.xlu0 %3647
        %v3649 = vsel %vm1684, %v3626, -inf
        %3650 = vmax.xlane.f32.xlu0 %v3649
        %v3651 = vpop.xlane.xlu0 %3650
        %v3652 = vsel %vm1684, %v3629, -inf
        %3653 = vmax.xlane.f32.xlu0 %v3652
        %v3654 = vpop.xlane.xlu0 %3653
        %v3655 = vsel %vm1684, %v3632, -inf
        %3656 = vmax.xlane.f32.xlu0 %v3655
        %v3657 = vpop.xlane.xlu0 %3656
        %v3658 = vsel %vm1684, %v3635, -inf
        %3659 = vmax.xlane.f32.xlu0 %v3658
        %v3660 = vpop.xlane.xlu0 %3659
        %v3661 = vsel %vm1684, %v3638, -inf
        %3662 = vmax.xlane.f32.xlu0 %v3661
        %v3663 = vpop.xlane.xlu0 %3662
        %v3664 = vsel %vm1684, %v3641, -inf
        %3665 = vmax.xlane.f32.xlu0 %v3664
        %v3666 = vpop.xlane.xlu0 %3665
        %v3667 = vsel %vm1684, %v3644, -inf
        %3668 = vmax.xlane.f32.xlu0 %v3667
        %v3669 = vpop.xlane.xlu0 %3668
        %v3670 = vsub.f32 %v3623, %v3648
        %v3671 = vsub.f32 %v3626, %v3651
        %v3672 = vsub.f32 %v3629, %v3654
        %v3673 = vsub.f32 %v3632, %v3657
        %v3674 = vsub.f32 %v3635, %v3660
        %v3675 = vsub.f32 %v3638, %v3663
        %v3676 = vsub.f32 %v3641, %v3666
        %v3677 = vsub.f32 %v3644, %v3669
        %v3678 = vmul.f32 %v3670, 1.442695
        %v3679 = vpow.pop %v3678
        %v3680 = vmul.f32 %v3671, 1.442695
        %v3681 = vpow.pop %v3680
        %v3682 = vmul.f32 %v3672, 1.442695
        %v3683 = vpow.pop %v3682
        %v3684 = vmul.f32 %v3673, 1.442695
        %v3685 = vpow.pop %v3684
        %v3686 = vmul.f32 %v3674, 1.442695
        %v3687 = vpow.pop %v3686
        %v3688 = vmul.f32 %v3675, 1.442695
        %v3689 = vpow.pop %v3688
        %v3690 = vmul.f32 %v3676, 1.442695
        %v3691 = vpow.pop %v3690
        %v3692 = vmul.f32 %v3677, 1.442695
        %v3693 = vpow.pop %v3692
        %v3694 = vsel %vm1684, %v3679, 0.0
        %3695 = vadd.xlane.f32.xlu0 %v3694
        %v3696 = vpop.xlane.xlu0 %3695
        %v3697 = vsel %vm1684, %v3681, 0.0
        %3698 = vadd.xlane.f32.xlu0 %v3697
        %v3699 = vpop.xlane.xlu0 %3698
        %v3700 = vsel %vm1684, %v3683, 0.0
        %3701 = vadd.xlane.f32.xlu0 %v3700
        %v3702 = vpop.xlane.xlu0 %3701
        %v3703 = vsel %vm1684, %v3685, 0.0
        %3704 = vadd.xlane.f32.xlu0 %v3703
        %v3705 = vpop.xlane.xlu0 %3704
        %v3706 = vsel %vm1684, %v3687, 0.0
        %3707 = vadd.xlane.f32.xlu0 %v3706
        %v3708 = vpop.xlane.xlu0 %3707
        %v3709 = vsel %vm1684, %v3689, 0.0
        %3710 = vadd.xlane.f32.xlu0 %v3709
        %v3711 = vpop.xlane.xlu0 %3710
        %v3712 = vsel %vm1684, %v3691, 0.0
        %3713 = vadd.xlane.f32.xlu0 %v3712
        %v3714 = vpop.xlane.xlu0 %3713
        %v3715 = vsel %vm1684, %v3693, 0.0
        %3716 = vadd.xlane.f32.xlu0 %v3715
        %v3717 = vpop.xlane.xlu0 %3716
        %v3718 = vrcp.pop %v3696
        %v3719 = vmul.f32 %v3696, %v3718
        %v3720 = vsub.f32 1.0, %v3719
        %v3721 = vmul.f32 %v3718, %v3720
        %v3722 = vadd.f32 %v3718, %v3721
        %vm3723 = vweird.f32 %v3696
        %vm3724 = vweird.f32 %v3718
        %vm3725 = vmor %vm3723, %vm3724
        %v3726 = vsel %vm3725, %v3718, %v3722
        %v3727 = vand.u32 2147483647, %v3696
        %vm3728 = vcmp.eq.f32.partialorder %v3727, 8.507059e+37
        %v3729 = vand.u32 %v3696, 2147483648
        %v3730 = vor.u32 1.1754944e-38, %v3729
        %v3731 = vsel %vm3728, %v3730, %v3726
        %v3732 = vrcp.pop %v3699
        %v3733 = vmul.f32 %v3699, %v3732
        %v3734 = vsub.f32 1.0, %v3733
        %v3735 = vmul.f32 %v3732, %v3734
        %v3736 = vadd.f32 %v3732, %v3735
        %vm3737 = vweird.f32 %v3699
        %vm3738 = vweird.f32 %v3732
        %vm3739 = vmor %vm3737, %vm3738
        %v3740 = vsel %vm3739, %v3732, %v3736
        %v3741 = vand.u32 2147483647, %v3699
        %vm3742 = vcmp.eq.f32.partialorder %v3741, 8.507059e+37
        %v3743 = vand.u32 %v3699, 2147483648
        %v3744 = vor.u32 1.1754944e-38, %v3743
        %v3745 = vsel %vm3742, %v3744, %v3740
        %v3746 = vrcp.pop %v3702
        %v3747 = vmul.f32 %v3702, %v3746
        %v3748 = vsub.f32 1.0, %v3747
        %v3749 = vmul.f32 %v3746, %v3748
        %v3750 = vadd.f32 %v3746, %v3749
        %vm3751 = vweird.f32 %v3702
        %vm3752 = vweird.f32 %v3746
        %vm3753 = vmor %vm3751, %vm3752
        %v3754 = vsel %vm3753, %v3746, %v3750
        %v3755 = vand.u32 2147483647, %v3702
        %vm3756 = vcmp.eq.f32.partialorder %v3755, 8.507059e+37
        %v3757 = vand.u32 %v3702, 2147483648
        %v3758 = vor.u32 1.1754944e-38, %v3757
        %v3759 = vsel %vm3756, %v3758, %v3754
        %v3760 = vrcp.pop %v3705
        %v3761 = vmul.f32 %v3705, %v3760
        %v3762 = vsub.f32 1.0, %v3761
        %v3763 = vmul.f32 %v3760, %v3762
        %v3764 = vadd.f32 %v3760, %v3763
        %vm3765 = vweird.f32 %v3705
        %vm3766 = vweird.f32 %v3760
        %vm3767 = vmor %vm3765, %vm3766
        %v3768 = vsel %vm3767, %v3760, %v3764
        %v3769 = vand.u32 2147483647, %v3705
        %vm3770 = vcmp.eq.f32.partialorder %v3769, 8.507059e+37
        %v3771 = vand.u32 %v3705, 2147483648
        %v3772 = vor.u32 1.1754944e-38, %v3771
        %v3773 = vsel %vm3770, %v3772, %v3768
        %v3774 = vrcp.pop %v3708
        %v3775 = vmul.f32 %v3708, %v3774
        %v3776 = vsub.f32 1.0, %v3775
        %v3777 = vmul.f32 %v3774, %v3776
        %v3778 = vadd.f32 %v3774, %v3777
        %vm3779 = vweird.f32 %v3708
        %vm3780 = vweird.f32 %v3774
        %vm3781 = vmor %vm3779, %vm3780
        %v3782 = vsel %vm3781, %v3774, %v3778
        %v3783 = vand.u32 2147483647, %v3708
        %vm3784 = vcmp.eq.f32.partialorder %v3783, 8.507059e+37
        %v3785 = vand.u32 %v3708, 2147483648
        %v3786 = vor.u32 1.1754944e-38, %v3785
        %v3787 = vsel %vm3784, %v3786, %v3782
        %v3788 = vrcp.pop %v3711
        %v3789 = vmul.f32 %v3711, %v3788
        %v3790 = vsub.f32 1.0, %v3789
        %v3791 = vmul.f32 %v3788, %v3790
        %v3792 = vadd.f32 %v3788, %v3791
        %vm3793 = vweird.f32 %v3711
        %vm3794 = vweird.f32 %v3788
        %vm3795 = vmor %vm3793, %vm3794
        %v3796 = vsel %vm3795, %v3788, %v3792
        %v3797 = vand.u32 2147483647, %v3711
        %vm3798 = vcmp.eq.f32.partialorder %v3797, 8.507059e+37
        %v3799 = vand.u32 %v3711, 2147483648
        %v3800 = vor.u32 1.1754944e-38, %v3799
        %v3801 = vsel %vm3798, %v3800, %v3796
        %v3802 = vrcp.pop %v3714
        %v3803 = vmul.f32 %v3714, %v3802
        %v3804 = vsub.f32 1.0, %v3803
        %v3805 = vmul.f32 %v3802, %v3804
        %v3806 = vadd.f32 %v3802, %v3805
        %vm3807 = vweird.f32 %v3714
        %vm3808 = vweird.f32 %v3802
        %vm3809 = vmor %vm3807, %vm3808
        %v3810 = vsel %vm3809, %v3802, %v3806
        %v3811 = vand.u32 2147483647, %v3714
        %vm3812 = vcmp.eq.f32.partialorder %v3811, 8.507059e+37
        %v3813 = vand.u32 %v3714, 2147483648
        %v3814 = vor.u32 1.1754944e-38, %v3813
        %v3815 = vsel %vm3812, %v3814, %v3810
        %v3816 = vrcp.pop %v3717
        %v3817 = vmul.f32 %v3717, %v3816
        %v3818 = vsub.f32 1.0, %v3817
        %v3819 = vmul.f32 %v3816, %v3818
        %v3820 = vadd.f32 %v3816, %v3819
        %vm3821 = vweird.f32 %v3717
        %vm3822 = vweird.f32 %v3816
        %vm3823 = vmor %vm3821, %vm3822
        %v3824 = vsel %vm3823, %v3816, %v3820
        %v3825 = vand.u32 2147483647, %v3717
        %vm3826 = vcmp.eq.f32.partialorder %v3825, 8.507059e+37
        %v3827 = vand.u32 %v3717, 2147483648
        %v3828 = vor.u32 1.1754944e-38, %v3827
        %v3829 = vsel %vm3826, %v3828, %v3824
        %v3830 = vmul.f32 %v3679, %v3731
        %v3831 = vmul.f32 %v3681, %v3745
        %v3832 = vmul.f32 %v3683, %v3759
        %v3833 = vmul.f32 %v3685, %v3773
        %v3834 = vmul.f32 %v3687, %v3787
        %v3835 = vmul.f32 %v3689, %v3801
        %v3836 = vmul.f32 %v3691, %v3815
        %v3837 = vmul.f32 %v3693, %v3829
        %3839 = vrot.lane.b32.xlu0 %v3226, 112
        %v3840 = vpop.permute.xlu0 %3839
        %v3843 = vsel %vm1684, %v3830, 0
        %v3846 = vsel %vm1684, %v3831, 0
        %v3849 = vsel %vm1684, %v3832, 0
        %v3852 = vsel %vm1684, %v3833, 0
        %v3855 = vsel %vm1684, %v3834, 0
        %v3858 = vsel %vm1684, %v3835, 0
        %v3861 = vsel %vm1684, %v3836, 0
        %v3864 = vsel %vm1684, %v3837, 0
        %3866 = vmatpush.msra.mxu0 0.0
        %3867 = vmatpush.msra.mxu0 0.0
        %3868 = vmatpush.msra.mxu0 0.0
        %3869 = vmatpush.msra.mxu0 0.0
        %3870 = vmatpush.msra.mxu0 0.0
        %3871 = vmatpush.msra.mxu0 0.0
        %3872 = vmatpush.msra.mxu0 0.0
        %3873 = vmatpush.msra.mxu0 0.0
        %3874 = vmatpush.msra.mxu0 0.0
        %3875 = vmatpush.msra.mxu0 0.0
        %3876 = vmatpush.msra.mxu0 0.0
        %3877 = vmatpush.msra.mxu0 0.0
        %3878 = vmatpush.msra.mxu0 0.0
        %3879 = vmatpush.msra.mxu0 0.0
        %3880 = vmatpush.msra.mxu0 0.0
        %3881 = vmatpush.msra.mxu0 %v3840
        %3882 = vmatmul.f32.gmra.mxu0 %v3843
        %v3883 = vpop.f32.mrf.mxu0
        %v3884 = vadd.f32 0.0, %v3883
        %3885 = vmatmul.f32.gmra.mxu0 %v3846
        %v3886 = vpop.f32.mrf.mxu0
        %v3887 = vadd.f32 0.0, %v3886
        %3888 = vmatmul.f32.gmra.mxu0 %v3849
        %v3889 = vpop.f32.mrf.mxu0
        %v3890 = vadd.f32 0.0, %v3889
        %3891 = vmatmul.f32.gmra.mxu0 %v3852
        %v3892 = vpop.f32.mrf.mxu0
        %v3893 = vadd.f32 0.0, %v3892
        %3894 = vmatmul.f32.gmra.mxu0 %v3855
        %v3895 = vpop.f32.mrf.mxu0
        %v3896 = vadd.f32 0.0, %v3895
        %3897 = vmatmul.f32.gmra.mxu0 %v3858
        %v3898 = vpop.f32.mrf.mxu0
        %v3899 = vadd.f32 0.0, %v3898
        %3900 = vmatmul.f32.gmra.mxu0 %v3861
        %v3901 = vpop.f32.mrf.mxu0
        %v3902 = vadd.f32 0.0, %v3901
        %3903 = vmatmul.f32.gmra.mxu0 %v3864
        %v3904 = vpop.f32.mrf.mxu0
        %v3905 = vadd.f32 0.0, %v3904
        %3906 = vdwg.mxu0
        %v3908 = vsel %vm2284, %v3884, 0
        %v3911 = vsel %vm2284, %v3887, 0
        %v3914 = vsel %vm2284, %v3890, 0
        %v3917 = vsel %vm2284, %v3893, 0
        %v3920 = vsel %vm2284, %v3896, 0
        %v3923 = vsel %vm2284, %v3899, 0
        %v3926 = vsel %vm2284, %v3902, 0
        %v3929 = vsel %vm2284, %v3905, 0
        %3931 = vmatpush.msra.mxu0 0.0
        %3932 = vmatpush.msra.mxu0 0.0
        %3933 = vmatpush.msra.mxu0 0.0
        %3934 = vmatpush.msra.mxu0 0.0
        %3935 = vmatpush.msra.mxu0 0.0
        %3936 = vmatpush.msra.mxu0 0.0
        %3937 = vmatpush.msra.mxu0 0.0
        %3938 = vmatpush.msra.mxu0 0.0
        %3939 = vmatpush.msra.mxu0 0.0
        %3940 = vmatpush.msra.mxu0 0.0
        %3941 = vmatpush.msra.mxu0 0.0
        %3942 = vmatpush.msra.mxu0 0.0
        %3943 = vmatpush.msra.mxu0 0.0
        %3944 = vmatpush.msra.mxu0 0.0
        %3945 = vmatpush.msra.mxu0 %v3239
        %3946 = vmatpush.msra.mxu0 %v3238
        %3947 = vmatmul.f32.gmra.mxu0 %v3908
        %v3948 = vpop.f32.mrf.mxu0
        %v3949 = vadd.f32 0.0, %v3948
        %3950 = vmatmul.f32.gmra.mxu0 %v3911
        %v3951 = vpop.f32.mrf.mxu0
        %v3952 = vadd.f32 0.0, %v3951
        %3953 = vmatmul.f32.gmra.mxu0 %v3914
        %v3954 = vpop.f32.mrf.mxu0
        %v3955 = vadd.f32 0.0, %v3954
        %3956 = vmatmul.f32.gmra.mxu0 %v3917
        %v3957 = vpop.f32.mrf.mxu0
        %v3958 = vadd.f32 0.0, %v3957
        %3959 = vmatmul.f32.gmra.mxu0 %v3920
        %v3960 = vpop.f32.mrf.mxu0
        %v3961 = vadd.f32 0.0, %v3960
        %3962 = vmatmul.f32.gmra.mxu0 %v3923
        %v3963 = vpop.f32.mrf.mxu0
        %v3964 = vadd.f32 0.0, %v3963
        %3965 = vmatmul.f32.gmra.mxu0 %v3926
        %v3966 = vpop.f32.mrf.mxu0
        %v3967 = vadd.f32 0.0, %v3966
        %3968 = vmatmul.f32.gmra.mxu0 %v3929
        %v3969 = vpop.f32.mrf.mxu0
        %v3970 = vadd.f32 0.0, %v3969
        %3971 = vdwg.mxu0
        %v3973 = vsel %vm2284, %v3546, 0
        %v3976 = vsel %vm2284, %v3549, 0
        %v3979 = vsel %vm2284, %v3552, 0
        %v3982 = vsel %vm2284, %v3555, 0
        %v3985 = vsel %vm2284, %v3558, 0
        %v3988 = vsel %vm2284, %v3561, 0
        %v3991 = vsel %vm2284, %v3564, 0
        %v3994 = vsel %vm2284, %v3567, 0
        %3996 = vmatpush.msra.mxu0 0.0
        %3997 = vmatpush.msra.mxu0 0.0
        %3998 = vmatpush.msra.mxu0 0.0
        %3999 = vmatpush.msra.mxu0 0.0
        %4000 = vmatpush.msra.mxu0 0.0
        %4001 = vmatpush.msra.mxu0 0.0
        %4002 = vmatpush.msra.mxu0 0.0
        %4003 = vmatpush.msra.mxu0 0.0
        %4004 = vmatpush.msra.mxu0 0.0
        %4005 = vmatpush.msra.mxu0 0.0
        %4006 = vmatpush.msra.mxu0 0.0
        %4007 = vmatpush.msra.mxu0 0.0
        %4008 = vmatpush.msra.mxu0 0.0
        %4009 = vmatpush.msra.mxu0 0.0
        %4010 = vmatpush.msra.mxu0 %v3237
        %4011 = vmatpush.msra.mxu0 %v3236
        %4012 = vmatmul.f32.gmra.mxu0 %v3973
        %v4013 = vpop.f32.mrf.mxu0
        %v4014 = vadd.f32 %v3949, %v4013
        %4015 = vmatmul.f32.gmra.mxu0 %v3976
        %v4016 = vpop.f32.mrf.mxu0
        %v4017 = vadd.f32 %v3952, %v4016
        %4018 = vmatmul.f32.gmra.mxu0 %v3979
        %v4019 = vpop.f32.mrf.mxu0
        %v4020 = vadd.f32 %v3955, %v4019
        %4021 = vmatmul.f32.gmra.mxu0 %v3982
        %v4022 = vpop.f32.mrf.mxu0
        %v4023 = vadd.f32 %v3958, %v4022
        %4024 = vmatmul.f32.gmra.mxu0 %v3985
        %v4025 = vpop.f32.mrf.mxu0
        %v4026 = vadd.f32 %v3961, %v4025
        %4027 = vmatmul.f32.gmra.mxu0 %v3988
        %v4028 = vpop.f32.mrf.mxu0
        %v4029 = vadd.f32 %v3964, %v4028
        %4030 = vmatmul.f32.gmra.mxu0 %v3991
        %v4031 = vpop.f32.mrf.mxu0
        %v4032 = vadd.f32 %v3967, %v4031
        %4033 = vmatmul.f32.gmra.mxu0 %v3994
        %v4034 = vpop.f32.mrf.mxu0
        %v4035 = vadd.f32 %v3970, %v4034
        %4036 = vdwg.mxu0
        %4037 = vrot.lane.b32.xlu0 %v3228, 96
        %v4038 = vpop.permute.xlu0 %4037
        %4039 = vrot.lane.b32.xlu0 %v3229, 96
        %v4040 = vpop.permute.xlu0 %4039
        %4041 = vrot.lane.b32.xlu0 %v3230, 96
        %v4042 = vpop.permute.xlu0 %4041
        %4043 = vrot.lane.b32.xlu0 %v3231, 96
        %v4044 = vpop.permute.xlu0 %4043
        %4045 = vrot.lane.b32.xlu0 %v3232, 96
        %v4046 = vpop.permute.xlu0 %4045
        %4047 = vrot.lane.b32.xlu0 %v3233, 96
        %v4048 = vpop.permute.xlu0 %4047
        %4049 = vrot.lane.b32.xlu0 %v3234, 96
        %v4050 = vpop.permute.xlu0 %4049
        %4051 = vrot.lane.b32.xlu0 %v3235, 96
        %v4052 = vpop.permute.xlu0 %4051
        %4053 = vrot.lane.b32.xlu0 %v3186, 96
        %v4054 = vpop.permute.xlu0 %4053
        %v4055 = vsel %vm2284, %v4038, 0
        %v4057 = vsel %vm2284, %v4040, 0
        %v4059 = vsel %vm2284, %v4042, 0
        %v4061 = vsel %vm2284, %v4044, 0
        %v4063 = vsel %vm2284, %v4046, 0
        %v4065 = vsel %vm2284, %v4048, 0
        %v4067 = vsel %vm2284, %v4050, 0
        %v4069 = vsel %vm2284, %v4052, 0
        %v4071 = vsel %vm2284, %v4054, 0
        %4073 = vmatpush.xpose.msra.mxu0 0.0
        %4074 = vmatpush.xpose.msra.mxu0 0.0
        %4075 = vmatpush.xpose.msra.mxu0 0.0
        %4076 = vmatpush.xpose.msra.mxu0 0.0
        %4077 = vmatpush.xpose.msra.mxu0 0.0
        %4078 = vmatpush.xpose.msra.mxu0 0.0
        %4079 = vmatpush.xpose.msra.mxu0 0.0
        %4080 = vmatpush.xpose.msra.mxu0 0.0
        %4081 = vmatpush.xpose.msra.mxu0 0.0
        %4082 = vmatpush.xpose.msra.mxu0 0.0
        %4083 = vmatpush.xpose.msra.mxu0 0.0
        %4084 = vmatpush.xpose.msra.mxu0 0.0
        %4085 = vmatpush.xpose.msra.mxu0 0.0
        %4086 = vmatpush.xpose.msra.mxu0 0.0
        %4087 = vmatpush.xpose.msra.mxu0 0.0
        %4088 = vmatpush.xpose.msra.mxu0 %v4071
        %4089 = vmatmul.f32.gmra.mxu0 %v4055
        %v4090 = vpop.f32.mrf.mxu0
        %v4091 = vadd.f32 0.0, %v4090
        %4092 = vmatmul.f32.gmra.mxu0 %v4057
        %v4093 = vpop.f32.mrf.mxu0
        %v4094 = vadd.f32 0.0, %v4093
        %4095 = vmatmul.f32.gmra.mxu0 %v4059
        %v4096 = vpop.f32.mrf.mxu0
        %v4097 = vadd.f32 0.0, %v4096
        %4098 = vmatmul.f32.gmra.mxu0 %v4061
        %v4099 = vpop.f32.mrf.mxu0
        %v4100 = vadd.f32 0.0, %v4099
        %4101 = vmatmul.f32.gmra.mxu0 %v4063
        %v4102 = vpop.f32.mrf.mxu0
        %v4103 = vadd.f32 0.0, %v4102
        %4104 = vmatmul.f32.gmra.mxu0 %v4065
        %v4105 = vpop.f32.mrf.mxu0
        %v4106 = vadd.f32 0.0, %v4105
        %4107 = vmatmul.f32.gmra.mxu0 %v4067
        %v4108 = vpop.f32.mrf.mxu0
        %v4109 = vadd.f32 0.0, %v4108
        %4110 = vmatmul.f32.gmra.mxu0 %v4069
        %v4111 = vpop.f32.mrf.mxu0
        %v4112 = vadd.f32 0.0, %v4111
        %4113 = vdwg.mxu0
        %v4114 = vsel %vm1684, %v4091, -inf
        %4115 = vmax.xlane.f32.xlu0 %v4114
        %v4116 = vpop.xlane.xlu0 %4115
        %v4117 = vsel %vm1684, %v4094, -inf
        %4118 = vmax.xlane.f32.xlu0 %v4117
        %v4119 = vpop.xlane.xlu0 %4118
        %v4120 = vsel %vm1684, %v4097, -inf
        %4121 = vmax.xlane.f32.xlu0 %v4120
        %v4122 = vpop.xlane.xlu0 %4121
        %v4123 = vsel %vm1684, %v4100, -inf
        %4124 = vmax.xlane.f32.xlu0 %v4123
        %v4125 = vpop.xlane.xlu0 %4124
        %v4126 = vsel %vm1684, %v4103, -inf
        %4127 = vmax.xlane.f32.xlu0 %v4126
        %v4128 = vpop.xlane.xlu0 %4127
        %v4129 = vsel %vm1684, %v4106, -inf
        %4130 = vmax.xlane.f32.xlu0 %v4129
        %v4131 = vpop.xlane.xlu0 %4130
        %v4132 = vsel %vm1684, %v4109, -inf
        %4133 = vmax.xlane.f32.xlu0 %v4132
        %v4134 = vpop.xlane.xlu0 %4133
        %v4135 = vsel %vm1684, %v4112, -inf
        %4136 = vmax.xlane.f32.xlu0 %v4135
        %v4137 = vpop.xlane.xlu0 %4136
        %v4138 = vsub.f32 %v4091, %v4116
        %v4139 = vsub.f32 %v4094, %v4119
        %v4140 = vsub.f32 %v4097, %v4122
        %v4141 = vsub.f32 %v4100, %v4125
        %v4142 = vsub.f32 %v4103, %v4128
        %v4143 = vsub.f32 %v4106, %v4131
        %v4144 = vsub.f32 %v4109, %v4134
        %v4145 = vsub.f32 %v4112, %v4137
        %v4146 = vmul.f32 %v4138, 1.442695
        %v4147 = vpow.pop %v4146
        %v4148 = vmul.f32 %v4139, 1.442695
        %v4149 = vpow.pop %v4148
        %v4150 = vmul.f32 %v4140, 1.442695
        %v4151 = vpow.pop %v4150
        %v4152 = vmul.f32 %v4141, 1.442695
        %v4153 = vpow.pop %v4152
        %v4154 = vmul.f32 %v4142, 1.442695
        %v4155 = vpow.pop %v4154
        %v4156 = vmul.f32 %v4143, 1.442695
        %v4157 = vpow.pop %v4156
        %v4158 = vmul.f32 %v4144, 1.442695
        %v4159 = vpow.pop %v4158
        %v4160 = vmul.f32 %v4145, 1.442695
        %v4161 = vpow.pop %v4160
        %v4162 = vsel %vm1684, %v4147, 0.0
        %4163 = vadd.xlane.f32.xlu0 %v4162
        %v4164 = vpop.xlane.xlu0 %4163
        %v4165 = vsel %vm1684, %v4149, 0.0
        %4166 = vadd.xlane.f32.xlu0 %v4165
        %v4167 = vpop.xlane.xlu0 %4166
        %v4168 = vsel %vm1684, %v4151, 0.0
        %4169 = vadd.xlane.f32.xlu0 %v4168
        %v4170 = vpop.xlane.xlu0 %4169
        %v4171 = vsel %vm1684, %v4153, 0.0
        %4172 = vadd.xlane.f32.xlu0 %v4171
        %v4173 = vpop.xlane.xlu0 %4172
        %v4174 = vsel %vm1684, %v4155, 0.0
        %4175 = vadd.xlane.f32.xlu0 %v4174
        %v4176 = vpop.xlane.xlu0 %4175
        %v4177 = vsel %vm1684, %v4157, 0.0
        %4178 = vadd.xlane.f32.xlu0 %v4177
        %v4179 = vpop.xlane.xlu0 %4178
        %v4180 = vsel %vm1684, %v4159, 0.0
        %4181 = vadd.xlane.f32.xlu0 %v4180
        %v4182 = vpop.xlane.xlu0 %4181
        %v4183 = vsel %vm1684, %v4161, 0.0
        %4184 = vadd.xlane.f32.xlu0 %v4183
        %v4185 = vpop.xlane.xlu0 %4184
        %v4186 = vrcp.pop %v4164
        %v4187 = vmul.f32 %v4164, %v4186
        %v4188 = vsub.f32 1.0, %v4187
        %v4189 = vmul.f32 %v4186, %v4188
        %v4190 = vadd.f32 %v4186, %v4189
        %vm4191 = vweird.f32 %v4164
        %vm4192 = vweird.f32 %v4186
        %vm4193 = vmor %vm4191, %vm4192
        %v4194 = vsel %vm4193, %v4186, %v4190
        %v4195 = vand.u32 2147483647, %v4164
        %vm4196 = vcmp.eq.f32.partialorder %v4195, 8.507059e+37
        %v4197 = vand.u32 %v4164, 2147483648
        %v4198 = vor.u32 1.1754944e-38, %v4197
        %v4199 = vsel %vm4196, %v4198, %v4194
        %v4200 = vrcp.pop %v4167
        %v4201 = vmul.f32 %v4167, %v4200
        %v4202 = vsub.f32 1.0, %v4201
        %v4203 = vmul.f32 %v4200, %v4202
        %v4204 = vadd.f32 %v4200, %v4203
        %vm4205 = vweird.f32 %v4167
        %vm4206 = vweird.f32 %v4200
        %vm4207 = vmor %vm4205, %vm4206
        %v4208 = vsel %vm4207, %v4200, %v4204
        %v4209 = vand.u32 2147483647, %v4167
        %vm4210 = vcmp.eq.f32.partialorder %v4209, 8.507059e+37
        %v4211 = vand.u32 %v4167, 2147483648
        %v4212 = vor.u32 1.1754944e-38, %v4211
        %v4213 = vsel %vm4210, %v4212, %v4208
        %v4214 = vrcp.pop %v4170
        %v4215 = vmul.f32 %v4170, %v4214
        %v4216 = vsub.f32 1.0, %v4215
        %v4217 = vmul.f32 %v4214, %v4216
        %v4218 = vadd.f32 %v4214, %v4217
        %vm4219 = vweird.f32 %v4170
        %vm4220 = vweird.f32 %v4214
        %vm4221 = vmor %vm4219, %vm4220
        %v4222 = vsel %vm4221, %v4214, %v4218
        %v4223 = vand.u32 2147483647, %v4170
        %vm4224 = vcmp.eq.f32.partialorder %v4223, 8.507059e+37
        %v4225 = vand.u32 %v4170, 2147483648
        %v4226 = vor.u32 1.1754944e-38, %v4225
        %v4227 = vsel %vm4224, %v4226, %v4222
        %v4228 = vrcp.pop %v4173
        %v4229 = vmul.f32 %v4173, %v4228
        %v4230 = vsub.f32 1.0, %v4229
        %v4231 = vmul.f32 %v4228, %v4230
        %v4232 = vadd.f32 %v4228, %v4231
        %vm4233 = vweird.f32 %v4173
        %vm4234 = vweird.f32 %v4228
        %vm4235 = vmor %vm4233, %vm4234
        %v4236 = vsel %vm4235, %v4228, %v4232
        %v4237 = vand.u32 2147483647, %v4173
        %vm4238 = vcmp.eq.f32.partialorder %v4237, 8.507059e+37
        %v4239 = vand.u32 %v4173, 2147483648
        %v4240 = vor.u32 1.1754944e-38, %v4239
        %v4241 = vsel %vm4238, %v4240, %v4236
        %v4242 = vrcp.pop %v4176
        %v4243 = vmul.f32 %v4176, %v4242
        %v4244 = vsub.f32 1.0, %v4243
        %v4245 = vmul.f32 %v4242, %v4244
        %v4246 = vadd.f32 %v4242, %v4245
        %vm4247 = vweird.f32 %v4176
        %vm4248 = vweird.f32 %v4242
        %vm4249 = vmor %vm4247, %vm4248
        %v4250 = vsel %vm4249, %v4242, %v4246
        %v4251 = vand.u32 2147483647, %v4176
        %vm4252 = vcmp.eq.f32.partialorder %v4251, 8.507059e+37
        %v4253 = vand.u32 %v4176, 2147483648
        %v4254 = vor.u32 1.1754944e-38, %v4253
        %v4255 = vsel %vm4252, %v4254, %v4250
        %v4256 = vrcp.pop %v4179
        %v4257 = vmul.f32 %v4179, %v4256
        %v4258 = vsub.f32 1.0, %v4257
        %v4259 = vmul.f32 %v4256, %v4258
        %v4260 = vadd.f32 %v4256, %v4259
        %vm4261 = vweird.f32 %v4179
        %vm4262 = vweird.f32 %v4256
        %vm4263 = vmor %vm4261, %vm4262
        %v4264 = vsel %vm4263, %v4256, %v4260
        %v4265 = vand.u32 2147483647, %v4179
        %vm4266 = vcmp.eq.f32.partialorder %v4265, 8.507059e+37
        %v4267 = vand.u32 %v4179, 2147483648
        %v4268 = vor.u32 1.1754944e-38, %v4267
        %v4269 = vsel %vm4266, %v4268, %v4264
        %v4270 = vrcp.pop %v4182
        %v4271 = vmul.f32 %v4182, %v4270
        %v4272 = vsub.f32 1.0, %v4271
        %v4273 = vmul.f32 %v4270, %v4272
        %v4274 = vadd.f32 %v4270, %v4273
        %vm4275 = vweird.f32 %v4182
        %vm4276 = vweird.f32 %v4270
        %vm4277 = vmor %vm4275, %vm4276
        %v4278 = vsel %vm4277, %v4270, %v4274
        %v4279 = vand.u32 2147483647, %v4182
        %vm4280 = vcmp.eq.f32.partialorder %v4279, 8.507059e+37
        %v4281 = vand.u32 %v4182, 2147483648
        %v4282 = vor.u32 1.1754944e-38, %v4281
        %v4283 = vsel %vm4280, %v4282, %v4278
        %v4284 = vrcp.pop %v4185
        %v4285 = vmul.f32 %v4185, %v4284
        %v4286 = vsub.f32 1.0, %v4285
        %v4287 = vmul.f32 %v4284, %v4286
        %v4288 = vadd.f32 %v4284, %v4287
        %vm4289 = vweird.f32 %v4185
        %vm4290 = vweird.f32 %v4284
        %vm4291 = vmor %vm4289, %vm4290
        %v4292 = vsel %vm4291, %v4284, %v4288
        %v4293 = vand.u32 2147483647, %v4185
        %vm4294 = vcmp.eq.f32.partialorder %v4293, 8.507059e+37
        %v4295 = vand.u32 %v4185, 2147483648
        %v4296 = vor.u32 1.1754944e-38, %v4295
        %v4297 = vsel %vm4294, %v4296, %v4292
        %v4298 = vmul.f32 %v4147, %v4199
        %v4299 = vmul.f32 %v4149, %v4213
        %v4300 = vmul.f32 %v4151, %v4227
        %v4301 = vmul.f32 %v4153, %v4241
        %v4302 = vmul.f32 %v4155, %v4255
        %v4303 = vmul.f32 %v4157, %v4269
        %v4304 = vmul.f32 %v4159, %v4283
        %v4305 = vmul.f32 %v4161, %v4297
        %4306 = vrot.lane.b32.xlu0 %v3226, 96
        %v4307 = vpop.permute.xlu0 %4306
        %v4310 = vsel %vm1684, %v4298, 0
        %v4313 = vsel %vm1684, %v4299, 0
        %v4316 = vsel %vm1684, %v4300, 0
        %v4319 = vsel %vm1684, %v4301, 0
        %v4322 = vsel %vm1684, %v4302, 0
        %v4325 = vsel %vm1684, %v4303, 0
        %v4328 = vsel %vm1684, %v4304, 0
        %v4331 = vsel %vm1684, %v4305, 0
        %4333 = vmatpush.msra.mxu0 0.0
        %4334 = vmatpush.msra.mxu0 0.0
        %4335 = vmatpush.msra.mxu0 0.0
        %4336 = vmatpush.msra.mxu0 0.0
        %4337 = vmatpush.msra.mxu0 0.0
        %4338 = vmatpush.msra.mxu0 0.0
        %4339 = vmatpush.msra.mxu0 0.0
        %4340 = vmatpush.msra.mxu0 0.0
        %4341 = vmatpush.msra.mxu0 0.0
        %4342 = vmatpush.msra.mxu0 0.0
        %4343 = vmatpush.msra.mxu0 0.0
        %4344 = vmatpush.msra.mxu0 0.0
        %4345 = vmatpush.msra.mxu0 0.0
        %4346 = vmatpush.msra.mxu0 0.0
        %4347 = vmatpush.msra.mxu0 0.0
        %4348 = vmatpush.msra.mxu0 %v4307
        %4349 = vmatmul.f32.gmra.mxu0 %v4310
        %v4350 = vpop.f32.mrf.mxu0
        %v4351 = vadd.f32 0.0, %v4350
        %4352 = vmatmul.f32.gmra.mxu0 %v4313
        %v4353 = vpop.f32.mrf.mxu0
        %v4354 = vadd.f32 0.0, %v4353
        %4355 = vmatmul.f32.gmra.mxu0 %v4316
        %v4356 = vpop.f32.mrf.mxu0
        %v4357 = vadd.f32 0.0, %v4356
        %4358 = vmatmul.f32.gmra.mxu0 %v4319
        %v4359 = vpop.f32.mrf.mxu0
        %v4360 = vadd.f32 0.0, %v4359
        %4361 = vmatmul.f32.gmra.mxu0 %v4322
        %v4362 = vpop.f32.mrf.mxu0
        %v4363 = vadd.f32 0.0, %v4362
        %4364 = vmatmul.f32.gmra.mxu0 %v4325
        %v4365 = vpop.f32.mrf.mxu0
        %v4366 = vadd.f32 0.0, %v4365
        %4367 = vmatmul.f32.gmra.mxu0 %v4328
        %v4368 = vpop.f32.mrf.mxu0
        %v4369 = vadd.f32 0.0, %v4368
        %4370 = vmatmul.f32.gmra.mxu0 %v4331
        %v4371 = vpop.f32.mrf.mxu0
        %v4372 = vadd.f32 0.0, %v4371
        %4373 = vdwg.mxu0
        %v4375 = vsel %vm2284, %v4351, 0
        %v4378 = vsel %vm2284, %v4354, 0
        %v4381 = vsel %vm2284, %v4357, 0
        %v4384 = vsel %vm2284, %v4360, 0
        %v4387 = vsel %vm2284, %v4363, 0
        %v4390 = vsel %vm2284, %v4366, 0
        %v4393 = vsel %vm2284, %v4369, 0
        %v4396 = vsel %vm2284, %v4372, 0
        %4398 = vmatpush.msra.mxu0 0.0
        %4399 = vmatpush.msra.mxu0 0.0
        %4400 = vmatpush.msra.mxu0 0.0
        %4401 = vmatpush.msra.mxu0 0.0
        %4402 = vmatpush.msra.mxu0 0.0
        %4403 = vmatpush.msra.mxu0 0.0
        %4404 = vmatpush.msra.mxu0 0.0
        %4405 = vmatpush.msra.mxu0 0.0
        %4406 = vmatpush.msra.mxu0 0.0
        %4407 = vmatpush.msra.mxu0 0.0
        %4408 = vmatpush.msra.mxu0 0.0
        %4409 = vmatpush.msra.mxu0 0.0
        %4410 = vmatpush.msra.mxu0 0.0
        %4411 = vmatpush.msra.mxu0 0.0
        %4412 = vmatpush.msra.mxu0 %v3241
        %4413 = vmatpush.msra.mxu0 %v3240
        %4414 = vmatmul.f32.gmra.mxu0 %v4375
        %v4415 = vpop.f32.mrf.mxu0
        %v4416 = vadd.f32 0.0, %v4415
        %4417 = vmatmul.f32.gmra.mxu0 %v4378
        %v4418 = vpop.f32.mrf.mxu0
        %v4419 = vadd.f32 0.0, %v4418
        %4420 = vmatmul.f32.gmra.mxu0 %v4381
        %v4421 = vpop.f32.mrf.mxu0
        %v4422 = vadd.f32 0.0, %v4421
        %4423 = vmatmul.f32.gmra.mxu0 %v4384
        %v4424 = vpop.f32.mrf.mxu0
        %v4425 = vadd.f32 0.0, %v4424
        %4426 = vmatmul.f32.gmra.mxu0 %v4387
        %v4427 = vpop.f32.mrf.mxu0
        %v4428 = vadd.f32 0.0, %v4427
        %4429 = vmatmul.f32.gmra.mxu0 %v4390
        %v4430 = vpop.f32.mrf.mxu0
        %v4431 = vadd.f32 0.0, %v4430
        %4432 = vmatmul.f32.gmra.mxu0 %v4393
        %v4433 = vpop.f32.mrf.mxu0
        %v4434 = vadd.f32 0.0, %v4433
        %4435 = vmatmul.f32.gmra.mxu0 %v4396
        %v4436 = vpop.f32.mrf.mxu0
        %v4437 = vadd.f32 0.0, %v4436
        %4438 = vdwg.mxu0
        %v4439 = vadd.f32 %v4014, %v4416
        %v4440 = vadd.f32 %v4017, %v4419
        %v4441 = vadd.f32 %v4020, %v4422
        %v4442 = vadd.f32 %v4023, %v4425
        %v4443 = vadd.f32 %v4026, %v4428
        %v4444 = vadd.f32 %v4029, %v4431
        %v4445 = vadd.f32 %v4032, %v4434
        %v4446 = vadd.f32 %v4035, %v4437
        %4447 = vrot.lane.b32.xlu0 %v3228, 80
        %v4448 = vpop.permute.xlu0 %4447
        %4449 = vrot.lane.b32.xlu0 %v3229, 80
        %v4450 = vpop.permute.xlu0 %4449
        %4451 = vrot.lane.b32.xlu0 %v3230, 80
        %v4452 = vpop.permute.xlu0 %4451
        %4453 = vrot.lane.b32.xlu0 %v3231, 80
        %v4454 = vpop.permute.xlu0 %4453
        %4455 = vrot.lane.b32.xlu0 %v3232, 80
        %v4456 = vpop.permute.xlu0 %4455
        %4457 = vrot.lane.b32.xlu0 %v3233, 80
        %v4458 = vpop.permute.xlu0 %4457
        %4459 = vrot.lane.b32.xlu0 %v3234, 80
        %v4460 = vpop.permute.xlu0 %4459
        %4461 = vrot.lane.b32.xlu0 %v3235, 80
        %v4462 = vpop.permute.xlu0 %4461
        %4463 = vrot.lane.b32.xlu0 %v3186, 80
        %v4464 = vpop.permute.xlu0 %4463
        %v4465 = vsel %vm2284, %v4448, 0
        %v4467 = vsel %vm2284, %v4450, 0
        %v4469 = vsel %vm2284, %v4452, 0
        %v4471 = vsel %vm2284, %v4454, 0
        %v4473 = vsel %vm2284, %v4456, 0
        %v4475 = vsel %vm2284, %v4458, 0
        %v4477 = vsel %vm2284, %v4460, 0
        %v4479 = vsel %vm2284, %v4462, 0
        %v4481 = vsel %vm2284, %v4464, 0
        %4483 = vmatpush.xpose.msra.mxu0 0.0
        %4484 = vmatpush.xpose.msra.mxu0 0.0
        %4485 = vmatpush.xpose.msra.mxu0 0.0
        %4486 = vmatpush.xpose.msra.mxu0 0.0
        %4487 = vmatpush.xpose.msra.mxu0 0.0
        %4488 = vmatpush.xpose.msra.mxu0 0.0
        %4489 = vmatpush.xpose.msra.mxu0 0.0
        %4490 = vmatpush.xpose.msra.mxu0 0.0
        %4491 = vmatpush.xpose.msra.mxu0 0.0
        %4492 = vmatpush.xpose.msra.mxu0 0.0
        %4493 = vmatpush.xpose.msra.mxu0 0.0
        %4494 = vmatpush.xpose.msra.mxu0 0.0
        %4495 = vmatpush.xpose.msra.mxu0 0.0
        %4496 = vmatpush.xpose.msra.mxu0 0.0
        %4497 = vmatpush.xpose.msra.mxu0 0.0
        %4498 = vmatpush.xpose.msra.mxu0 %v4481
        %4499 = vmatmul.f32.gmra.mxu0 %v4465
        %v4500 = vpop.f32.mrf.mxu0
        %v4501 = vadd.f32 0.0, %v4500
        %4502 = vmatmul.f32.gmra.mxu0 %v4467
        %v4503 = vpop.f32.mrf.mxu0
        %v4504 = vadd.f32 0.0, %v4503
        %4505 = vmatmul.f32.gmra.mxu0 %v4469
        %v4506 = vpop.f32.mrf.mxu0
        %v4507 = vadd.f32 0.0, %v4506
        %4508 = vmatmul.f32.gmra.mxu0 %v4471
        %v4509 = vpop.f32.mrf.mxu0
        %v4510 = vadd.f32 0.0, %v4509
        %4511 = vmatmul.f32.gmra.mxu0 %v4473
        %v4512 = vpop.f32.mrf.mxu0
        %v4513 = vadd.f32 0.0, %v4512
        %4514 = vmatmul.f32.gmra.mxu0 %v4475
        %v4515 = vpop.f32.mrf.mxu0
        %v4516 = vadd.f32 0.0, %v4515
        %4517 = vmatmul.f32.gmra.mxu0 %v4477
        %v4518 = vpop.f32.mrf.mxu0
        %v4519 = vadd.f32 0.0, %v4518
        %4520 = vmatmul.f32.gmra.mxu0 %v4479
        %v4521 = vpop.f32.mrf.mxu0
        %v4522 = vadd.f32 0.0, %v4521
        %4523 = vdwg.mxu0
        %v4524 = vsel %vm1684, %v4501, -inf
        %4525 = vmax.xlane.f32.xlu0 %v4524
        %v4526 = vpop.xlane.xlu0 %4525
        %v4527 = vsel %vm1684, %v4504, -inf
        %4528 = vmax.xlane.f32.xlu0 %v4527
        %v4529 = vpop.xlane.xlu0 %4528
        %v4530 = vsel %vm1684, %v4507, -inf
        %4531 = vmax.xlane.f32.xlu0 %v4530
        %v4532 = vpop.xlane.xlu0 %4531
        %v4533 = vsel %vm1684, %v4510, -inf
        %4534 = vmax.xlane.f32.xlu0 %v4533
        %v4535 = vpop.xlane.xlu0 %4534
        %v4536 = vsel %vm1684, %v4513, -inf
        %4537 = vmax.xlane.f32.xlu0 %v4536
        %v4538 = vpop.xlane.xlu0 %4537
        %v4539 = vsel %vm1684, %v4516, -inf
        %4540 = vmax.xlane.f32.xlu0 %v4539
        %v4541 = vpop.xlane.xlu0 %4540
        %v4542 = vsel %vm1684, %v4519, -inf
        %4543 = vmax.xlane.f32.xlu0 %v4542
        %v4544 = vpop.xlane.xlu0 %4543
        %v4545 = vsel %vm1684, %v4522, -inf
        %4546 = vmax.xlane.f32.xlu0 %v4545
        %v4547 = vpop.xlane.xlu0 %4546
        %v4548 = vsub.f32 %v4501, %v4526
        %v4549 = vsub.f32 %v4504, %v4529
        %v4550 = vsub.f32 %v4507, %v4532
        %v4551 = vsub.f32 %v4510, %v4535
        %v4552 = vsub.f32 %v4513, %v4538
        %v4553 = vsub.f32 %v4516, %v4541
        %v4554 = vsub.f32 %v4519, %v4544
        %v4555 = vsub.f32 %v4522, %v4547
        %v4556 = vmul.f32 %v4548, 1.442695
        %v4557 = vpow.pop %v4556
        %v4558 = vmul.f32 %v4549, 1.442695
        %v4559 = vpow.pop %v4558
        %v4560 = vmul.f32 %v4550, 1.442695
        %v4561 = vpow.pop %v4560
        %v4562 = vmul.f32 %v4551, 1.442695
        %v4563 = vpow.pop %v4562
        %v4564 = vmul.f32 %v4552, 1.442695
        %v4565 = vpow.pop %v4564
        %v4566 = vmul.f32 %v4553, 1.442695
        %v4567 = vpow.pop %v4566
        %v4568 = vmul.f32 %v4554, 1.442695
        %v4569 = vpow.pop %v4568
        %v4570 = vmul.f32 %v4555, 1.442695
        %v4571 = vpow.pop %v4570
        %v4572 = vsel %vm1684, %v4557, 0.0
        %4573 = vadd.xlane.f32.xlu0 %v4572
        %v4574 = vpop.xlane.xlu0 %4573
        %v4575 = vsel %vm1684, %v4559, 0.0
        %4576 = vadd.xlane.f32.xlu0 %v4575
        %v4577 = vpop.xlane.xlu0 %4576
        %v4578 = vsel %vm1684, %v4561, 0.0
        %4579 = vadd.xlane.f32.xlu0 %v4578
        %v4580 = vpop.xlane.xlu0 %4579
        %v4581 = vsel %vm1684, %v4563, 0.0
        %4582 = vadd.xlane.f32.xlu0 %v4581
        %v4583 = vpop.xlane.xlu0 %4582
        %v4584 = vsel %vm1684, %v4565, 0.0
        %4585 = vadd.xlane.f32.xlu0 %v4584
        %v4586 = vpop.xlane.xlu0 %4585
        %v4587 = vsel %vm1684, %v4567, 0.0
        %4588 = vadd.xlane.f32.xlu0 %v4587
        %v4589 = vpop.xlane.xlu0 %4588
        %v4590 = vsel %vm1684, %v4569, 0.0
        %4591 = vadd.xlane.f32.xlu0 %v4590
        %v4592 = vpop.xlane.xlu0 %4591
        %v4593 = vsel %vm1684, %v4571, 0.0
        %4594 = vadd.xlane.f32.xlu0 %v4593
        %v4595 = vpop.xlane.xlu0 %4594
        %v4596 = vrcp.pop %v4574
        %v4597 = vmul.f32 %v4574, %v4596
        %v4598 = vsub.f32 1.0, %v4597
        %v4599 = vmul.f32 %v4596, %v4598
        %v4600 = vadd.f32 %v4596, %v4599
        %vm4601 = vweird.f32 %v4574
        %vm4602 = vweird.f32 %v4596
        %vm4603 = vmor %vm4601, %vm4602
        %v4604 = vsel %vm4603, %v4596, %v4600
        %v4605 = vand.u32 2147483647, %v4574
        %vm4606 = vcmp.eq.f32.partialorder %v4605, 8.507059e+37
        %v4607 = vand.u32 %v4574, 2147483648
        %v4608 = vor.u32 1.1754944e-38, %v4607
        %v4609 = vsel %vm4606, %v4608, %v4604
        %v4610 = vrcp.pop %v4577
        %v4611 = vmul.f32 %v4577, %v4610
        %v4612 = vsub.f32 1.0, %v4611
        %v4613 = vmul.f32 %v4610, %v4612
        %v4614 = vadd.f32 %v4610, %v4613
        %vm4615 = vweird.f32 %v4577
        %vm4616 = vweird.f32 %v4610
        %vm4617 = vmor %vm4615, %vm4616
        %v4618 = vsel %vm4617, %v4610, %v4614
        %v4619 = vand.u32 2147483647, %v4577
        %vm4620 = vcmp.eq.f32.partialorder %v4619, 8.507059e+37
        %v4621 = vand.u32 %v4577, 2147483648
        %v4622 = vor.u32 1.1754944e-38, %v4621
        %v4623 = vsel %vm4620, %v4622, %v4618
        %v4624 = vrcp.pop %v4580
        %v4625 = vmul.f32 %v4580, %v4624
        %v4626 = vsub.f32 1.0, %v4625
        %v4627 = vmul.f32 %v4624, %v4626
        %v4628 = vadd.f32 %v4624, %v4627
        %vm4629 = vweird.f32 %v4580
        %vm4630 = vweird.f32 %v4624
        %vm4631 = vmor %vm4629, %vm4630
        %v4632 = vsel %vm4631, %v4624, %v4628
        %v4633 = vand.u32 2147483647, %v4580
        %vm4634 = vcmp.eq.f32.partialorder %v4633, 8.507059e+37
        %v4635 = vand.u32 %v4580, 2147483648
        %v4636 = vor.u32 1.1754944e-38, %v4635
        %v4637 = vsel %vm4634, %v4636, %v4632
        %v4638 = vrcp.pop %v4583
        %v4639 = vmul.f32 %v4583, %v4638
        %v4640 = vsub.f32 1.0, %v4639
        %v4641 = vmul.f32 %v4638, %v4640
        %v4642 = vadd.f32 %v4638, %v4641
        %vm4643 = vweird.f32 %v4583
        %vm4644 = vweird.f32 %v4638
        %vm4645 = vmor %vm4643, %vm4644
        %v4646 = vsel %vm4645, %v4638, %v4642
        %v4647 = vand.u32 2147483647, %v4583
        %vm4648 = vcmp.eq.f32.partialorder %v4647, 8.507059e+37
        %v4649 = vand.u32 %v4583, 2147483648
        %v4650 = vor.u32 1.1754944e-38, %v4649
        %v4651 = vsel %vm4648, %v4650, %v4646
        %v4652 = vrcp.pop %v4586
        %v4653 = vmul.f32 %v4586, %v4652
        %v4654 = vsub.f32 1.0, %v4653
        %v4655 = vmul.f32 %v4652, %v4654
        %v4656 = vadd.f32 %v4652, %v4655
        %vm4657 = vweird.f32 %v4586
        %vm4658 = vweird.f32 %v4652
        %vm4659 = vmor %vm4657, %vm4658
        %v4660 = vsel %vm4659, %v4652, %v4656
        %v4661 = vand.u32 2147483647, %v4586
        %vm4662 = vcmp.eq.f32.partialorder %v4661, 8.507059e+37
        %v4663 = vand.u32 %v4586, 2147483648
        %v4664 = vor.u32 1.1754944e-38, %v4663
        %v4665 = vsel %vm4662, %v4664, %v4660
        %v4666 = vrcp.pop %v4589
        %v4667 = vmul.f32 %v4589, %v4666
        %v4668 = vsub.f32 1.0, %v4667
        %v4669 = vmul.f32 %v4666, %v4668
        %v4670 = vadd.f32 %v4666, %v4669
        %vm4671 = vweird.f32 %v4589
        %vm4672 = vweird.f32 %v4666
        %vm4673 = vmor %vm4671, %vm4672
        %v4674 = vsel %vm4673, %v4666, %v4670
        %v4675 = vand.u32 2147483647, %v4589
        %vm4676 = vcmp.eq.f32.partialorder %v4675, 8.507059e+37
        %v4677 = vand.u32 %v4589, 2147483648
        %v4678 = vor.u32 1.1754944e-38, %v4677
        %v4679 = vsel %vm4676, %v4678, %v4674
        %v4680 = vrcp.pop %v4592
        %v4681 = vmul.f32 %v4592, %v4680
        %v4682 = vsub.f32 1.0, %v4681
        %v4683 = vmul.f32 %v4680, %v4682
        %v4684 = vadd.f32 %v4680, %v4683
        %vm4685 = vweird.f32 %v4592
        %vm4686 = vweird.f32 %v4680
        %vm4687 = vmor %vm4685, %vm4686
        %v4688 = vsel %vm4687, %v4680, %v4684
        %v4689 = vand.u32 2147483647, %v4592
        %vm4690 = vcmp.eq.f32.partialorder %v4689, 8.507059e+37
        %v4691 = vand.u32 %v4592, 2147483648
        %v4692 = vor.u32 1.1754944e-38, %v4691
        %v4693 = vsel %vm4690, %v4692, %v4688
        %v4694 = vrcp.pop %v4595
        %v4695 = vmul.f32 %v4595, %v4694
        %v4696 = vsub.f32 1.0, %v4695
        %v4697 = vmul.f32 %v4694, %v4696
        %v4698 = vadd.f32 %v4694, %v4697
        %vm4699 = vweird.f32 %v4595
        %vm4700 = vweird.f32 %v4694
        %vm4701 = vmor %vm4699, %vm4700
        %v4702 = vsel %vm4701, %v4694, %v4698
        %v4703 = vand.u32 2147483647, %v4595
        %vm4704 = vcmp.eq.f32.partialorder %v4703, 8.507059e+37
        %v4705 = vand.u32 %v4595, 2147483648
        %v4706 = vor.u32 1.1754944e-38, %v4705
        %v4707 = vsel %vm4704, %v4706, %v4702
        %v4708 = vmul.f32 %v4557, %v4609
        %v4709 = vmul.f32 %v4559, %v4623
        %v4710 = vmul.f32 %v4561, %v4637
        %v4711 = vmul.f32 %v4563, %v4651
        %v4712 = vmul.f32 %v4565, %v4665
        %v4713 = vmul.f32 %v4567, %v4679
        %v4714 = vmul.f32 %v4569, %v4693
        %v4715 = vmul.f32 %v4571, %v4707
        %4716 = vrot.lane.b32.xlu0 %v3226, 80
        %v4717 = vpop.permute.xlu0 %4716
        %v4720 = vsel %vm1684, %v4708, 0
        %v4723 = vsel %vm1684, %v4709, 0
        %v4726 = vsel %vm1684, %v4710, 0
        %v4729 = vsel %vm1684, %v4711, 0
        %v4732 = vsel %vm1684, %v4712, 0
        %v4735 = vsel %vm1684, %v4713, 0
        %v4738 = vsel %vm1684, %v4714, 0
        %v4741 = vsel %vm1684, %v4715, 0
        %4743 = vmatpush.msra.mxu0 0.0
        %4744 = vmatpush.msra.mxu0 0.0
        %4745 = vmatpush.msra.mxu0 0.0
        %4746 = vmatpush.msra.mxu0 0.0
        %4747 = vmatpush.msra.mxu0 0.0
        %4748 = vmatpush.msra.mxu0 0.0
        %4749 = vmatpush.msra.mxu0 0.0
        %4750 = vmatpush.msra.mxu0 0.0
        %4751 = vmatpush.msra.mxu0 0.0
        %4752 = vmatpush.msra.mxu0 0.0
        %4753 = vmatpush.msra.mxu0 0.0
        %4754 = vmatpush.msra.mxu0 0.0
        %4755 = vmatpush.msra.mxu0 0.0
        %4756 = vmatpush.msra.mxu0 0.0
        %4757 = vmatpush.msra.mxu0 0.0
        %4758 = vmatpush.msra.mxu0 %v4717
        %4759 = vmatmul.f32.gmra.mxu0 %v4720
        %v4760 = vpop.f32.mrf.mxu0
        %v4761 = vadd.f32 0.0, %v4760
        %4762 = vmatmul.f32.gmra.mxu0 %v4723
        %v4763 = vpop.f32.mrf.mxu0
        %v4764 = vadd.f32 0.0, %v4763
        %4765 = vmatmul.f32.gmra.mxu0 %v4726
        %v4766 = vpop.f32.mrf.mxu0
        %v4767 = vadd.f32 0.0, %v4766
        %4768 = vmatmul.f32.gmra.mxu0 %v4729
        %v4769 = vpop.f32.mrf.mxu0
        %v4770 = vadd.f32 0.0, %v4769
        %4771 = vmatmul.f32.gmra.mxu0 %v4732
        %v4772 = vpop.f32.mrf.mxu0
        %v4773 = vadd.f32 0.0, %v4772
        %4774 = vmatmul.f32.gmra.mxu0 %v4735
        %v4775 = vpop.f32.mrf.mxu0
        %v4776 = vadd.f32 0.0, %v4775
        %4777 = vmatmul.f32.gmra.mxu0 %v4738
        %v4778 = vpop.f32.mrf.mxu0
        %v4779 = vadd.f32 0.0, %v4778
        %4780 = vmatmul.f32.gmra.mxu0 %v4741
        %v4781 = vpop.f32.mrf.mxu0
        %v4782 = vadd.f32 0.0, %v4781
        %4783 = vdwg.mxu0
        %v4785 = vsel %vm2284, %v4761, 0
        %v4788 = vsel %vm2284, %v4764, 0
        %v4791 = vsel %vm2284, %v4767, 0
        %v4794 = vsel %vm2284, %v4770, 0
        %v4797 = vsel %vm2284, %v4773, 0
        %v4800 = vsel %vm2284, %v4776, 0
        %v4803 = vsel %vm2284, %v4779, 0
        %v4806 = vsel %vm2284, %v4782, 0
        %4808 = vmatpush.msra.mxu0 0.0
        %4809 = vmatpush.msra.mxu0 0.0
        %4810 = vmatpush.msra.mxu0 0.0
        %4811 = vmatpush.msra.mxu0 0.0
        %4812 = vmatpush.msra.mxu0 0.0
        %4813 = vmatpush.msra.mxu0 0.0
        %4814 = vmatpush.msra.mxu0 0.0
        %4815 = vmatpush.msra.mxu0 0.0
        %4816 = vmatpush.msra.mxu0 0.0
        %4817 = vmatpush.msra.mxu0 0.0
        %4818 = vmatpush.msra.mxu0 0.0
        %4819 = vmatpush.msra.mxu0 0.0
        %4820 = vmatpush.msra.mxu0 0.0
        %4821 = vmatpush.msra.mxu0 0.0
        %4822 = vmatpush.msra.mxu0 %v3243
        %4823 = vmatpush.msra.mxu0 %v3242
        %4824 = vmatmul.f32.gmra.mxu0 %v4785
        %v4825 = vpop.f32.mrf.mxu0
        %v4826 = vadd.f32 0.0, %v4825
        %4827 = vmatmul.f32.gmra.mxu0 %v4788
        %v4828 = vpop.f32.mrf.mxu0
        %v4829 = vadd.f32 0.0, %v4828
        %4830 = vmatmul.f32.gmra.mxu0 %v4791
        %v4831 = vpop.f32.mrf.mxu0
        %v4832 = vadd.f32 0.0, %v4831
        %4833 = vmatmul.f32.gmra.mxu0 %v4794
        %v4834 = vpop.f32.mrf.mxu0
        %v4835 = vadd.f32 0.0, %v4834
        %4836 = vmatmul.f32.gmra.mxu0 %v4797
        %v4837 = vpop.f32.mrf.mxu0
        %v4838 = vadd.f32 0.0, %v4837
        %4839 = vmatmul.f32.gmra.mxu0 %v4800
        %v4840 = vpop.f32.mrf.mxu0
        %v4841 = vadd.f32 0.0, %v4840
        %4842 = vmatmul.f32.gmra.mxu0 %v4803
        %v4843 = vpop.f32.mrf.mxu0
        %v4844 = vadd.f32 0.0, %v4843
        %4845 = vmatmul.f32.gmra.mxu0 %v4806
        %v4846 = vpop.f32.mrf.mxu0
        %v4847 = vadd.f32 0.0, %v4846
        %4848 = vdwg.mxu0
        %v4849 = vadd.f32 %v4439, %v4826
        %v4850 = vadd.f32 %v4440, %v4829
        %v4851 = vadd.f32 %v4441, %v4832
        %v4852 = vadd.f32 %v4442, %v4835
        %v4853 = vadd.f32 %v4443, %v4838
        %v4854 = vadd.f32 %v4444, %v4841
        %v4855 = vadd.f32 %v4445, %v4844
        %v4856 = vadd.f32 %v4446, %v4847
        %v4857 = vld [vmem:[%s75] sm:$0x1]
        %v4859 = vperm.slane %v4857, 0
        %v4861 = vadd.f32 %v4849, %v4859
        %v4862 = vadd.f32 %v4850, %v4859
        %v4863 = vadd.f32 %v4851, %v4859
        %v4864 = vadd.f32 %v4852, %v4859
        %v4865 = vadd.f32 %v4853, %v4859
        %v4866 = vadd.f32 %v4854, %v4859
        %v4867 = vadd.f32 %v4855, %v4859
        %v4868 = vadd.f32 %v4856, %v4859
        %v4869 = vadd.f32 %v1502, %v4861
        %v4870 = vadd.f32 %v1503, %v4862
        %v4871 = vadd.f32 %v1504, %v4863
        %v4872 = vadd.f32 %v1505, %v4864
        %v4873 = vadd.f32 %v1506, %v4865
        %v4874 = vadd.f32 %v1507, %v4866
        %v4875 = vadd.f32 %v1508, %v4867
        %v4876 = vadd.f32 %v1509, %v4868
        %4877 = vadd.xlane.f32.xlu0 %v4869
        %v4878 = vpop.xlane.xlu0 %4877
        %4879 = vadd.xlane.f32.xlu0 %v4870
        %v4880 = vpop.xlane.xlu0 %4879
        %4881 = vadd.xlane.f32.xlu0 %v4871
        %v4882 = vpop.xlane.xlu0 %4881
        %4883 = vadd.xlane.f32.xlu0 %v4872
        %v4884 = vpop.xlane.xlu0 %4883
        %4885 = vadd.xlane.f32.xlu0 %v4873
        %v4886 = vpop.xlane.xlu0 %4885
        %4887 = vadd.xlane.f32.xlu0 %v4874
        %v4888 = vpop.xlane.xlu0 %4887
        %4889 = vadd.xlane.f32.xlu0 %v4875
        %v4890 = vpop.xlane.xlu0 %4889
        %4891 = vadd.xlane.f32.xlu0 %v4876
        %v4892 = vpop.xlane.xlu0 %4891
        %v4893 = vmul.f32 %v4878, %v2075
        %v4894 = vmul.f32 %v4880, %v2075
        %v4895 = vmul.f32 %v4882, %v2075
        %v4896 = vmul.f32 %v4884, %v2075
        %v4897 = vmul.f32 %v4886, %v2075
        %v4898 = vmul.f32 %v4888, %v2075
        %v4899 = vmul.f32 %v4890, %v2075
        %v4900 = vmul.f32 %v4892, %v2075
        %v4901 = vsub.f32 %v4869, %v4893
        %v4902 = vsub.f32 %v4870, %v4894
        %v4903 = vsub.f32 %v4871, %v4895
        %v4904 = vsub.f32 %v4872, %v4896
        %v4905 = vsub.f32 %v4873, %v4897
        %v4906 = vsub.f32 %v4874, %v4898
        %v4907 = vsub.f32 %v4875, %v4899
        %v4908 = vsub.f32 %v4876, %v4900
        %v4909 = vmul.f32 %v4901, %v4901
        %v4910 = vmul.f32 %v4902, %v4902
        %v4911 = vmul.f32 %v4903, %v4903
        %v4912 = vmul.f32 %v4904, %v4904
        %v4913 = vmul.f32 %v4905, %v4905
        %v4914 = vmul.f32 %v4906, %v4906
        %v4915 = vmul.f32 %v4907, %v4907
        %v4916 = vmul.f32 %v4908, %v4908
        %4917 = vadd.xlane.f32.xlu0 %v4909
        %v4918 = vpop.xlane.xlu0 %4917
        %4919 = vadd.xlane.f32.xlu0 %v4910
        %v4920 = vpop.xlane.xlu0 %4919
        %4921 = vadd.xlane.f32.xlu0 %v4911
        %v4922 = vpop.xlane.xlu0 %4921
        %4923 = vadd.xlane.f32.xlu0 %v4912
        %v4924 = vpop.xlane.xlu0 %4923
        %4925 = vadd.xlane.f32.xlu0 %v4913
        %v4926 = vpop.xlane.xlu0 %4925
        %4927 = vadd.xlane.f32.xlu0 %v4914
        %v4928 = vpop.xlane.xlu0 %4927
        %4929 = vadd.xlane.f32.xlu0 %v4915
        %v4930 = vpop.xlane.xlu0 %4929
        %4931 = vadd.xlane.f32.xlu0 %v4916
        %v4932 = vpop.xlane.xlu0 %4931
        %v4933 = vmul.f32 %v4918, %v2075
        %v4934 = vmul.f32 %v4920, %v2075
        %v4935 = vmul.f32 %v4922, %v2075
        %v4936 = vmul.f32 %v4924, %v2075
        %v4937 = vmul.f32 %v4926, %v2075
        %v4938 = vmul.f32 %v4928, %v2075
        %v4939 = vmul.f32 %v4930, %v2075
        %v4940 = vmul.f32 %v4932, %v2075
        %v4941 = vadd.f32 %v4933, 1e-05
        %v4942 = vadd.f32 %v4934, 1e-05
        %v4943 = vadd.f32 %v4935, 1e-05
        %v4944 = vadd.f32 %v4936, 1e-05
        %v4945 = vadd.f32 %v4937, 1e-05
        %v4946 = vadd.f32 %v4938, 1e-05
        %v4947 = vadd.f32 %v4939, 1e-05
        %v4948 = vadd.f32 %v4940, 1e-05
        %v4949 = vrsqrt.pop %v4941
        %v4950 = vmul.f32 %v4949, %v4941
        %v4951 = vmul.f32 %v4950, %v4949
        %v4952 = vmul.f32 0.5, %v4951
        %v4953 = vsub.f32 1.5, %v4952
        %v4954 = vmul.f32 %v4949, %v4953
        %vm4955 = vweird.f32 %v4941
        %vm4956 = vweird.f32 %v4949
        %vm4957 = vmor %vm4955, %vm4956
        %v4958 = vsel %vm4957, %v4949, %v4954
        %v4959 = vrsqrt.pop %v4942
        %v4960 = vmul.f32 %v4959, %v4942
        %v4961 = vmul.f32 %v4960, %v4959
        %v4962 = vmul.f32 0.5, %v4961
        %v4963 = vsub.f32 1.5, %v4962
        %v4964 = vmul.f32 %v4959, %v4963
        %vm4965 = vweird.f32 %v4942
        %vm4966 = vweird.f32 %v4959
        %vm4967 = vmor %vm4965, %vm4966
        %v4968 = vsel %vm4967, %v4959, %v4964
        %v4969 = vrsqrt.pop %v4943
        %v4970 = vmul.f32 %v4969, %v4943
        %v4971 = vmul.f32 %v4970, %v4969
        %v4972 = vmul.f32 0.5, %v4971
        %v4973 = vsub.f32 1.5, %v4972
        %v4974 = vmul.f32 %v4969, %v4973
        %vm4975 = vweird.f32 %v4943
        %vm4976 = vweird.f32 %v4969
        %vm4977 = vmor %vm4975, %vm4976
        %v4978 = vsel %vm4977, %v4969, %v4974
        %v4979 = vrsqrt.pop %v4944
        %v4980 = vmul.f32 %v4979, %v4944
        %v4981 = vmul.f32 %v4980, %v4979
        %v4982 = vmul.f32 0.5, %v4981
        %v4983 = vsub.f32 1.5, %v4982
        %v4984 = vmul.f32 %v4979, %v4983
        %vm4985 = vweird.f32 %v4944
        %vm4986 = vweird.f32 %v4979
        %vm4987 = vmor %vm4985, %vm4986
        %v4988 = vsel %vm4987, %v4979, %v4984
        %v4989 = vrsqrt.pop %v4945
        %v4990 = vmul.f32 %v4989, %v4945
        %v4991 = vmul.f32 %v4990, %v4989
        %v4992 = vmul.f32 0.5, %v4991
        %v4993 = vsub.f32 1.5, %v4992
        %v4994 = vmul.f32 %v4989, %v4993
        %vm4995 = vweird.f32 %v4945
        %vm4996 = vweird.f32 %v4989
        %vm4997 = vmor %vm4995, %vm4996
        %v4998 = vsel %vm4997, %v4989, %v4994
        %v4999 = vrsqrt.pop %v4946
        %v5000 = vmul.f32 %v4999, %v4946
        %v5001 = vmul.f32 %v5000, %v4999
        %v5002 = vmul.f32 0.5, %v5001
        %v5003 = vsub.f32 1.5, %v5002
        %v5004 = vmul.f32 %v4999, %v5003
        %vm5005 = vweird.f32 %v4946
        %vm5006 = vweird.f32 %v4999
        %vm5007 = vmor %vm5005, %vm5006
        %v5008 = vsel %vm5007, %v4999, %v5004
        %v5009 = vrsqrt.pop %v4947
        %v5010 = vmul.f32 %v5009, %v4947
        %v5011 = vmul.f32 %v5010, %v5009
        %v5012 = vmul.f32 0.5, %v5011
        %v5013 = vsub.f32 1.5, %v5012
        %v5014 = vmul.f32 %v5009, %v5013
        %vm5015 = vweird.f32 %v4947
        %vm5016 = vweird.f32 %v5009
        %vm5017 = vmor %vm5015, %vm5016
        %v5018 = vsel %vm5017, %v5009, %v5014
        %v5019 = vrsqrt.pop %v4948
        %v5020 = vmul.f32 %v5019, %v4948
        %v5021 = vmul.f32 %v5020, %v5019
        %v5022 = vmul.f32 0.5, %v5021
        %v5023 = vsub.f32 1.5, %v5022
        %v5024 = vmul.f32 %v5019, %v5023
        %vm5025 = vweird.f32 %v4948
        %vm5026 = vweird.f32 %v5019
        %vm5027 = vmor %vm5025, %vm5026
        %v5028 = vsel %vm5027, %v5019, %v5024
        %v5029 = vmul.f32 %v4901, %v4958
        %v5030 = vmul.f32 %v4902, %v4968
        %v5031 = vmul.f32 %v4903, %v4978
        %v5032 = vmul.f32 %v4904, %v4988
        %v5033 = vmul.f32 %v4905, %v4998
        %v5034 = vmul.f32 %v4906, %v5008
        %v5035 = vmul.f32 %v4907, %v5018
        %v5036 = vmul.f32 %v4908, %v5028
        %v5037 = vld [vmem:[%s77] sm:$0x1]
        %v5039 = vperm.slane %v5037, 0
        %v5041 = vmul.f32 %v5029, %v5039
        %v5042 = vmul.f32 %v5030, %v5039
        %v5043 = vmul.f32 %v5031, %v5039
        %v5044 = vmul.f32 %v5032, %v5039
        %v5045 = vmul.f32 %v5033, %v5039
        %v5046 = vmul.f32 %v5034, %v5039
        %v5047 = vmul.f32 %v5035, %v5039
        %v5048 = vmul.f32 %v5036, %v5039
        %v5049 = vld [vmem:[%s79] sm:$0x1]
        %v5051 = vperm.slane %v5049, 0
        %v5053 = vadd.f32 %v5041, %v5051
        %v5054 = vadd.f32 %v5042, %v5051
        %v5055 = vadd.f32 %v5043, %v5051
        %v5056 = vadd.f32 %v5044, %v5051
        %v5057 = vadd.f32 %v5045, %v5051
        %v5058 = vadd.f32 %v5046, %v5051
        %v5059 = vadd.f32 %v5047, %v5051
        %v5060 = vadd.f32 %v5048, %v5051
        %5061 = vst [vmem:[%s1483] sm:$0xff] %v3085
        %5062 = vst [vmem:[%s1490] sm:$0xff] %v5053
        %5063 = vst [vmem:[%s1490 + $0x8] sm:$0xff] %v5054
        %5064 = vst [vmem:[%s1490 + $0x10] sm:$0xff] %v5055
        %5065 = vst [vmem:[%s1490 + $0x18] sm:$0xff] %v5056
        %5066 = vst [vmem:[%s1490 + $0x20] sm:$0xff] %v5057
        %5067 = vst [vmem:[%s1490 + $0x28] sm:$0xff] %v5058
        %5068 = vst [vmem:[%s1490 + $0x30] sm:$0xff] %v5059
        %5069 = vst [vmem:[%s1490 + $0x38] sm:$0xff] %v5060
        %s5070 = sand.u32 %s980, 1
        %s5071 = scalar_lea.sflag [#allocation4], %s5070
        %s5072 = sand.u32 %s980, 1
        %s5073 = smul.addr %s5072, 8
        %s5074 = scalar_lea.vmem [#allocation22], %s5073
        %s5075 = sand.u32 %s1006, 1
        %s5076 = scalar_lea.sflag [#allocation24], %s5075
        %s5077 = sand.u32 %s1006, 1
        %s5078 = smul.addr %s5077, 64
        %s5079 = scalar_lea.vmem [#allocation23], %s5078
        // Predicated region
        $region229: #{tpu_custom_call.1} parent=179 // pred_check
          %p5080 = pneg %p990
        $region230: #{tpu_custom_call.1} parent=179 // pred_check_branch
          %5082 = sbr.rel (%p5080) target = $region232
        $region231: #{tpu_custom_call.1} parent=179 // pred_region
          %5084 = vsyncadd %s5071, 0
          %s5085 = smul.addr %s112, 8
          %s5086 = scalar_lea.hbm %s81, %s5085
          %s5088 = sshll.u32 %s5074, 4
          %s5089 = int_to_ptr.vmem [resolvable:$true] %s5088
          %s5090 = sshll.u32 %s5086, 4
          %s5091 = int_to_ptr.hbm [resolvable:$true] %s5090
          %5093 = dma.vmem_to_hbm [thread:$0]  %s5089, 128, %s5091, %s5071
        $region232: #{tpu_custom_call.1} parent=179 // pred_fallthru
          _
        // Predicated region
        $region233: #{tpu_custom_call.1} parent=179 // pred_check
          %p5094 = pneg %p1016
        $region234: #{tpu_custom_call.1} parent=179 // pred_check_branch
          %5096 = sbr.rel (%p5094) target = $region236
        $region235: #{tpu_custom_call.1} parent=179 // pred_region
          %5098 = vsyncadd %s5076, 0
          %s5099 = smul.addr %s112, 8
          %s5100 = smul.addr %s5099, 8
          %s5101 = scalar_lea.hbm %s83, %s5100
          %s5102 = sshll.u32 %s5079, 4
          %s5103 = int_to_ptr.vmem [resolvable:$true] %s5102
          %s5104 = sshll.u32 %s5101, 4
          %s5105 = int_to_ptr.hbm [resolvable:$true] %s5104
          %5110 = dma.vmem_to_hbm [thread:$0]  %s5103, 1024, %s5105, %s5076, 128, 128, 8
        $region236: #{tpu_custom_call.1} parent=179 // pred_fallthru
          _
      $region180: #{tpu_custom_call.1} parent=5 // pred_fallthru
        _
      %p5111 = scmp.le.s32.totalorder 2, %s107
      // Predicated region
      $region237: #{tpu_custom_call.1} parent=5 // pred_check
        %p5112 = pneg %p5111
      $region238: #{tpu_custom_call.1} parent=5 // pred_check_branch
        %5114 = sbr.rel (%p5112) target = $region240
      $region239: #{tpu_custom_call.1} parent=5 // pred_region
        %s5115 = ssub.s32 %s107, 2
        // Predicated region
        $region241: #{tpu_custom_call.1} parent=239 // pred_check
          %p5116 = pneg %p996
        $region242: #{tpu_custom_call.1} parent=239 // pred_check_branch
          %5118 = sbr.rel (%p5116) target = $region244
        $region243: #{tpu_custom_call.1} parent=239 // pred_region
          %s5119 = sand.u32 %s981, 1
          %s5120 = scalar_lea.sflag [#allocation4], %s5119
          %s5121 = sand.u32 %s981, 1
          %s5122 = smul.addr %s5121, 8
          %s5123 = scalar_lea.vmem [#allocation22], %s5122
          %5125 = dma.done %s5120, 128
        $region244: #{tpu_custom_call.1} parent=239 // pred_fallthru
          _
        // Predicated region
        $region245: #{tpu_custom_call.1} parent=239 // pred_check
          %p5126 = pneg %p1022
        $region246: #{tpu_custom_call.1} parent=239 // pred_check_branch
          %5128 = sbr.rel (%p5126) target = $region248
        $region247: #{tpu_custom_call.1} parent=239 // pred_region
          %s5129 = sand.u32 %s1007, 1
          %s5130 = scalar_lea.sflag [#allocation24], %s5129
          %s5131 = sand.u32 %s1007, 1
          %s5132 = smul.addr %s5131, 64
          %s5133 = scalar_lea.vmem [#allocation23], %s5132
          %5135 = dma.done %s5130, 1024
        $region248: #{tpu_custom_call.1} parent=239 // pred_fallthru
          _
      $region240: #{tpu_custom_call.1} parent=5 // pred_fallthru
        _
    $region6: #{tpu_custom_call.1} parent=1 // loop_footer
      %s111 = sadd.s32 1, %s107
    $region7: #{tpu_custom_call.1} parent=1 // loop_footer_branch
      %106 = sbr.rel target = $region3
    $region8: #{tpu_custom_call.1} parent=1 // loop_exit
      _
    %5136 = vsyncpa [#allocation3], 1
    %s5137 = scalar_lea.sflag [#allocation3], 1
    %5138 = vsyncpa %s5137, 1
    %5139 = vsyncpa [#allocation6], 1
    %s5140 = scalar_lea.sflag [#allocation6], 1
    %5141 = vsyncpa %s5140, 1
    %5142 = vsyncpa [#allocation9], 1
    %5143 = vsyncpa [#allocation12], 1
    %5144 = vsyncpa [#allocation15], 1
    %5145 = vsyncpa [#allocation18], 1
    %5146 = vsyncpa [#allocation21], 1
    %5147 = vsyncpa [#allocation4], 1
    %s5148 = scalar_lea.sflag [#allocation4], 1
    %5149 = vsyncpa %s5148, 1
    %5150 = vsyncpa [#allocation24], 1
    %s5151 = scalar_lea.sflag [#allocation24], 1
    %5152 = vsyncpa %s5151, 1

</llo_original>
